<compile_context>
chip_gen: v7x
topology: tpu7x:2x2x1
jax: 0.10.0
libtpu: 0.0.40
codegen_flags: <defaults>
</compile_context>

<pallas_src>
import functools
import math

import jax
import jax.numpy as jnp
from jax.experimental import pallas as pl
from jax.experimental.pallas import tpu as pltpu


def gru_d_kernel(
    # streamed sequence chunk, each (F, t_chunk*tB), column = lt*tB + b
    x_ref, m_ref, d_ref,
    # per batch tile
    h0_ref, len_ref, ag_ref,
    # packed parameter slabs
    vecf_ref, w_in_ref, vecb_ref, w_h_ref, headv_ref, w2t_ref, b2_ref,
    # output (4, tB)
    out_ref,
    # scratch
    h_sc, sel_sc, gi_sc, hd_sc,
    *, unroll,
):
    t_idx = pl.program_id(1)
    n_t = pl.num_programs(1)

    H, tB = h0_ref.shape
    F = x_ref.shape[0]
    tT = gi_sc.shape[0]                      # time steps per chunk (static)

    # ---- (re)initialise the recurrent state at the start of each batch tile ----
    @pl.when(t_idx == 0)
    def _init():
        h_sc[...] = h0_ref[...]
        sel_sc[...] = jnp.zeros(sel_sc.shape, sel_sc.dtype)

    # ---- hoisted, h-independent chunk work (lane-dense (rows, time*batch)) ----
    x_c = x_ref[...]                         # (F, tT*tB)
    m_c = m_ref[...]
    d_c = d_ref[...]

    wid = vecf_ref[:, 0:1]                   # (F, 1)
    bid = vecf_ref[:, 1:2]
    xm = vecf_ref[:, 2:3]
    xd = jnp.exp(-jnp.maximum(d_c * wid + bid, 0.0))
    one_m = 1.0 - m_c
    x_hat = m_c * x_c + one_m * (xd * x_c + (1.0 - xd) * xm)

    whdT = w_in_ref[0:H, :]                  # (H, F)
    wixT = w_in_ref[H:4 * H, :]              # (3H, F)
    wimT = w_in_ref[4 * H:7 * H, :]          # (3H, F)
    bhd = vecb_ref[0:H, :]                   # (H, 1)
    bi = vecb_ref[H:4 * H, :]                # (3H, 1) = [b_ir+b_hr; b_iz+b_hz; b_in]
    bhn = vecb_ref[4 * H:5 * H, :]           # (H, 1)

    hd = jnp.exp(-jnp.maximum(
        jnp.dot(whdT, d_c, preferred_element_type=jnp.float32) + bhd, 0.0))   # (H, N)
    gi = (jnp.dot(wixT, x_hat, preferred_element_type=jnp.float32)
          + jnp.dot(wimT, m_c, preferred_element_type=jnp.float32)
          + bi)                                                                # (3H, N)

    # scatter chunk into per-step scratch slots (static 128-lane slices -> aligned)
    for lt in range(tT):
        gi_sc[lt] = gi[:, lt * tB:(lt + 1) * tB]
        hd_sc[lt] = hd[:, lt * tB:(lt + 1) * tB]

    # ---- serial recurrence: one (3H,H)@(H,tB) MXU op + lane-dense VPU/EUP per step ----
    whhT = w_h_ref[0:3 * H, :]               # (3H, H) packed (r|z|n)
    bhn_b = jnp.broadcast_to(bhn, (H, tB))   # hoisted broadcast (no per-step re-splat)
    len_row = len_ref[...]                   # (1, tB) int32
    t0 = t_idx * tT

    def step(lt, carry):
        h, sel = carry
        gi_t = gi_sc[lt]                     # (3H, tB)
        hd_t = hd_sc[lt]                     # (H, tB)
        h = hd_t * h
        gh = jnp.dot(whhT, h, preferred_element_type=jnp.float32)   # (3H, tB)
        r = jax.nn.sigmoid(gi_t[0:H] + gh[0:H])
        z = jax.nn.sigmoid(gi_t[H:2 * H] + gh[H:2 * H])
        n = jnp.tanh(gi_t[2 * H:3 * H] + r * (gh[2 * H:3 * H] + bhn_b))
        h_new = (1.0 - z) * n + z * h
        # capture h at t == length[b] on the fly
        sel = jnp.where(len_row == t0 + lt, h_new, sel)
        return h_new, sel

    h_out, sel_out = jax.lax.fori_loop(
        0, tT, step, (h_sc[...], sel_sc[...]), unroll=unroll)
    h_sc[...] = h_out
    sel_sc[...] = sel_out

    # ---- fused 4-head classifier at the last time chunk ----
    @pl.when(t_idx == n_t - 1)
    def _finish():
        sel = sel_sc[...]                    # (H, tB)
        w1hT = w_h_ref[3 * H:7 * H, :]       # (4H, H)
        age = ag_ref[0:1, :]                 # (1, tB)
        gen = ag_ref[1:2, :]
        w1a = headv_ref[:, 0:1]              # (4H, 1) rank-1 age weights
        w1g = headv_ref[:, 1:2]
        b1 = headv_ref[:, 2:3]
        bn_scale = headv_ref[:, 3:4]
        bn_shift = headv_ref[:, 4:5]
        y = (jnp.dot(w1hT, sel, preferred_element_type=jnp.float32)
             + w1a * age + w1g * gen + b1)                        # (4H, tB)
        y = jnp.maximum(y * bn_scale + bn_shift, 0.0)             # BN (eval) + ReLU
        logits = (jnp.dot(w2t_ref[...], y, preferred_element_type=jnp.float32)
                  + b2_ref[...])                                  # (4, tB)
        out_ref[...] = jax.nn.sigmoid(logits)


def _round_up(a, b):
    return (a + b - 1) // b * b


def _pack_params(params, F, H):
    """Repack PyTorch-style parameters into the consolidated, transposed slabs."""
    assert H % 8 == 0, "H must be a multiple of 8 for the packed sublane layout"
    w_ih, w_hh = params["w_ih"], params["w_hh"]       # (3, 2F, H), (3, H, H)
    b_ih, b_hh = params["b_ih"], params["b_hh"]       # (3, 1, H)

    whdT = params["w_hd"].T                                             # (H, F)
    wixT = jnp.concatenate([w_ih[g, :F, :].T for g in range(3)], axis=0)   # (3H, F)
    wimT = jnp.concatenate([w_ih[g, F:, :].T for g in range(3)], axis=0)   # (3H, F)
    w_in = jnp.concatenate([whdT, wixT, wimT], axis=0)                     # (7H, F)

    bhd = params["b_hd"].reshape(H, 1)
    bi = jnp.concatenate([(b_ih[0] + b_hh[0]).reshape(H, 1),
                          (b_ih[1] + b_hh[1]).reshape(H, 1),
                          b_ih[2].reshape(H, 1)], axis=0)                  # (3H, 1)
    bhn = b_hh[2].reshape(H, 1)
    vec_b = jnp.concatenate([bhd, bi, bhn], axis=0)                        # (5H, 1)

    whhT = jnp.concatenate([w_hh[g].T for g in range(3)], axis=0)          # (3H, H)
    fc_w1 = params["fc_w1"]                                                # (4, H+2, H)
    w1hT = jnp.concatenate([fc_w1[i, :H, :].T for i in range(4)], axis=0)  # (4H, H)
    w_h = jnp.concatenate([whhT, w1hT], axis=0)                            # (7H, H)

    w1a = jnp.concatenate([fc_w1[i, H, :].reshape(H, 1) for i in range(4)], axis=0)
    w1g = jnp.concatenate([fc_w1[i, H + 1, :].reshape(H, 1) for i in range(4)], axis=0)
    b1 = params["fc_b1"].reshape(4 * H, 1)

    eps = 1e-5
    scale = params["bn_gamma"] * jax.lax.rsqrt(params["bn_var"] + eps)     # (4,1,H)
    shift = params["bn_beta"] - params["bn_mean"] * scale
    head_v = jnp.concatenate(
        [w1a, w1g, b1, scale.reshape(4 * H, 1), shift.reshape(4 * H, 1)], axis=1)

    fc_w2 = params["fc_w2"]                                                # (4, H, 1)
    w2t = jnp.zeros((4, 4 * H), jnp.float32)
    for i in range(4):
        w2t = w2t.at[i, i * H:(i + 1) * H].set(fc_w2[i, :, 0])             # block diag
    b2 = params["fc_b2"].reshape(4, 1)

    return dict(w_in=w_in, vec_b=vec_b, w_h=w_h, head_v=head_v, w2t=w2t, b2=b2)


def gru_d_binary_forward(params, x, h, m, d, x_m, age, gen, length,
                         *, t_chunk=32, tB=128, unroll=8):
    """x, m, d: (B, T, F); h: (B, H); x_m: (F,); age, gen: (B,); length: (B,) int.

    Returns (4, B, 1) — the stacked sigmoid outputs of the 4 heads (output_type='all').
    Note: as in the PyTorch gather, every length[b] must be < T.
    """
    B, T, F = x.shape
    H = h.shape[1]
    f32 = jnp.float32

    t_chunk = max(8, min(t_chunk, _round_up(T, 8)))
    unroll = max(1, min(unroll, t_chunk))

    Bp = _round_up(B, tB)
    nB = Bp // tB
    Tp = _round_up(T, t_chunk)
    nT = Tp // t_chunk

    # --- host-side layout: batch on lanes, time*batch flattened on the last dim ---
    def prep_seq(a):
        a = a.astype(f32)
        a = jnp.pad(a, ((0, Bp - B), (0, Tp - T), (0, 0)))        # (Bp, Tp, F)
        a = a.reshape(nB, tB, Tp, F).transpose(0, 3, 2, 1)        # (nB, F, Tp, tB)
        return a.reshape(nB, F, Tp * tB)

    xs, ms, ds = prep_seq(x), prep_seq(m), prep_seq(d)

    h0 = jnp.pad(h.astype(f32), ((0, Bp - B), (0, 0)))
    h0 = h0.reshape(nB, tB, H).transpose(0, 2, 1)                 # (nB, H, tB)

    ln = jnp.pad(length.astype(jnp.int32), (0, Bp - B), constant_values=-1)
    ln = ln.reshape(nB, tB)[:, None, :]                           # (nB, 1, tB)

    ag = jnp.stack([age.astype(f32), gen.astype(f32)], axis=0)    # (2, B)
    ag = jnp.pad(ag, ((0, 0), (0, Bp - B)))
    ag = ag.reshape(2, nB, tB).transpose(1, 0, 2)                 # (nB, 2, tB)

    pk = _pack_params(params, F, H)
    vec_f = jnp.concatenate([params["w_id"].reshape(F, 1),
                             params["b_id"].reshape(F, 1),
                             x_m.reshape(F, 1).astype(f32)], axis=1)   # (F, 3)

    weights = [vec_f, pk["w_in"], pk["vec_b"], pk["w_h"],
               pk["head_v"], pk["w2t"], pk["b2"]]
    inputs = [xs, ms, ds, h0, ln, ag] + weights

    # --- BlockSpecs ---
    seq_spec = pl.BlockSpec((pl.Squeezed(), F, t_chunk * tB), lambda b, t: (b, 0, t))

    def tile_spec(rows):
        return pl.BlockSpec((pl.Squeezed(), rows, tB), lambda b, t: (b, 0, 0))

    def full_spec(w):
        return pl.BlockSpec(w.shape, lambda b, t: (0, 0))

    in_specs = ([seq_spec] * 3
                + [tile_spec(H), tile_spec(1), tile_spec(2)]
                + [full_spec(w) for w in weights])
    out_spec = pl.BlockSpec((pl.Squeezed(), 4, tB), lambda b, t: (b, 0, 0))

    scratch_shapes = [
        pltpu.VMEM((H, tB), f32),                  # h
        pltpu.VMEM((H, tB), f32),                  # sel (h at t == length)
        pltpu.VMEM((t_chunk, 3 * H, tB), f32),     # per-step gate pre-activations
        pltpu.VMEM((t_chunk, H, tB), f32),         # per-step hidden decay
    ]

    # --- generation-aware VMEM limit + advisory cost estimate ---
    def _nbytes(a):
        return int(a.size) * a.dtype.itemsize

    blk_bytes = 8 * (t_chunk * tB) * 4                    # F padded to 8 sublanes
    scratch_bytes = 4 * tB * (2 * H + t_chunk * 4 * H)
    vmem_need = (3 * 2 * blk_bytes                        # x/m/d (double buffered)
                 + 2 * (H + 16) * tB * 4                  # h0/len/ag blocks
                 + 2 * sum(_nbytes(w) for w in weights) + (1 << 20)   # weight slabs
                 + 2 * 8 * tB * 4                         # output block
                 + scratch_bytes)
    try:
        vmem_cap = int(getattr(pltpu.get_tpu_info(), "vmem_capacity_bytes", 64 << 20))
    except Exception:
        vmem_cap = 64 << 20
    vmem_limit = int(min(max(vmem_need + (4 << 20), 16 << 20), int(vmem_cap * 0.7)))

    N_tot = Bp * Tp
    flops = (2 * F * 7 * H * N_tot                 # hoisted gi (x & m parts) + hd
             + 2 * 3 * H * H * N_tot               # recurrent gate matmul
             + Bp * (2 * 4 * H * H + 2 * 4 * 4 * H))
    transcendentals = N_tot * (F + 4 * H) + 4 * Bp
    bytes_accessed = sum(_nbytes(a) for a in inputs) + nB * 4 * tB * 4

    kernel = functools.partial(gru_d_kernel, unroll=unroll)

    out = pl.pallas_call(
        kernel,
        out_shape=jax.ShapeDtypeStruct((nB, 4, tB), f32),
        grid=(nB, nT),
        in_specs=in_specs,
        out_specs=out_spec,
        scratch_shapes=scratch_shapes,
        compiler_params=pltpu.CompilerParams(
            dimension_semantics=("parallel", "arbitrary"),
            vmem_limit_bytes=vmem_limit),
        cost_estimate=pl.CostEstimate(
            flops=int(flops), transcendentals=int(transcendentals),
            bytes_accessed=int(bytes_accessed)),
    )(*inputs)

    out = out.transpose(0, 2, 1).reshape(Bp, 4)[:B]       # (B, 4)
    return jnp.transpose(out)[:, :, None]                 # (4, B, 1)


def init_params(key, F, H):
    ks = jax.random.split(key, 16)

    def u(k, shape, scale):
        return jax.random.uniform(k, shape, jnp.float32, -scale, scale)

    s_f = 1.0 / math.sqrt(F)
    s_h = 1.0 / math.sqrt(H)
    s_h2 = 1.0 / math.sqrt(H + 2)
    return dict(
        # input_decay: F independent Linear(1, 1) modules
        w_id=u(ks[0], (1, F), 1.0),
        b_id=u(ks[1], (1, F), 1.0),
        # hidden_decay: Linear(F, H)
        w_hd=u(ks[2], (F, H), s_f),
        b_hd=u(ks[3], (1, H), s_f),
        # GRUCell(2F, H): gates stacked (r, z, n)
        w_ih=u(ks[4], (3, 2 * F, H), s_h),
        w_hh=u(ks[5], (3, H, H), s_h),
        b_ih=u(ks[6], (3, 1, H), s_h),
        b_hh=u(ks[7], (3, 1, H), s_h),
        # 4 output heads: Linear(H+2, H) -> BN(H) -> ReLU -> Linear(H, 1)
        fc_w1=u(ks[8], (4, H + 2, H), s_h2),
        fc_b1=u(ks[9], (4, 1, H), s_h2),
        bn_gamma=jax.random.uniform(ks[10], (4, 1, H), jnp.float32, 0.5, 1.5),
        bn_beta=u(ks[11], (4, 1, H), 0.1),
        bn_mean=u(ks[12], (4, 1, H), 0.1),
        bn_var=jax.random.uniform(ks[13], (4, 1, H), jnp.float32, 0.5, 1.5),
        fc_w2=u(ks[14], (4, H, 1), s_h),
        fc_b2=u(ks[15], (4, 1, 1), s_h),
    )


def reference_forward(params, x, h, m, d, x_m, age, gen, length):
    """Pure-JAX reference mirroring the PyTorch forward (BN in eval mode)."""
    B, T, F = x.shape
    hp = jax.lax.Precision.HIGHEST
    wid = params["w_id"].reshape(1, 1, F)
    bid = params["b_id"].reshape(1, 1, F)
    xd = jnp.exp(-jnp.maximum(d * wid + bid, 0.0))
    xm = x_m.reshape(1, 1, F)
    x = m * x + (1 - m) * xd * x + (1 - m) * (1 - xd) * xm

    w_ih, w_hh = params["w_ih"], params["w_hh"]
    b_ih, b_hh = params["b_ih"], params["b_hh"]
    outs = []
    for t in range(T):
        hd = jnp.exp(-jnp.maximum(
            jnp.dot(d[:, t], params["w_hd"], precision=hp) + params["b_hd"], 0.0))
        h = hd * h
        xc = jnp.concatenate([x[:, t], m[:, t]], axis=-1)
        r = jax.nn.sigmoid(jnp.dot(xc, w_ih[0], precision=hp) + b_ih[0]
                           + jnp.dot(h, w_hh[0], precision=hp) + b_hh[0])
        z = jax.nn.sigmoid(jnp.dot(xc, w_ih[1], precision=hp) + b_ih[1]
                           + jnp.dot(h, w_hh[1], precision=hp) + b_hh[1])
        n = jnp.tanh(jnp.dot(xc, w_ih[2], precision=hp) + b_ih[2]
                     + r * (jnp.dot(h, w_hh[2], precision=hp) + b_hh[2]))
        h = (1 - z) * n + z * h
        outs.append(h)
    out = jnp.stack(outs, axis=1)                             # (B, T, H)
    sel = out[jnp.arange(B), length]                          # (B, H)
    feat = jnp.concatenate([sel, age[:, None], gen[:, None]], axis=-1)

    heads = []
    for i in range(4):
        y = jnp.dot(feat, params["fc_w1"][i], precision=hp) + params["fc_b1"][i]
        y = (y - params["bn_mean"][i]) / jnp.sqrt(params["bn_var"][i] + 1e-5)
        y = y * params["bn_gamma"][i] + params["bn_beta"][i]
        y = jnp.maximum(y, 0.0)
        y = jnp.dot(y, params["fc_w2"][i], precision=hp) + params["fc_b2"][i]
        heads.append(jax.nn.sigmoid(y))
    return jnp.stack(heads, axis=0)                           # (4, B, 1)


if __name__ == "__main__":
    B, T, F, H = 2, 8, 4, 32                                  # batch, seq, features, hidden
    key = jax.random.PRNGKey(0)
    k_in, k_p = jax.random.split(key)
    ks = jax.random.split(k_in, 8)

    x = jax.random.normal(ks[0], (B, T, F), jnp.float32)
    m = (jax.random.uniform(ks[1], (B, T, F)) > 0.4).astype(jnp.float32)
    d = jax.random.uniform(ks[2], (B, T, F), jnp.float32, 0.0, 2.0)
    x_m = jax.random.normal(ks[3], (F,), jnp.float32)
    h0 = jax.random.normal(ks[4], (B, H), jnp.float32) * 0.1
    age = jax.random.uniform(ks[5], (B,), jnp.float32, 0.0, 1.0)
    gen = (jax.random.uniform(ks[6], (B,)) > 0.5).astype(jnp.float32)
    length = jnp.array([T - 1, T // 2], dtype=jnp.int32)

    params = init_params(k_p, F, H)

    out = gru_d_binary_forward(params, x, h0, m, d, x_m, age, gen, length)
    out = jax.block_until_ready(out)

    ref = jax.block_until_ready(
        reference_forward(params, x, h0, m, d, x_m, age, gen, length))

    assert out.shape == (4, B, 1), out.shape
    if not jnp.allclose(out, ref, atol=1e-3, rtol=1e-3):
        raise AssertionError(
            f"kernel/reference mismatch, max abs err = {jnp.max(jnp.abs(out - ref))}")
    print("KERNEL_OK")
</pallas_src>

<mosaic_0001>
module attributes {stable_mosaic.version = 11 : i64} {
  func.func @gru_d_kernel(%arg0: i32, %arg1: i32, %arg2: memref<1x4x1024xf32, #tpu.memory_space<vmem>>, %arg3: memref<1x4x1024xf32, #tpu.memory_space<vmem>>, %arg4: memref<1x4x1024xf32, #tpu.memory_space<vmem>>, %arg5: memref<1x32x128xf32, #tpu.memory_space<vmem>>, %arg6: memref<1x1x128xi32, #tpu.memory_space<vmem>>, %arg7: memref<1x2x128xf32, #tpu.memory_space<vmem>>, %arg8: memref<4x3xf32, #tpu.memory_space<vmem>>, %arg9: memref<224x4xf32, #tpu.memory_space<vmem>>, %arg10: memref<160x1xf32, #tpu.memory_space<vmem>>, %arg11: memref<224x32xf32, #tpu.memory_space<vmem>>, %arg12: memref<128x5xf32, #tpu.memory_space<vmem>>, %arg13: memref<4x128xf32, #tpu.memory_space<vmem>>, %arg14: memref<4x1xf32, #tpu.memory_space<vmem>>, %arg15: memref<1x4x128xf32, #tpu.memory_space<vmem>>, %arg16: memref<32x128xf32, #tpu.memory_space<vmem>>, %arg17: memref<32x128xf32, #tpu.memory_space<vmem>>, %arg18: memref<8x96x128xf32, #tpu.memory_space<vmem>>, %arg19: memref<8x32x128xf32, #tpu.memory_space<vmem>>) attributes {dimension_semantics = [#tpu.dimension_semantics<parallel>, #tpu.dimension_semantics<arbitrary>], iteration_bounds = array<i64: 1, 1>, scalar_prefetch = 0 : i64, scratch_operands = 4 : i64, tpu.core_type = #tpu.core_type<tc>, window_params = [{transform_indices = @transform_0, window_bounds = array<i64: 1, 4, 1024>}, {transform_indices = @transform_1, window_bounds = array<i64: 1, 4, 1024>}, {transform_indices = @transform_2, window_bounds = array<i64: 1, 4, 1024>}, {transform_indices = @transform_3, window_bounds = array<i64: 1, 32, 128>}, {transform_indices = @transform_4, window_bounds = array<i64: 1, 1, 128>}, {transform_indices = @transform_5, window_bounds = array<i64: 1, 2, 128>}, {pipeline_mode = #tpu.pipeline_mode<synchronous>, transform_indices = @transform_6, window_bounds = array<i64: 4, 3>}, {pipeline_mode = #tpu.pipeline_mode<synchronous>, transform_indices = @transform_7, window_bounds = array<i64: 224, 4>}, {pipeline_mode = #tpu.pipeline_mode<synchronous>, transform_indices = @transform_8, window_bounds = array<i64: 160, 1>}, {pipeline_mode = #tpu.pipeline_mode<synchronous>, transform_indices = @transform_9, window_bounds = array<i64: 224, 32>}, {pipeline_mode = #tpu.pipeline_mode<synchronous>, transform_indices = @transform_10, window_bounds = array<i64: 128, 5>}, {pipeline_mode = #tpu.pipeline_mode<synchronous>, transform_indices = @transform_11, window_bounds = array<i64: 4, 128>}, {pipeline_mode = #tpu.pipeline_mode<synchronous>, transform_indices = @transform_12, window_bounds = array<i64: 4, 1>}, {transform_indices = @transform_13, window_bounds = array<i64: 1, 4, 128>}]} {
    %c0_i32 = arith.constant 0 : i32
    %0 = arith.cmpi eq, %arg1, %c0_i32 : i32
    %1 = arith.extui %0 : i1 to i32
    %c0_i32_0 = arith.constant 0 : i32
    %2 = arith.cmpi ne, %1, %c0_i32_0 : i32
    scf.if %2 {
      %c0_155 = arith.constant 0 : index
      %c0_156 = arith.constant 0 : index
      %c0_157 = arith.constant 0 : index
      %456 = vector.load %arg5[%c0_155, %c0_156, %c0_157] : memref<1x32x128xf32, #tpu.memory_space<vmem>>, vector<1x32x128xf32>
      %457 = vector.shape_cast %456 : vector<1x32x128xf32> to vector<32x128xf32>
      %c0_158 = arith.constant 0 : index
      %c0_159 = arith.constant 0 : index
      %458 = vector.load %arg16[%c0_158, %c0_159] : memref<32x128xf32, #tpu.memory_space<vmem>>, vector<32x128xf32>
      tpu.vector_store %arg16[%c0_158, %c0_159], %457 {strides = array<i32>} : memref<32x128xf32, #tpu.memory_space<vmem>>, vector<32x128xf32>,
      %cst_160 = arith.constant 0.000000e+00 : f32
      %459 = vector.broadcast %cst_160 : f32 to vector<32x128xf32>
      %c0_161 = arith.constant 0 : index
      %c0_162 = arith.constant 0 : index
      %460 = vector.load %arg17[%c0_161, %c0_162] : memref<32x128xf32, #tpu.memory_space<vmem>>, vector<32x128xf32>
      tpu.vector_store %arg17[%c0_161, %c0_162], %459 {strides = array<i32>} : memref<32x128xf32, #tpu.memory_space<vmem>>, vector<32x128xf32>,
    } else {
    }
    %c0 = arith.constant 0 : index
    %c0_1 = arith.constant 0 : index
    %c0_2 = arith.constant 0 : index
    %3 = vector.load %arg2[%c0, %c0_1, %c0_2] : memref<1x4x1024xf32, #tpu.memory_space<vmem>>, vector<1x4x1024xf32>
    %4 = vector.shape_cast %3 : vector<1x4x1024xf32> to vector<4x1024xf32>
    %c0_3 = arith.constant 0 : index
    %c0_4 = arith.constant 0 : index
    %c0_5 = arith.constant 0 : index
    %5 = vector.load %arg3[%c0_3, %c0_4, %c0_5] : memref<1x4x1024xf32, #tpu.memory_space<vmem>>, vector<1x4x1024xf32>
    %6 = vector.shape_cast %5 : vector<1x4x1024xf32> to vector<4x1024xf32>
    %c0_6 = arith.constant 0 : index
    %c0_7 = arith.constant 0 : index
    %c0_8 = arith.constant 0 : index
    %7 = vector.load %arg4[%c0_6, %c0_7, %c0_8] : memref<1x4x1024xf32, #tpu.memory_space<vmem>>, vector<1x4x1024xf32>
    %8 = vector.shape_cast %7 : vector<1x4x1024xf32> to vector<4x1024xf32>
    %c0_9 = arith.constant 0 : index
    %c0_10 = arith.constant 0 : index
    %9 = vector.load %arg8[%c0_9, %c0_10] : memref<4x3xf32, #tpu.memory_space<vmem>>, vector<4x1xf32>
    %c0_11 = arith.constant 0 : index
    %c1 = arith.constant 1 : index
    %10 = vector.load %arg8[%c0_11, %c1] : memref<4x3xf32, #tpu.memory_space<vmem>>, vector<4x1xf32>
    %c0_12 = arith.constant 0 : index
    %c2 = arith.constant 2 : index
    %11 = vector.load %arg8[%c0_12, %c2] : memref<4x3xf32, #tpu.memory_space<vmem>>, vector<4x1xf32>
    %12 = vector.broadcast %9 : vector<4x1xf32> to vector<4x1024xf32>
    %13 = arith.mulf %8, %12 : vector<4x1024xf32>
    %14 = vector.broadcast %10 : vector<4x1xf32> to vector<4x1024xf32>
    %15 = arith.addf %13, %14 : vector<4x1024xf32>
    %cst = arith.constant 0.000000e+00 : f32
    %16 = vector.broadcast %cst : f32 to vector<4x1024xf32>
    %17 = arith.maximumf %15, %16 : vector<4x1024xf32>
    %cst_13 = arith.constant 0.000000e+00 : f32
    %18 = vector.broadcast %cst_13 : f32 to vector<4x1024xf32>
    %19 = arith.subf %18, %17 : vector<4x1024xf32>
    %20 = math.exp %19 : vector<4x1024xf32>
    %cst_14 = arith.constant 1.000000e+00 : f32
    %21 = vector.broadcast %cst_14 : f32 to vector<4x1024xf32>
    %22 = arith.subf %21, %6 : vector<4x1024xf32>
    %23 = arith.mulf %6, %4 : vector<4x1024xf32>
    %24 = arith.mulf %20, %4 : vector<4x1024xf32>
    %cst_15 = arith.constant 1.000000e+00 : f32
    %25 = vector.broadcast %cst_15 : f32 to vector<4x1024xf32>
    %26 = arith.subf %25, %20 : vector<4x1024xf32>
    %27 = vector.broadcast %11 : vector<4x1xf32> to vector<4x1024xf32>
    %28 = arith.mulf %26, %27 : vector<4x1024xf32>
    %29 = arith.addf %24, %28 : vector<4x1024xf32>
    %30 = arith.mulf %22, %29 : vector<4x1024xf32>
    %31 = arith.addf %23, %30 : vector<4x1024xf32>
    %c0_16 = arith.constant 0 : index
    %c0_17 = arith.constant 0 : index
    %32 = vector.load %arg9[%c0_16, %c0_17] : memref<224x4xf32, #tpu.memory_space<vmem>>, vector<32x4xf32>
    %c32 = arith.constant 32 : index
    %c0_18 = arith.constant 0 : index
    %33 = vector.load %arg9[%c32, %c0_18] : memref<224x4xf32, #tpu.memory_space<vmem>>, vector<96x4xf32>
    %c128 = arith.constant 128 : index
    %c0_19 = arith.constant 0 : index
    %34 = vector.load %arg9[%c128, %c0_19] : memref<224x4xf32, #tpu.memory_space<vmem>>, vector<96x4xf32>
    %c0_20 = arith.constant 0 : index
    %c0_21 = arith.constant 0 : index
    %35 = vector.load %arg10[%c0_20, %c0_21] : memref<160x1xf32, #tpu.memory_space<vmem>>, vector<32x1xf32>
    %c32_22 = arith.constant 32 : index
    %c0_23 = arith.constant 0 : index
    %36 = vector.load %arg10[%c32_22, %c0_23] : memref<160x1xf32, #tpu.memory_space<vmem>>, vector<96x1xf32>
    %c128_24 = arith.constant 128 : index
    %c0_25 = arith.constant 0 : index
    %37 = vector.load %arg10[%c128_24, %c0_25] : memref<160x1xf32, #tpu.memory_space<vmem>>, vector<32x1xf32>
    %cst_26 = arith.constant dense<0.000000e+00> : vector<32x1024xf32>
    %38 = tpu.matmul %32, %8, %cst_26 {dimension_numbers = #tpu.dot_dimension_numbers<[1], [0], [0], [1], [0, 0, 1, 1], [], []>} : vector<32x4xf32>, vector<4x1024xf32>, vector<32x1024xf32> -> vector<32x1024xf32>
    %39 = vector.broadcast %35 : vector<32x1xf32> to vector<32x1024xf32>
    %40 = arith.addf %38, %39 : vector<32x1024xf32>
    %cst_27 = arith.constant 0.000000e+00 : f32
    %41 = vector.broadcast %cst_27 : f32 to vector<32x1024xf32>
    %42 = arith.maximumf %40, %41 : vector<32x1024xf32>
    %cst_28 = arith.constant 0.000000e+00 : f32
    %43 = vector.broadcast %cst_28 : f32 to vector<32x1024xf32>
    %44 = arith.subf %43, %42 : vector<32x1024xf32>
    %45 = math.exp %44 : vector<32x1024xf32>
    %cst_29 = arith.constant dense<0.000000e+00> : vector<96x1024xf32>
    %46 = tpu.matmul %33, %31, %cst_29 {dimension_numbers = #tpu.dot_dimension_numbers<[1], [0], [0], [1], [0, 0, 1, 1], [], []>} : vector<96x4xf32>, vector<4x1024xf32>, vector<96x1024xf32> -> vector<96x1024xf32>
    %cst_30 = arith.constant dense<0.000000e+00> : vector<96x1024xf32>
    %47 = tpu.matmul %34, %6, %cst_30 {dimension_numbers = #tpu.dot_dimension_numbers<[1], [0], [0], [1], [0, 0, 1, 1], [], []>} : vector<96x4xf32>, vector<4x1024xf32>, vector<96x1024xf32> -> vector<96x1024xf32>
    %48 = arith.addf %46, %47 : vector<96x1024xf32>
    %49 = vector.broadcast %36 : vector<96x1xf32> to vector<96x1024xf32>
    %50 = arith.addf %48, %49 : vector<96x1024xf32>
    %51 = vector.extract_strided_slice %50 {offsets = [0, 0], sizes = [96, 128], strides = [1, 1]} : vector<96x1024xf32> to vector<96x128xf32>
    %c0_31 = arith.constant 0 : index
    %c0_32 = arith.constant 0 : index
    %c0_33 = arith.constant 0 : index
    %52 = vector.load %arg18[%c0_31, %c0_32, %c0_33] : memref<8x96x128xf32, #tpu.memory_space<vmem>>, vector<1x96x128xf32>
    %53 = vector.shape_cast %52 : vector<1x96x128xf32> to vector<96x128xf32>
    %54 = vector.shape_cast %51 : vector<96x128xf32> to vector<1x96x128xf32>
    tpu.vector_store %arg18[%c0_31, %c0_32, %c0_33], %54 {strides = array<i32>} : memref<8x96x128xf32, #tpu.memory_space<vmem>>, vector<1x96x128xf32>,
    %55 = vector.extract_strided_slice %45 {offsets = [0, 0], sizes = [32, 128], strides = [1, 1]} : vector<32x1024xf32> to vector<32x128xf32>
    %c0_34 = arith.constant 0 : index
    %c0_35 = arith.constant 0 : index
    %c0_36 = arith.constant 0 : index
    %56 = vector.load %arg19[%c0_34, %c0_35, %c0_36] : memref<8x32x128xf32, #tpu.memory_space<vmem>>, vector<1x32x128xf32>
    %57 = vector.shape_cast %56 : vector<1x32x128xf32> to vector<32x128xf32>
    %58 = vector.shape_cast %55 : vector<32x128xf32> to vector<1x32x128xf32>
    tpu.vector_store %arg19[%c0_34, %c0_35, %c0_36], %58 {strides = array<i32>} : memref<8x32x128xf32, #tpu.memory_space<vmem>>, vector<1x32x128xf32>,
    %59 = vector.extract_strided_slice %50 {offsets = [0, 128], sizes = [96, 128], strides = [1, 1]} : vector<96x1024xf32> to vector<96x128xf32>
    %c1_37 = arith.constant 1 : index
    %c0_38 = arith.constant 0 : index
    %c0_39 = arith.constant 0 : index
    %60 = vector.load %arg18[%c1_37, %c0_38, %c0_39] : memref<8x96x128xf32, #tpu.memory_space<vmem>>, vector<1x96x128xf32>
    %61 = vector.shape_cast %60 : vector<1x96x128xf32> to vector<96x128xf32>
    %62 = vector.shape_cast %59 : vector<96x128xf32> to vector<1x96x128xf32>
    tpu.vector_store %arg18[%c1_37, %c0_38, %c0_39], %62 {strides = array<i32>} : memref<8x96x128xf32, #tpu.memory_space<vmem>>, vector<1x96x128xf32>,
    %63 = vector.extract_strided_slice %45 {offsets = [0, 128], sizes = [32, 128], strides = [1, 1]} : vector<32x1024xf32> to vector<32x128xf32>
    %c1_40 = arith.constant 1 : index
    %c0_41 = arith.constant 0 : index
    %c0_42 = arith.constant 0 : index
    %64 = vector.load %arg19[%c1_40, %c0_41, %c0_42] : memref<8x32x128xf32, #tpu.memory_space<vmem>>, vector<1x32x128xf32>
    %65 = vector.shape_cast %64 : vector<1x32x128xf32> to vector<32x128xf32>
    %66 = vector.shape_cast %63 : vector<32x128xf32> to vector<1x32x128xf32>
    tpu.vector_store %arg19[%c1_40, %c0_41, %c0_42], %66 {strides = array<i32>} : memref<8x32x128xf32, #tpu.memory_space<vmem>>, vector<1x32x128xf32>,
    %67 = vector.extract_strided_slice %50 {offsets = [0, 256], sizes = [96, 128], strides = [1, 1]} : vector<96x1024xf32> to vector<96x128xf32>
    %c2_43 = arith.constant 2 : index
    %c0_44 = arith.constant 0 : index
    %c0_45 = arith.constant 0 : index
    %68 = vector.load %arg18[%c2_43, %c0_44, %c0_45] : memref<8x96x128xf32, #tpu.memory_space<vmem>>, vector<1x96x128xf32>
    %69 = vector.shape_cast %68 : vector<1x96x128xf32> to vector<96x128xf32>
    %70 = vector.shape_cast %67 : vector<96x128xf32> to vector<1x96x128xf32>
    tpu.vector_store %arg18[%c2_43, %c0_44, %c0_45], %70 {strides = array<i32>} : memref<8x96x128xf32, #tpu.memory_space<vmem>>, vector<1x96x128xf32>,
    %71 = vector.extract_strided_slice %45 {offsets = [0, 256], sizes = [32, 128], strides = [1, 1]} : vector<32x1024xf32> to vector<32x128xf32>
    %c2_46 = arith.constant 2 : index
    %c0_47 = arith.constant 0 : index
    %c0_48 = arith.constant 0 : index
    %72 = vector.load %arg19[%c2_46, %c0_47, %c0_48] : memref<8x32x128xf32, #tpu.memory_space<vmem>>, vector<1x32x128xf32>
    %73 = vector.shape_cast %72 : vector<1x32x128xf32> to vector<32x128xf32>
    %74 = vector.shape_cast %71 : vector<32x128xf32> to vector<1x32x128xf32>
    tpu.vector_store %arg19[%c2_46, %c0_47, %c0_48], %74 {strides = array<i32>} : memref<8x32x128xf32, #tpu.memory_space<vmem>>, vector<1x32x128xf32>,
    %75 = vector.extract_strided_slice %50 {offsets = [0, 384], sizes = [96, 128], strides = [1, 1]} : vector<96x1024xf32> to vector<96x128xf32>
    %c3 = arith.constant 3 : index
    %c0_49 = arith.constant 0 : index
    %c0_50 = arith.constant 0 : index
    %76 = vector.load %arg18[%c3, %c0_49, %c0_50] : memref<8x96x128xf32, #tpu.memory_space<vmem>>, vector<1x96x128xf32>
    %77 = vector.shape_cast %76 : vector<1x96x128xf32> to vector<96x128xf32>
    %78 = vector.shape_cast %75 : vector<96x128xf32> to vector<1x96x128xf32>
    tpu.vector_store %arg18[%c3, %c0_49, %c0_50], %78 {strides = array<i32>} : memref<8x96x128xf32, #tpu.memory_space<vmem>>, vector<1x96x128xf32>,
    %79 = vector.extract_strided_slice %45 {offsets = [0, 384], sizes = [32, 128], strides = [1, 1]} : vector<32x1024xf32> to vector<32x128xf32>
    %c3_51 = arith.constant 3 : index
    %c0_52 = arith.constant 0 : index
    %c0_53 = arith.constant 0 : index
    %80 = vector.load %arg19[%c3_51, %c0_52, %c0_53] : memref<8x32x128xf32, #tpu.memory_space<vmem>>, vector<1x32x128xf32>
    %81 = vector.shape_cast %80 : vector<1x32x128xf32> to vector<32x128xf32>
    %82 = vector.shape_cast %79 : vector<32x128xf32> to vector<1x32x128xf32>
    tpu.vector_store %arg19[%c3_51, %c0_52, %c0_53], %82 {strides = array<i32>} : memref<8x32x128xf32, #tpu.memory_space<vmem>>, vector<1x32x128xf32>,
    %83 = vector.extract_strided_slice %50 {offsets = [0, 512], sizes = [96, 128], strides = [1, 1]} : vector<96x1024xf32> to vector<96x128xf32>
    %c4 = arith.constant 4 : index
    %c0_54 = arith.constant 0 : index
    %c0_55 = arith.constant 0 : index
    %84 = vector.load %arg18[%c4, %c0_54, %c0_55] : memref<8x96x128xf32, #tpu.memory_space<vmem>>, vector<1x96x128xf32>
    %85 = vector.shape_cast %84 : vector<1x96x128xf32> to vector<96x128xf32>
    %86 = vector.shape_cast %83 : vector<96x128xf32> to vector<1x96x128xf32>
    tpu.vector_store %arg18[%c4, %c0_54, %c0_55], %86 {strides = array<i32>} : memref<8x96x128xf32, #tpu.memory_space<vmem>>, vector<1x96x128xf32>,
    %87 = vector.extract_strided_slice %45 {offsets = [0, 512], sizes = [32, 128], strides = [1, 1]} : vector<32x1024xf32> to vector<32x128xf32>
    %c4_56 = arith.constant 4 : index
    %c0_57 = arith.constant 0 : index
    %c0_58 = arith.constant 0 : index
    %88 = vector.load %arg19[%c4_56, %c0_57, %c0_58] : memref<8x32x128xf32, #tpu.memory_space<vmem>>, vector<1x32x128xf32>
    %89 = vector.shape_cast %88 : vector<1x32x128xf32> to vector<32x128xf32>
    %90 = vector.shape_cast %87 : vector<32x128xf32> to vector<1x32x128xf32>
    tpu.vector_store %arg19[%c4_56, %c0_57, %c0_58], %90 {strides = array<i32>} : memref<8x32x128xf32, #tpu.memory_space<vmem>>, vector<1x32x128xf32>,
    %91 = vector.extract_strided_slice %50 {offsets = [0, 640], sizes = [96, 128], strides = [1, 1]} : vector<96x1024xf32> to vector<96x128xf32>
    %c5 = arith.constant 5 : index
    %c0_59 = arith.constant 0 : index
    %c0_60 = arith.constant 0 : index
    %92 = vector.load %arg18[%c5, %c0_59, %c0_60] : memref<8x96x128xf32, #tpu.memory_space<vmem>>, vector<1x96x128xf32>
    %93 = vector.shape_cast %92 : vector<1x96x128xf32> to vector<96x128xf32>
    %94 = vector.shape_cast %91 : vector<96x128xf32> to vector<1x96x128xf32>
    tpu.vector_store %arg18[%c5, %c0_59, %c0_60], %94 {strides = array<i32>} : memref<8x96x128xf32, #tpu.memory_space<vmem>>, vector<1x96x128xf32>,
    %95 = vector.extract_strided_slice %45 {offsets = [0, 640], sizes = [32, 128], strides = [1, 1]} : vector<32x1024xf32> to vector<32x128xf32>
    %c5_61 = arith.constant 5 : index
    %c0_62 = arith.constant 0 : index
    %c0_63 = arith.constant 0 : index
    %96 = vector.load %arg19[%c5_61, %c0_62, %c0_63] : memref<8x32x128xf32, #tpu.memory_space<vmem>>, vector<1x32x128xf32>
    %97 = vector.shape_cast %96 : vector<1x32x128xf32> to vector<32x128xf32>
    %98 = vector.shape_cast %95 : vector<32x128xf32> to vector<1x32x128xf32>
    tpu.vector_store %arg19[%c5_61, %c0_62, %c0_63], %98 {strides = array<i32>} : memref<8x32x128xf32, #tpu.memory_space<vmem>>, vector<1x32x128xf32>,
    %99 = vector.extract_strided_slice %50 {offsets = [0, 768], sizes = [96, 128], strides = [1, 1]} : vector<96x1024xf32> to vector<96x128xf32>
    %c6 = arith.constant 6 : index
    %c0_64 = arith.constant 0 : index
    %c0_65 = arith.constant 0 : index
    %100 = vector.load %arg18[%c6, %c0_64, %c0_65] : memref<8x96x128xf32, #tpu.memory_space<vmem>>, vector<1x96x128xf32>
    %101 = vector.shape_cast %100 : vector<1x96x128xf32> to vector<96x128xf32>
    %102 = vector.shape_cast %99 : vector<96x128xf32> to vector<1x96x128xf32>
    tpu.vector_store %arg18[%c6, %c0_64, %c0_65], %102 {strides = array<i32>} : memref<8x96x128xf32, #tpu.memory_space<vmem>>, vector<1x96x128xf32>,
    %103 = vector.extract_strided_slice %45 {offsets = [0, 768], sizes = [32, 128], strides = [1, 1]} : vector<32x1024xf32> to vector<32x128xf32>
    %c6_66 = arith.constant 6 : index
    %c0_67 = arith.constant 0 : index
    %c0_68 = arith.constant 0 : index
    %104 = vector.load %arg19[%c6_66, %c0_67, %c0_68] : memref<8x32x128xf32, #tpu.memory_space<vmem>>, vector<1x32x128xf32>
    %105 = vector.shape_cast %104 : vector<1x32x128xf32> to vector<32x128xf32>
    %106 = vector.shape_cast %103 : vector<32x128xf32> to vector<1x32x128xf32>
    tpu.vector_store %arg19[%c6_66, %c0_67, %c0_68], %106 {strides = array<i32>} : memref<8x32x128xf32, #tpu.memory_space<vmem>>, vector<1x32x128xf32>,
    %107 = vector.extract_strided_slice %50 {offsets = [0, 896], sizes = [96, 128], strides = [1, 1]} : vector<96x1024xf32> to vector<96x128xf32>
    %c7 = arith.constant 7 : index
    %c0_69 = arith.constant 0 : index
    %c0_70 = arith.constant 0 : index
    %108 = vector.load %arg18[%c7, %c0_69, %c0_70] : memref<8x96x128xf32, #tpu.memory_space<vmem>>, vector<1x96x128xf32>
    %109 = vector.shape_cast %108 : vector<1x96x128xf32> to vector<96x128xf32>
    %110 = vector.shape_cast %107 : vector<96x128xf32> to vector<1x96x128xf32>
    tpu.vector_store %arg18[%c7, %c0_69, %c0_70], %110 {strides = array<i32>} : memref<8x96x128xf32, #tpu.memory_space<vmem>>, vector<1x96x128xf32>,
    %111 = vector.extract_strided_slice %45 {offsets = [0, 896], sizes = [32, 128], strides = [1, 1]} : vector<32x1024xf32> to vector<32x128xf32>
    %c7_71 = arith.constant 7 : index
    %c0_72 = arith.constant 0 : index
    %c0_73 = arith.constant 0 : index
    %112 = vector.load %arg19[%c7_71, %c0_72, %c0_73] : memref<8x32x128xf32, #tpu.memory_space<vmem>>, vector<1x32x128xf32>
    %113 = vector.shape_cast %112 : vector<1x32x128xf32> to vector<32x128xf32>
    %114 = vector.shape_cast %111 : vector<32x128xf32> to vector<1x32x128xf32>
    tpu.vector_store %arg19[%c7_71, %c0_72, %c0_73], %114 {strides = array<i32>} : memref<8x32x128xf32, #tpu.memory_space<vmem>>, vector<1x32x128xf32>,
    %c0_74 = arith.constant 0 : index
    %c0_75 = arith.constant 0 : index
    %115 = vector.load %arg11[%c0_74, %c0_75] : memref<224x32xf32, #tpu.memory_space<vmem>>, vector<96x32xf32>
    %116 = vector.shape_cast %37 : vector<32x1xf32> to vector<32x1xf32>
    %117 = vector.broadcast %116 : vector<32x1xf32> to vector<32x128xf32>
    %c0_76 = arith.constant 0 : index
    %c0_77 = arith.constant 0 : index
    %c0_78 = arith.constant 0 : index
    %118 = vector.load %arg6[%c0_76, %c0_77, %c0_78] : memref<1x1x128xi32, #tpu.memory_space<vmem>>, vector<1x1x128xi32>
    %119 = vector.shape_cast %118 : vector<1x1x128xi32> to vector<1x128xi32>
    %c8_i32 = arith.constant 8 : i32
    %120 = arith.muli %arg1, %c8_i32 : i32
    %c0_79 = arith.constant 0 : index
    %c0_80 = arith.constant 0 : index
    %121 = vector.load %arg16[%c0_79, %c0_80] : memref<32x128xf32, #tpu.memory_space<vmem>>, vector<32x128xf32>
    %c0_81 = arith.constant 0 : index
    %c0_82 = arith.constant 0 : index
    %122 = vector.load %arg17[%c0_81, %c0_82] : memref<32x128xf32, #tpu.memory_space<vmem>>, vector<32x128xf32>
    %c0_i32_83 = arith.constant 0 : i32
    %123 = arith.index_cast %c0_i32_83 : i32 to index
    %c0_84 = arith.constant 0 : index
    %c0_85 = arith.constant 0 : index
    %124 = vector.load %arg18[%123, %c0_84, %c0_85] : memref<8x96x128xf32, #tpu.memory_space<vmem>>, vector<1x96x128xf32>
    %125 = vector.shape_cast %124 : vector<1x96x128xf32> to vector<96x128xf32>
    %126 = arith.index_cast %c0_i32_83 : i32 to index
    %c0_86 = arith.constant 0 : index
    %c0_87 = arith.constant 0 : index
    %127 = vector.load %arg19[%126, %c0_86, %c0_87] : memref<8x32x128xf32, #tpu.memory_space<vmem>>, vector<1x32x128xf32>
    %128 = vector.shape_cast %127 : vector<1x32x128xf32> to vector<32x128xf32>
    %129 = arith.mulf %128, %121 : vector<32x128xf32>
    %cst_88 = arith.constant dense<0.000000e+00> : vector<96x128xf32>
    %130 = tpu.matmul %115, %129, %cst_88 {dimension_numbers = #tpu.dot_dimension_numbers<[1], [0], [0], [1], [0, 0, 1, 1], [], []>} : vector<96x32xf32>, vector<32x128xf32>, vector<96x128xf32> -> vector<96x128xf32>
    %131 = vector.extract_strided_slice %125 {offsets = [0, 0], sizes = [32, 128], strides = [1, 1]} : vector<96x128xf32> to vector<32x128xf32>
    %132 = vector.extract_strided_slice %130 {offsets = [0, 0], sizes = [32, 128], strides = [1, 1]} : vector<96x128xf32> to vector<32x128xf32>
    %133 = arith.addf %131, %132 : vector<32x128xf32>
    %134 = arith.negf %133 : vector<32x128xf32>
    %135 = math.exp %134 : vector<32x128xf32>
    %cst_89 = arith.constant 1.000000e+00 : f32
    %136 = vector.broadcast %cst_89 : f32 to vector<32x128xf32>
    %137 = arith.addf %136, %135 : vector<32x128xf32>
    %138 = arith.divf %136, %137 : vector<32x128xf32>
    %139 = vector.extract_strided_slice %125 {offsets = [32, 0], sizes = [32, 128], strides = [1, 1]} : vector<96x128xf32> to vector<32x128xf32>
    %140 = vector.extract_strided_slice %130 {offsets = [32, 0], sizes = [32, 128], strides = [1, 1]} : vector<96x128xf32> to vector<32x128xf32>
    %141 = arith.addf %139, %140 : vector<32x128xf32>
    %142 = arith.negf %141 : vector<32x128xf32>
    %143 = math.exp %142 : vector<32x128xf32>
    %cst_90 = arith.constant 1.000000e+00 : f32
    %144 = vector.broadcast %cst_90 : f32 to vector<32x128xf32>
    %145 = arith.addf %144, %143 : vector<32x128xf32>
    %146 = arith.divf %144, %145 : vector<32x128xf32>
    %147 = vector.extract_strided_slice %125 {offsets = [64, 0], sizes = [32, 128], strides = [1, 1]} : vector<96x128xf32> to vector<32x128xf32>
    %148 = vector.extract_strided_slice %130 {offsets = [64, 0], sizes = [32, 128], strides = [1, 1]} : vector<96x128xf32> to vector<32x128xf32>
    %149 = arith.addf %148, %117 : vector<32x128xf32>
    %150 = arith.mulf %138, %149 : vector<32x128xf32>
    %151 = arith.addf %147, %150 : vector<32x128xf32>
    %152 = math.tanh %151 : vector<32x128xf32>
    %cst_91 = arith.constant 1.000000e+00 : f32
    %153 = vector.broadcast %cst_91 : f32 to vector<32x128xf32>
    %154 = arith.subf %153, %146 : vector<32x128xf32>
    %155 = arith.mulf %154, %152 : vector<32x128xf32>
    %156 = arith.mulf %146, %129 : vector<32x128xf32>
    %157 = arith.addf %155, %156 : vector<32x128xf32>
    %158 = arith.addi %120, %c0_i32_83 : i32
    %159 = vector.broadcast %158 : i32 to vector<1x128xi32>
    %160 = arith.cmpi eq, %119, %159 : vector<1x128xi32>
    %161 = vector.shape_cast %160 : vector<1x128xi1> to vector<1x128xi1>
    %162 = vector.broadcast %161 : vector<1x128xi1> to vector<32x128xi1>
    %163 = arith.select %162, %157, %122 : vector<32x128xi1>, vector<32x128xf32>
    %c1_i32 = arith.constant 1 : i32
    %164 = arith.index_cast %c1_i32 : i32 to index
    %c0_92 = arith.constant 0 : index
    %c0_93 = arith.constant 0 : index
    %165 = vector.load %arg18[%164, %c0_92, %c0_93] : memref<8x96x128xf32, #tpu.memory_space<vmem>>, vector<1x96x128xf32>
    %166 = vector.shape_cast %165 : vector<1x96x128xf32> to vector<96x128xf32>
    %167 = arith.index_cast %c1_i32 : i32 to index
    %c0_94 = arith.constant 0 : index
    %c0_95 = arith.constant 0 : index
    %168 = vector.load %arg19[%167, %c0_94, %c0_95] : memref<8x32x128xf32, #tpu.memory_space<vmem>>, vector<1x32x128xf32>
    %169 = vector.shape_cast %168 : vector<1x32x128xf32> to vector<32x128xf32>
    %170 = arith.mulf %169, %157 : vector<32x128xf32>
    %cst_96 = arith.constant dense<0.000000e+00> : vector<96x128xf32>
    %171 = tpu.matmul %115, %170, %cst_96 {dimension_numbers = #tpu.dot_dimension_numbers<[1], [0], [0], [1], [0, 0, 1, 1], [], []>} : vector<96x32xf32>, vector<32x128xf32>, vector<96x128xf32> -> vector<96x128xf32>
    %172 = vector.extract_strided_slice %166 {offsets = [0, 0], sizes = [32, 128], strides = [1, 1]} : vector<96x128xf32> to vector<32x128xf32>
    %173 = vector.extract_strided_slice %171 {offsets = [0, 0], sizes = [32, 128], strides = [1, 1]} : vector<96x128xf32> to vector<32x128xf32>
    %174 = arith.addf %172, %173 : vector<32x128xf32>
    %175 = arith.negf %174 : vector<32x128xf32>
    %176 = math.exp %175 : vector<32x128xf32>
    %cst_97 = arith.constant 1.000000e+00 : f32
    %177 = vector.broadcast %cst_97 : f32 to vector<32x128xf32>
    %178 = arith.addf %177, %176 : vector<32x128xf32>
    %179 = arith.divf %177, %178 : vector<32x128xf32>
    %180 = vector.extract_strided_slice %166 {offsets = [32, 0], sizes = [32, 128], strides = [1, 1]} : vector<96x128xf32> to vector<32x128xf32>
    %181 = vector.extract_strided_slice %171 {offsets = [32, 0], sizes = [32, 128], strides = [1, 1]} : vector<96x128xf32> to vector<32x128xf32>
    %182 = arith.addf %180, %181 : vector<32x128xf32>
    %183 = arith.negf %182 : vector<32x128xf32>
    %184 = math.exp %183 : vector<32x128xf32>
    %cst_98 = arith.constant 1.000000e+00 : f32
    %185 = vector.broadcast %cst_98 : f32 to vector<32x128xf32>
    %186 = arith.addf %185, %184 : vector<32x128xf32>
    %187 = arith.divf %185, %186 : vector<32x128xf32>
    %188 = vector.extract_strided_slice %166 {offsets = [64, 0], sizes = [32, 128], strides = [1, 1]} : vector<96x128xf32> to vector<32x128xf32>
    %189 = vector.extract_strided_slice %171 {offsets = [64, 0], sizes = [32, 128], strides = [1, 1]} : vector<96x128xf32> to vector<32x128xf32>
    %190 = arith.addf %189, %117 : vector<32x128xf32>
    %191 = arith.mulf %179, %190 : vector<32x128xf32>
    %192 = arith.addf %188, %191 : vector<32x128xf32>
    %193 = math.tanh %192 : vector<32x128xf32>
    %cst_99 = arith.constant 1.000000e+00 : f32
    %194 = vector.broadcast %cst_99 : f32 to vector<32x128xf32>
    %195 = arith.subf %194, %187 : vector<32x128xf32>
    %196 = arith.mulf %195, %193 : vector<32x128xf32>
    %197 = arith.mulf %187, %170 : vector<32x128xf32>
    %198 = arith.addf %196, %197 : vector<32x128xf32>
    %199 = arith.addi %120, %c1_i32 : i32
    %200 = vector.broadcast %199 : i32 to vector<1x128xi32>
    %201 = arith.cmpi eq, %119, %200 : vector<1x128xi32>
    %202 = vector.shape_cast %201 : vector<1x128xi1> to vector<1x128xi1>
    %203 = vector.broadcast %202 : vector<1x128xi1> to vector<32x128xi1>
    %204 = arith.select %203, %198, %163 : vector<32x128xi1>, vector<32x128xf32>
    %c2_i32 = arith.constant 2 : i32
    %205 = arith.index_cast %c2_i32 : i32 to index
    %c0_100 = arith.constant 0 : index
    %c0_101 = arith.constant 0 : index
    %206 = vector.load %arg18[%205, %c0_100, %c0_101] : memref<8x96x128xf32, #tpu.memory_space<vmem>>, vector<1x96x128xf32>
    %207 = vector.shape_cast %206 : vector<1x96x128xf32> to vector<96x128xf32>
    %208 = arith.index_cast %c2_i32 : i32 to index
    %c0_102 = arith.constant 0 : index
    %c0_103 = arith.constant 0 : index
    %209 = vector.load %arg19[%208, %c0_102, %c0_103] : memref<8x32x128xf32, #tpu.memory_space<vmem>>, vector<1x32x128xf32>
    %210 = vector.shape_cast %209 : vector<1x32x128xf32> to vector<32x128xf32>
    %211 = arith.mulf %210, %198 : vector<32x128xf32>
    %cst_104 = arith.constant dense<0.000000e+00> : vector<96x128xf32>
    %212 = tpu.matmul %115, %211, %cst_104 {dimension_numbers = #tpu.dot_dimension_numbers<[1], [0], [0], [1], [0, 0, 1, 1], [], []>} : vector<96x32xf32>, vector<32x128xf32>, vector<96x128xf32> -> vector<96x128xf32>
    %213 = vector.extract_strided_slice %207 {offsets = [0, 0], sizes = [32, 128], strides = [1, 1]} : vector<96x128xf32> to vector<32x128xf32>
    %214 = vector.extract_strided_slice %212 {offsets = [0, 0], sizes = [32, 128], strides = [1, 1]} : vector<96x128xf32> to vector<32x128xf32>
    %215 = arith.addf %213, %214 : vector<32x128xf32>
    %216 = arith.negf %215 : vector<32x128xf32>
    %217 = math.exp %216 : vector<32x128xf32>
    %cst_105 = arith.constant 1.000000e+00 : f32
    %218 = vector.broadcast %cst_105 : f32 to vector<32x128xf32>
    %219 = arith.addf %218, %217 : vector<32x128xf32>
    %220 = arith.divf %218, %219 : vector<32x128xf32>
    %221 = vector.extract_strided_slice %207 {offsets = [32, 0], sizes = [32, 128], strides = [1, 1]} : vector<96x128xf32> to vector<32x128xf32>
    %222 = vector.extract_strided_slice %212 {offsets = [32, 0], sizes = [32, 128], strides = [1, 1]} : vector<96x128xf32> to vector<32x128xf32>
    %223 = arith.addf %221, %222 : vector<32x128xf32>
    %224 = arith.negf %223 : vector<32x128xf32>
    %225 = math.exp %224 : vector<32x128xf32>
    %cst_106 = arith.constant 1.000000e+00 : f32
    %226 = vector.broadcast %cst_106 : f32 to vector<32x128xf32>
    %227 = arith.addf %226, %225 : vector<32x128xf32>
    %228 = arith.divf %226, %227 : vector<32x128xf32>
    %229 = vector.extract_strided_slice %207 {offsets = [64, 0], sizes = [32, 128], strides = [1, 1]} : vector<96x128xf32> to vector<32x128xf32>
    %230 = vector.extract_strided_slice %212 {offsets = [64, 0], sizes = [32, 128], strides = [1, 1]} : vector<96x128xf32> to vector<32x128xf32>
    %231 = arith.addf %230, %117 : vector<32x128xf32>
    %232 = arith.mulf %220, %231 : vector<32x128xf32>
    %233 = arith.addf %229, %232 : vector<32x128xf32>
    %234 = math.tanh %233 : vector<32x128xf32>
    %cst_107 = arith.constant 1.000000e+00 : f32
    %235 = vector.broadcast %cst_107 : f32 to vector<32x128xf32>
    %236 = arith.subf %235, %228 : vector<32x128xf32>
    %237 = arith.mulf %236, %234 : vector<32x128xf32>
    %238 = arith.mulf %228, %211 : vector<32x128xf32>
    %239 = arith.addf %237, %238 : vector<32x128xf32>
    %240 = arith.addi %120, %c2_i32 : i32
    %241 = vector.broadcast %240 : i32 to vector<1x128xi32>
    %242 = arith.cmpi eq, %119, %241 : vector<1x128xi32>
    %243 = vector.shape_cast %242 : vector<1x128xi1> to vector<1x128xi1>
    %244 = vector.broadcast %243 : vector<1x128xi1> to vector<32x128xi1>
    %245 = arith.select %244, %239, %204 : vector<32x128xi1>, vector<32x128xf32>
    %c3_i32 = arith.constant 3 : i32
    %246 = arith.index_cast %c3_i32 : i32 to index
    %c0_108 = arith.constant 0 : index
    %c0_109 = arith.constant 0 : index
    %247 = vector.load %arg18[%246, %c0_108, %c0_109] : memref<8x96x128xf32, #tpu.memory_space<vmem>>, vector<1x96x128xf32>
    %248 = vector.shape_cast %247 : vector<1x96x128xf32> to vector<96x128xf32>
    %249 = arith.index_cast %c3_i32 : i32 to index
    %c0_110 = arith.constant 0 : index
    %c0_111 = arith.constant 0 : index
    %250 = vector.load %arg19[%249, %c0_110, %c0_111] : memref<8x32x128xf32, #tpu.memory_space<vmem>>, vector<1x32x128xf32>
    %251 = vector.shape_cast %250 : vector<1x32x128xf32> to vector<32x128xf32>
    %252 = arith.mulf %251, %239 : vector<32x128xf32>
    %cst_112 = arith.constant dense<0.000000e+00> : vector<96x128xf32>
    %253 = tpu.matmul %115, %252, %cst_112 {dimension_numbers = #tpu.dot_dimension_numbers<[1], [0], [0], [1], [0, 0, 1, 1], [], []>} : vector<96x32xf32>, vector<32x128xf32>, vector<96x128xf32> -> vector<96x128xf32>
    %254 = vector.extract_strided_slice %248 {offsets = [0, 0], sizes = [32, 128], strides = [1, 1]} : vector<96x128xf32> to vector<32x128xf32>
    %255 = vector.extract_strided_slice %253 {offsets = [0, 0], sizes = [32, 128], strides = [1, 1]} : vector<96x128xf32> to vector<32x128xf32>
    %256 = arith.addf %254, %255 : vector<32x128xf32>
    %257 = arith.negf %256 : vector<32x128xf32>
    %258 = math.exp %257 : vector<32x128xf32>
    %cst_113 = arith.constant 1.000000e+00 : f32
    %259 = vector.broadcast %cst_113 : f32 to vector<32x128xf32>
    %260 = arith.addf %259, %258 : vector<32x128xf32>
    %261 = arith.divf %259, %260 : vector<32x128xf32>
    %262 = vector.extract_strided_slice %248 {offsets = [32, 0], sizes = [32, 128], strides = [1, 1]} : vector<96x128xf32> to vector<32x128xf32>
    %263 = vector.extract_strided_slice %253 {offsets = [32, 0], sizes = [32, 128], strides = [1, 1]} : vector<96x128xf32> to vector<32x128xf32>
    %264 = arith.addf %262, %263 : vector<32x128xf32>
    %265 = arith.negf %264 : vector<32x128xf32>
    %266 = math.exp %265 : vector<32x128xf32>
    %cst_114 = arith.constant 1.000000e+00 : f32
    %267 = vector.broadcast %cst_114 : f32 to vector<32x128xf32>
    %268 = arith.addf %267, %266 : vector<32x128xf32>
    %269 = arith.divf %267, %268 : vector<32x128xf32>
    %270 = vector.extract_strided_slice %248 {offsets = [64, 0], sizes = [32, 128], strides = [1, 1]} : vector<96x128xf32> to vector<32x128xf32>
    %271 = vector.extract_strided_slice %253 {offsets = [64, 0], sizes = [32, 128], strides = [1, 1]} : vector<96x128xf32> to vector<32x128xf32>
    %272 = arith.addf %271, %117 : vector<32x128xf32>
    %273 = arith.mulf %261, %272 : vector<32x128xf32>
    %274 = arith.addf %270, %273 : vector<32x128xf32>
    %275 = math.tanh %274 : vector<32x128xf32>
    %cst_115 = arith.constant 1.000000e+00 : f32
    %276 = vector.broadcast %cst_115 : f32 to vector<32x128xf32>
    %277 = arith.subf %276, %269 : vector<32x128xf32>
    %278 = arith.mulf %277, %275 : vector<32x128xf32>
    %279 = arith.mulf %269, %252 : vector<32x128xf32>
    %280 = arith.addf %278, %279 : vector<32x128xf32>
    %281 = arith.addi %120, %c3_i32 : i32
    %282 = vector.broadcast %281 : i32 to vector<1x128xi32>
    %283 = arith.cmpi eq, %119, %282 : vector<1x128xi32>
    %284 = vector.shape_cast %283 : vector<1x128xi1> to vector<1x128xi1>
    %285 = vector.broadcast %284 : vector<1x128xi1> to vector<32x128xi1>
    %286 = arith.select %285, %280, %245 : vector<32x128xi1>, vector<32x128xf32>
    %c4_i32 = arith.constant 4 : i32
    %287 = arith.index_cast %c4_i32 : i32 to index
    %c0_116 = arith.constant 0 : index
    %c0_117 = arith.constant 0 : index
    %288 = vector.load %arg18[%287, %c0_116, %c0_117] : memref<8x96x128xf32, #tpu.memory_space<vmem>>, vector<1x96x128xf32>
    %289 = vector.shape_cast %288 : vector<1x96x128xf32> to vector<96x128xf32>
    %290 = arith.index_cast %c4_i32 : i32 to index
    %c0_118 = arith.constant 0 : index
    %c0_119 = arith.constant 0 : index
    %291 = vector.load %arg19[%290, %c0_118, %c0_119] : memref<8x32x128xf32, #tpu.memory_space<vmem>>, vector<1x32x128xf32>
    %292 = vector.shape_cast %291 : vector<1x32x128xf32> to vector<32x128xf32>
    %293 = arith.mulf %292, %280 : vector<32x128xf32>
    %cst_120 = arith.constant dense<0.000000e+00> : vector<96x128xf32>
    %294 = tpu.matmul %115, %293, %cst_120 {dimension_numbers = #tpu.dot_dimension_numbers<[1], [0], [0], [1], [0, 0, 1, 1], [], []>} : vector<96x32xf32>, vector<32x128xf32>, vector<96x128xf32> -> vector<96x128xf32>
    %295 = vector.extract_strided_slice %289 {offsets = [0, 0], sizes = [32, 128], strides = [1, 1]} : vector<96x128xf32> to vector<32x128xf32>
    %296 = vector.extract_strided_slice %294 {offsets = [0, 0], sizes = [32, 128], strides = [1, 1]} : vector<96x128xf32> to vector<32x128xf32>
    %297 = arith.addf %295, %296 : vector<32x128xf32>
    %298 = arith.negf %297 : vector<32x128xf32>
    %299 = math.exp %298 : vector<32x128xf32>
    %cst_121 = arith.constant 1.000000e+00 : f32
    %300 = vector.broadcast %cst_121 : f32 to vector<32x128xf32>
    %301 = arith.addf %300, %299 : vector<32x128xf32>
    %302 = arith.divf %300, %301 : vector<32x128xf32>
    %303 = vector.extract_strided_slice %289 {offsets = [32, 0], sizes = [32, 128], strides = [1, 1]} : vector<96x128xf32> to vector<32x128xf32>
    %304 = vector.extract_strided_slice %294 {offsets = [32, 0], sizes = [32, 128], strides = [1, 1]} : vector<96x128xf32> to vector<32x128xf32>
    %305 = arith.addf %303, %304 : vector<32x128xf32>
    %306 = arith.negf %305 : vector<32x128xf32>
    %307 = math.exp %306 : vector<32x128xf32>
    %cst_122 = arith.constant 1.000000e+00 : f32
    %308 = vector.broadcast %cst_122 : f32 to vector<32x128xf32>
    %309 = arith.addf %308, %307 : vector<32x128xf32>
    %310 = arith.divf %308, %309 : vector<32x128xf32>
    %311 = vector.extract_strided_slice %289 {offsets = [64, 0], sizes = [32, 128], strides = [1, 1]} : vector<96x128xf32> to vector<32x128xf32>
    %312 = vector.extract_strided_slice %294 {offsets = [64, 0], sizes = [32, 128], strides = [1, 1]} : vector<96x128xf32> to vector<32x128xf32>
    %313 = arith.addf %312, %117 : vector<32x128xf32>
    %314 = arith.mulf %302, %313 : vector<32x128xf32>
    %315 = arith.addf %311, %314 : vector<32x128xf32>
    %316 = math.tanh %315 : vector<32x128xf32>
    %cst_123 = arith.constant 1.000000e+00 : f32
    %317 = vector.broadcast %cst_123 : f32 to vector<32x128xf32>
    %318 = arith.subf %317, %310 : vector<32x128xf32>
    %319 = arith.mulf %318, %316 : vector<32x128xf32>
    %320 = arith.mulf %310, %293 : vector<32x128xf32>
    %321 = arith.addf %319, %320 : vector<32x128xf32>
    %322 = arith.addi %120, %c4_i32 : i32
    %323 = vector.broadcast %322 : i32 to vector<1x128xi32>
    %324 = arith.cmpi eq, %119, %323 : vector<1x128xi32>
    %325 = vector.shape_cast %324 : vector<1x128xi1> to vector<1x128xi1>
    %326 = vector.broadcast %325 : vector<1x128xi1> to vector<32x128xi1>
    %327 = arith.select %326, %321, %286 : vector<32x128xi1>, vector<32x128xf32>
    %c5_i32 = arith.constant 5 : i32
    %328 = arith.index_cast %c5_i32 : i32 to index
    %c0_124 = arith.constant 0 : index
    %c0_125 = arith.constant 0 : index
    %329 = vector.load %arg18[%328, %c0_124, %c0_125] : memref<8x96x128xf32, #tpu.memory_space<vmem>>, vector<1x96x128xf32>
    %330 = vector.shape_cast %329 : vector<1x96x128xf32> to vector<96x128xf32>
    %331 = arith.index_cast %c5_i32 : i32 to index
    %c0_126 = arith.constant 0 : index
    %c0_127 = arith.constant 0 : index
    %332 = vector.load %arg19[%331, %c0_126, %c0_127] : memref<8x32x128xf32, #tpu.memory_space<vmem>>, vector<1x32x128xf32>
    %333 = vector.shape_cast %332 : vector<1x32x128xf32> to vector<32x128xf32>
    %334 = arith.mulf %333, %321 : vector<32x128xf32>
    %cst_128 = arith.constant dense<0.000000e+00> : vector<96x128xf32>
    %335 = tpu.matmul %115, %334, %cst_128 {dimension_numbers = #tpu.dot_dimension_numbers<[1], [0], [0], [1], [0, 0, 1, 1], [], []>} : vector<96x32xf32>, vector<32x128xf32>, vector<96x128xf32> -> vector<96x128xf32>
    %336 = vector.extract_strided_slice %330 {offsets = [0, 0], sizes = [32, 128], strides = [1, 1]} : vector<96x128xf32> to vector<32x128xf32>
    %337 = vector.extract_strided_slice %335 {offsets = [0, 0], sizes = [32, 128], strides = [1, 1]} : vector<96x128xf32> to vector<32x128xf32>
    %338 = arith.addf %336, %337 : vector<32x128xf32>
    %339 = arith.negf %338 : vector<32x128xf32>
    %340 = math.exp %339 : vector<32x128xf32>
    %cst_129 = arith.constant 1.000000e+00 : f32
    %341 = vector.broadcast %cst_129 : f32 to vector<32x128xf32>
    %342 = arith.addf %341, %340 : vector<32x128xf32>
    %343 = arith.divf %341, %342 : vector<32x128xf32>
    %344 = vector.extract_strided_slice %330 {offsets = [32, 0], sizes = [32, 128], strides = [1, 1]} : vector<96x128xf32> to vector<32x128xf32>
    %345 = vector.extract_strided_slice %335 {offsets = [32, 0], sizes = [32, 128], strides = [1, 1]} : vector<96x128xf32> to vector<32x128xf32>
    %346 = arith.addf %344, %345 : vector<32x128xf32>
    %347 = arith.negf %346 : vector<32x128xf32>
    %348 = math.exp %347 : vector<32x128xf32>
    %cst_130 = arith.constant 1.000000e+00 : f32
    %349 = vector.broadcast %cst_130 : f32 to vector<32x128xf32>
    %350 = arith.addf %349, %348 : vector<32x128xf32>
    %351 = arith.divf %349, %350 : vector<32x128xf32>
    %352 = vector.extract_strided_slice %330 {offsets = [64, 0], sizes = [32, 128], strides = [1, 1]} : vector<96x128xf32> to vector<32x128xf32>
    %353 = vector.extract_strided_slice %335 {offsets = [64, 0], sizes = [32, 128], strides = [1, 1]} : vector<96x128xf32> to vector<32x128xf32>
    %354 = arith.addf %353, %117 : vector<32x128xf32>
    %355 = arith.mulf %343, %354 : vector<32x128xf32>
    %356 = arith.addf %352, %355 : vector<32x128xf32>
    %357 = math.tanh %356 : vector<32x128xf32>
    %cst_131 = arith.constant 1.000000e+00 : f32
    %358 = vector.broadcast %cst_131 : f32 to vector<32x128xf32>
    %359 = arith.subf %358, %351 : vector<32x128xf32>
    %360 = arith.mulf %359, %357 : vector<32x128xf32>
    %361 = arith.mulf %351, %334 : vector<32x128xf32>
    %362 = arith.addf %360, %361 : vector<32x128xf32>
    %363 = arith.addi %120, %c5_i32 : i32
    %364 = vector.broadcast %363 : i32 to vector<1x128xi32>
    %365 = arith.cmpi eq, %119, %364 : vector<1x128xi32>
    %366 = vector.shape_cast %365 : vector<1x128xi1> to vector<1x128xi1>
    %367 = vector.broadcast %366 : vector<1x128xi1> to vector<32x128xi1>
    %368 = arith.select %367, %362, %327 : vector<32x128xi1>, vector<32x128xf32>
    %c6_i32 = arith.constant 6 : i32
    %369 = arith.index_cast %c6_i32 : i32 to index
    %c0_132 = arith.constant 0 : index
    %c0_133 = arith.constant 0 : index
    %370 = vector.load %arg18[%369, %c0_132, %c0_133] : memref<8x96x128xf32, #tpu.memory_space<vmem>>, vector<1x96x128xf32>
    %371 = vector.shape_cast %370 : vector<1x96x128xf32> to vector<96x128xf32>
    %372 = arith.index_cast %c6_i32 : i32 to index
    %c0_134 = arith.constant 0 : index
    %c0_135 = arith.constant 0 : index
    %373 = vector.load %arg19[%372, %c0_134, %c0_135] : memref<8x32x128xf32, #tpu.memory_space<vmem>>, vector<1x32x128xf32>
    %374 = vector.shape_cast %373 : vector<1x32x128xf32> to vector<32x128xf32>
    %375 = arith.mulf %374, %362 : vector<32x128xf32>
    %cst_136 = arith.constant dense<0.000000e+00> : vector<96x128xf32>
    %376 = tpu.matmul %115, %375, %cst_136 {dimension_numbers = #tpu.dot_dimension_numbers<[1], [0], [0], [1], [0, 0, 1, 1], [], []>} : vector<96x32xf32>, vector<32x128xf32>, vector<96x128xf32> -> vector<96x128xf32>
    %377 = vector.extract_strided_slice %371 {offsets = [0, 0], sizes = [32, 128], strides = [1, 1]} : vector<96x128xf32> to vector<32x128xf32>
    %378 = vector.extract_strided_slice %376 {offsets = [0, 0], sizes = [32, 128], strides = [1, 1]} : vector<96x128xf32> to vector<32x128xf32>
    %379 = arith.addf %377, %378 : vector<32x128xf32>
    %380 = arith.negf %379 : vector<32x128xf32>
    %381 = math.exp %380 : vector<32x128xf32>
    %cst_137 = arith.constant 1.000000e+00 : f32
    %382 = vector.broadcast %cst_137 : f32 to vector<32x128xf32>
    %383 = arith.addf %382, %381 : vector<32x128xf32>
    %384 = arith.divf %382, %383 : vector<32x128xf32>
    %385 = vector.extract_strided_slice %371 {offsets = [32, 0], sizes = [32, 128], strides = [1, 1]} : vector<96x128xf32> to vector<32x128xf32>
    %386 = vector.extract_strided_slice %376 {offsets = [32, 0], sizes = [32, 128], strides = [1, 1]} : vector<96x128xf32> to vector<32x128xf32>
    %387 = arith.addf %385, %386 : vector<32x128xf32>
    %388 = arith.negf %387 : vector<32x128xf32>
    %389 = math.exp %388 : vector<32x128xf32>
    %cst_138 = arith.constant 1.000000e+00 : f32
    %390 = vector.broadcast %cst_138 : f32 to vector<32x128xf32>
    %391 = arith.addf %390, %389 : vector<32x128xf32>
    %392 = arith.divf %390, %391 : vector<32x128xf32>
    %393 = vector.extract_strided_slice %371 {offsets = [64, 0], sizes = [32, 128], strides = [1, 1]} : vector<96x128xf32> to vector<32x128xf32>
    %394 = vector.extract_strided_slice %376 {offsets = [64, 0], sizes = [32, 128], strides = [1, 1]} : vector<96x128xf32> to vector<32x128xf32>
    %395 = arith.addf %394, %117 : vector<32x128xf32>
    %396 = arith.mulf %384, %395 : vector<32x128xf32>
    %397 = arith.addf %393, %396 : vector<32x128xf32>
    %398 = math.tanh %397 : vector<32x128xf32>
    %cst_139 = arith.constant 1.000000e+00 : f32
    %399 = vector.broadcast %cst_139 : f32 to vector<32x128xf32>
    %400 = arith.subf %399, %392 : vector<32x128xf32>
    %401 = arith.mulf %400, %398 : vector<32x128xf32>
    %402 = arith.mulf %392, %375 : vector<32x128xf32>
    %403 = arith.addf %401, %402 : vector<32x128xf32>
    %404 = arith.addi %120, %c6_i32 : i32
    %405 = vector.broadcast %404 : i32 to vector<1x128xi32>
    %406 = arith.cmpi eq, %119, %405 : vector<1x128xi32>
    %407 = vector.shape_cast %406 : vector<1x128xi1> to vector<1x128xi1>
    %408 = vector.broadcast %407 : vector<1x128xi1> to vector<32x128xi1>
    %409 = arith.select %408, %403, %368 : vector<32x128xi1>, vector<32x128xf32>
    %c7_i32 = arith.constant 7 : i32
    %410 = arith.index_cast %c7_i32 : i32 to index
    %c0_140 = arith.constant 0 : index
    %c0_141 = arith.constant 0 : index
    %411 = vector.load %arg18[%410, %c0_140, %c0_141] : memref<8x96x128xf32, #tpu.memory_space<vmem>>, vector<1x96x128xf32>
    %412 = vector.shape_cast %411 : vector<1x96x128xf32> to vector<96x128xf32>
    %413 = arith.index_cast %c7_i32 : i32 to index
    %c0_142 = arith.constant 0 : index
    %c0_143 = arith.constant 0 : index
    %414 = vector.load %arg19[%413, %c0_142, %c0_143] : memref<8x32x128xf32, #tpu.memory_space<vmem>>, vector<1x32x128xf32>
    %415 = vector.shape_cast %414 : vector<1x32x128xf32> to vector<32x128xf32>
    %416 = arith.mulf %415, %403 : vector<32x128xf32>
    %cst_144 = arith.constant dense<0.000000e+00> : vector<96x128xf32>
    %417 = tpu.matmul %115, %416, %cst_144 {dimension_numbers = #tpu.dot_dimension_numbers<[1], [0], [0], [1], [0, 0, 1, 1], [], []>} : vector<96x32xf32>, vector<32x128xf32>, vector<96x128xf32> -> vector<96x128xf32>
    %418 = vector.extract_strided_slice %412 {offsets = [0, 0], sizes = [32, 128], strides = [1, 1]} : vector<96x128xf32> to vector<32x128xf32>
    %419 = vector.extract_strided_slice %417 {offsets = [0, 0], sizes = [32, 128], strides = [1, 1]} : vector<96x128xf32> to vector<32x128xf32>
    %420 = arith.addf %418, %419 : vector<32x128xf32>
    %421 = arith.negf %420 : vector<32x128xf32>
    %422 = math.exp %421 : vector<32x128xf32>
    %cst_145 = arith.constant 1.000000e+00 : f32
    %423 = vector.broadcast %cst_145 : f32 to vector<32x128xf32>
    %424 = arith.addf %423, %422 : vector<32x128xf32>
    %425 = arith.divf %423, %424 : vector<32x128xf32>
    %426 = vector.extract_strided_slice %412 {offsets = [32, 0], sizes = [32, 128], strides = [1, 1]} : vector<96x128xf32> to vector<32x128xf32>
    %427 = vector.extract_strided_slice %417 {offsets = [32, 0], sizes = [32, 128], strides = [1, 1]} : vector<96x128xf32> to vector<32x128xf32>
    %428 = arith.addf %426, %427 : vector<32x128xf32>
    %429 = arith.negf %428 : vector<32x128xf32>
    %430 = math.exp %429 : vector<32x128xf32>
    %cst_146 = arith.constant 1.000000e+00 : f32
    %431 = vector.broadcast %cst_146 : f32 to vector<32x128xf32>
    %432 = arith.addf %431, %430 : vector<32x128xf32>
    %433 = arith.divf %431, %432 : vector<32x128xf32>
    %434 = vector.extract_strided_slice %412 {offsets = [64, 0], sizes = [32, 128], strides = [1, 1]} : vector<96x128xf32> to vector<32x128xf32>
    %435 = vector.extract_strided_slice %417 {offsets = [64, 0], sizes = [32, 128], strides = [1, 1]} : vector<96x128xf32> to vector<32x128xf32>
    %436 = arith.addf %435, %117 : vector<32x128xf32>
    %437 = arith.mulf %425, %436 : vector<32x128xf32>
    %438 = arith.addf %434, %437 : vector<32x128xf32>
    %439 = math.tanh %438 : vector<32x128xf32>
    %cst_147 = arith.constant 1.000000e+00 : f32
    %440 = vector.broadcast %cst_147 : f32 to vector<32x128xf32>
    %441 = arith.subf %440, %433 : vector<32x128xf32>
    %442 = arith.mulf %441, %439 : vector<32x128xf32>
    %443 = arith.mulf %433, %416 : vector<32x128xf32>
    %444 = arith.addf %442, %443 : vector<32x128xf32>
    %445 = arith.addi %120, %c7_i32 : i32
    %446 = vector.broadcast %445 : i32 to vector<1x128xi32>
    %447 = arith.cmpi eq, %119, %446 : vector<1x128xi32>
    %448 = vector.shape_cast %447 : vector<1x128xi1> to vector<1x128xi1>
    %449 = vector.broadcast %448 : vector<1x128xi1> to vector<32x128xi1>
    %450 = arith.select %449, %444, %409 : vector<32x128xi1>, vector<32x128xf32>
    %c8_i32_148 = arith.constant 8 : i32
    %c0_149 = arith.constant 0 : index
    %c0_150 = arith.constant 0 : index
    %451 = vector.load %arg16[%c0_149, %c0_150] : memref<32x128xf32, #tpu.memory_space<vmem>>, vector<32x128xf32>
    tpu.vector_store %arg16[%c0_149, %c0_150], %444 {strides = array<i32>} : memref<32x128xf32, #tpu.memory_space<vmem>>, vector<32x128xf32>,
    %c0_151 = arith.constant 0 : index
    %c0_152 = arith.constant 0 : index
    %452 = vector.load %arg17[%c0_151, %c0_152] : memref<32x128xf32, #tpu.memory_space<vmem>>, vector<32x128xf32>
    tpu.vector_store %arg17[%c0_151, %c0_152], %450 {strides = array<i32>} : memref<32x128xf32, #tpu.memory_space<vmem>>, vector<32x128xf32>,
    %c0_i32_153 = arith.constant 0 : i32
    %453 = arith.cmpi eq, %arg1, %c0_i32_153 : i32
    %454 = arith.extui %453 : i1 to i32
    %c0_i32_154 = arith.constant 0 : i32
    %455 = arith.cmpi ne, %454, %c0_i32_154 : i32
    scf.if %455 {
      %c0_155 = arith.constant 0 : index
      %c0_156 = arith.constant 0 : index
      %456 = vector.load %arg17[%c0_155, %c0_156] : memref<32x128xf32, #tpu.memory_space<vmem>>, vector<32x128xf32>
      %c96 = arith.constant 96 : index
      %c0_157 = arith.constant 0 : index
      %457 = vector.load %arg11[%c96, %c0_157] : memref<224x32xf32, #tpu.memory_space<vmem>>, vector<128x32xf32>
      %c0_158 = arith.constant 0 : index
      %c0_159 = arith.constant 0 : index
      %c0_160 = arith.constant 0 : index
      %458 = vector.load %arg7[%c0_158, %c0_159, %c0_160] : memref<1x2x128xf32, #tpu.memory_space<vmem>>, vector<1x1x128xf32>
      %459 = vector.shape_cast %458 : vector<1x1x128xf32> to vector<1x128xf32>
      %c0_161 = arith.constant 0 : index
      %c1_162 = arith.constant 1 : index
      %c0_163 = arith.constant 0 : index
      %460 = vector.load %arg7[%c0_161, %c1_162, %c0_163] : memref<1x2x128xf32, #tpu.memory_space<vmem>>, vector<1x1x128xf32>
      %461 = vector.shape_cast %460 : vector<1x1x128xf32> to vector<1x128xf32>
      %c0_164 = arith.constant 0 : index
      %c0_165 = arith.constant 0 : index
      %462 = vector.load %arg12[%c0_164, %c0_165] : memref<128x5xf32, #tpu.memory_space<vmem>>, vector<128x1xf32>
      %c0_166 = arith.constant 0 : index
      %c1_167 = arith.constant 1 : index
      %463 = vector.load %arg12[%c0_166, %c1_167] : memref<128x5xf32, #tpu.memory_space<vmem>>, vector<128x1xf32>
      %c0_168 = arith.constant 0 : index
      %c2_169 = arith.constant 2 : index
      %464 = vector.load %arg12[%c0_168, %c2_169] : memref<128x5xf32, #tpu.memory_space<vmem>>, vector<128x1xf32>
      %c0_170 = arith.constant 0 : index
      %c3_171 = arith.constant 3 : index
      %465 = vector.load %arg12[%c0_170, %c3_171] : memref<128x5xf32, #tpu.memory_space<vmem>>, vector<128x1xf32>
      %c0_172 = arith.constant 0 : index
      %c4_173 = arith.constant 4 : index
      %466 = vector.load %arg12[%c0_172, %c4_173] : memref<128x5xf32, #tpu.memory_space<vmem>>, vector<128x1xf32>
      %cst_174 = arith.constant dense<0.000000e+00> : vector<128x128xf32>
      %467 = tpu.matmul %457, %456, %cst_174 {dimension_numbers = #tpu.dot_dimension_numbers<[1], [0], [0], [1], [0, 0, 1, 1], [], []>} : vector<128x32xf32>, vector<32x128xf32>, vector<128x128xf32> -> vector<128x128xf32>
      %468 = vector.broadcast %462 : vector<128x1xf32> to vector<128x128xf32>
      %469 = vector.broadcast %459 : vector<1x128xf32> to vector<128x128xf32>
      %470 = arith.mulf %468, %469 : vector<128x128xf32>
      %471 = arith.addf %467, %470 : vector<128x128xf32>
      %472 = vector.broadcast %463 : vector<128x1xf32> to vector<128x128xf32>
      %473 = vector.broadcast %461 : vector<1x128xf32> to vector<128x128xf32>
      %474 = arith.mulf %472, %473 : vector<128x128xf32>
      %475 = arith.addf %471, %474 : vector<128x128xf32>
      %476 = vector.broadcast %464 : vector<128x1xf32> to vector<128x128xf32>
      %477 = arith.addf %475, %476 : vector<128x128xf32>
      %478 = vector.broadcast %465 : vector<128x1xf32> to vector<128x128xf32>
      %479 = arith.mulf %477, %478 : vector<128x128xf32>
      %480 = vector.broadcast %466 : vector<128x1xf32> to vector<128x128xf32>
      %481 = arith.addf %479, %480 : vector<128x128xf32>
      %cst_175 = arith.constant 0.000000e+00 : f32
      %482 = vector.broadcast %cst_175 : f32 to vector<128x128xf32>
      %483 = arith.maximumf %481, %482 : vector<128x128xf32>
      %c0_176 = arith.constant 0 : index
      %c0_177 = arith.constant 0 : index
      %484 = vector.load %arg13[%c0_176, %c0_177] : memref<4x128xf32, #tpu.memory_space<vmem>>, vector<4x128xf32>
      %cst_178 = arith.constant dense<0.000000e+00> : vector<4x128xf32>
      %485 = tpu.matmul %484, %483, %cst_178 {dimension_numbers = #tpu.dot_dimension_numbers<[1], [0], [0], [1], [0, 0, 1, 1], [], []>} : vector<4x128xf32>, vector<128x128xf32>, vector<4x128xf32> -> vector<4x128xf32>
      %c0_179 = arith.constant 0 : index
      %c0_180 = arith.constant 0 : index
      %486 = vector.load %arg14[%c0_179, %c0_180] : memref<4x1xf32, #tpu.memory_space<vmem>>, vector<4x1xf32>
      %487 = vector.broadcast %486 : vector<4x1xf32> to vector<4x128xf32>
      %488 = arith.addf %485, %487 : vector<4x128xf32>
      %489 = arith.negf %488 : vector<4x128xf32>
      %490 = math.exp %489 : vector<4x128xf32>
      %cst_181 = arith.constant 1.000000e+00 : f32
      %491 = vector.broadcast %cst_181 : f32 to vector<4x128xf32>
      %492 = arith.addf %491, %490 : vector<4x128xf32>
      %493 = arith.divf %491, %492 : vector<4x128xf32>
      %c0_182 = arith.constant 0 : index
      %c0_183 = arith.constant 0 : index
      %c0_184 = arith.constant 0 : index
      %494 = vector.load %arg15[%c0_182, %c0_183, %c0_184] : memref<1x4x128xf32, #tpu.memory_space<vmem>>, vector<1x4x128xf32>
      %495 = vector.shape_cast %494 : vector<1x4x128xf32> to vector<4x128xf32>
      %496 = vector.shape_cast %493 : vector<4x128xf32> to vector<1x4x128xf32>
      tpu.vector_store %arg15[%c0_182, %c0_183, %c0_184], %496 {strides = array<i32>} : memref<1x4x128xf32, #tpu.memory_space<vmem>>, vector<1x4x128xf32>,
    } else {
    }
    return
  }
  func.func @transform_0(%arg0: i32, %arg1: i32) -> (i32, i32, i32) {
    %c0_i32 = arith.constant 0 : i32
    %c0_i32_0 = arith.constant 0 : i32
    return %arg0, %c0_i32, %arg1 : i32, i32, i32
  }
  func.func @transform_1(%arg0: i32, %arg1: i32) -> (i32, i32, i32) {
    %c0_i32 = arith.constant 0 : i32
    %c0_i32_0 = arith.constant 0 : i32
    return %arg0, %c0_i32, %arg1 : i32, i32, i32
  }
  func.func @transform_2(%arg0: i32, %arg1: i32) -> (i32, i32, i32) {
    %c0_i32 = arith.constant 0 : i32
    %c0_i32_0 = arith.constant 0 : i32
    return %arg0, %c0_i32, %arg1 : i32, i32, i32
  }
  func.func @transform_3(%arg0: i32, %arg1: i32) -> (i32, i32, i32) {
    %c0_i32 = arith.constant 0 : i32
    %c0_i32_0 = arith.constant 0 : i32
    %c0_i32_1 = arith.constant 0 : i32
    return %arg0, %c0_i32, %c0_i32_0 : i32, i32, i32
  }
  func.func @transform_4(%arg0: i32, %arg1: i32) -> (i32, i32, i32) {
    %c0_i32 = arith.constant 0 : i32
    %c0_i32_0 = arith.constant 0 : i32
    %c0_i32_1 = arith.constant 0 : i32
    return %arg0, %c0_i32, %c0_i32_0 : i32, i32, i32
  }
  func.func @transform_5(%arg0: i32, %arg1: i32) -> (i32, i32, i32) {
    %c0_i32 = arith.constant 0 : i32
    %c0_i32_0 = arith.constant 0 : i32
    %c0_i32_1 = arith.constant 0 : i32
    return %arg0, %c0_i32, %c0_i32_0 : i32, i32, i32
  }
  func.func @transform_6(%arg0: i32, %arg1: i32) -> (i32, i32) {
    %c0_i32 = arith.constant 0 : i32
    %c0_i32_0 = arith.constant 0 : i32
    %c0_i32_1 = arith.constant 0 : i32
    return %c0_i32, %c0_i32_0 : i32, i32
  }
  func.func @transform_7(%arg0: i32, %arg1: i32) -> (i32, i32) {
    %c0_i32 = arith.constant 0 : i32
    %c0_i32_0 = arith.constant 0 : i32
    %c0_i32_1 = arith.constant 0 : i32
    return %c0_i32, %c0_i32_0 : i32, i32
  }
  func.func @transform_8(%arg0: i32, %arg1: i32) -> (i32, i32) {
    %c0_i32 = arith.constant 0 : i32
    %c0_i32_0 = arith.constant 0 : i32
    %c0_i32_1 = arith.constant 0 : i32
    return %c0_i32, %c0_i32_0 : i32, i32
  }
  func.func @transform_9(%arg0: i32, %arg1: i32) -> (i32, i32) {
    %c0_i32 = arith.constant 0 : i32
    %c0_i32_0 = arith.constant 0 : i32
    %c0_i32_1 = arith.constant 0 : i32
    return %c0_i32, %c0_i32_0 : i32, i32
  }
  func.func @transform_10(%arg0: i32, %arg1: i32) -> (i32, i32) {
    %c0_i32 = arith.constant 0 : i32
    %c0_i32_0 = arith.constant 0 : i32
    %c0_i32_1 = arith.constant 0 : i32
    return %c0_i32, %c0_i32_0 : i32, i32
  }
  func.func @transform_11(%arg0: i32, %arg1: i32) -> (i32, i32) {
    %c0_i32 = arith.constant 0 : i32
    %c0_i32_0 = arith.constant 0 : i32
    %c0_i32_1 = arith.constant 0 : i32
    return %c0_i32, %c0_i32_0 : i32, i32
  }
  func.func @transform_12(%arg0: i32, %arg1: i32) -> (i32, i32) {
    %c0_i32 = arith.constant 0 : i32
    %c0_i32_0 = arith.constant 0 : i32
    %c0_i32_1 = arith.constant 0 : i32
    return %c0_i32, %c0_i32_0 : i32, i32
  }
  func.func @transform_13(%arg0: i32, %arg1: i32) -> (i32, i32, i32) {
    %c0_i32 = arith.constant 0 : i32
    %c0_i32_0 = arith.constant 0 : i32
    %c0_i32_1 = arith.constant 0 : i32
    return %arg0, %c0_i32, %c0_i32_0 : i32, i32, i32
  }
}

</mosaic_0001>

<llo_original>
// kernel: tpu_custom_call.1
$region0: #{tpu_custom_call.1}
  #allocation0 [shape = 'u32[]', space=smem, size = 0x4, offset = 0x4, fixed_abs, tag = 'smem constant byte address 0x4 - core index']
  #allocation1 [shape = 'u32[144,128]{1,0:T(1,128)}', space=vmem, size = 0x12000, scoped, tag = 'internal scratch']
  #allocation2 [shape = 'f32[32,128]{1,0:T(8,128)}', space=vmem, size = 0x4000, scoped, tag = 'scratch operand']
  #allocation3 [shape = 'f32[32,128]{1,0:T(8,128)}', space=vmem, size = 0x4000, scoped, tag = 'scratch operand']
  #allocation4 [shape = 'f32[8,96,128]{2,1,0:T(8,128)}', space=vmem, size = 0x60000, scoped, tag = 'scratch operand']
  #allocation5 [shape = 'f32[8,32,128]{2,1,0:T(8,128)}', space=vmem, size = 0x20000, scoped, tag = 'scratch operand']
  %s0 = inlined_call_operand.vmem [shape: f32[1,4,1024], index: 0, kind: input, shape index: {}]
  %s1 = inlined_call_operand.vmem [shape: f32[1,4,1024], index: 1, kind: input, shape index: {}]
  %s2 = inlined_call_operand.vmem [shape: f32[1,4,1024], index: 2, kind: input, shape index: {}]
  %s3 = inlined_call_operand.vmem [shape: f32[1,32,128], index: 3, kind: input, shape index: {}]
  %s4 = inlined_call_operand.vmem [shape: s32[1,1,128], index: 4, kind: input, shape index: {}]
  %s5 = inlined_call_operand.vmem [shape: f32[1,2,128], index: 5, kind: input, shape index: {}]
  %s6 = inlined_call_operand.vmem [shape: f32[4,3], index: 6, kind: input, shape index: {}]
  %s7 = inlined_call_operand.vmem [shape: f32[224,4], index: 7, kind: input, shape index: {}]
  %s8 = inlined_call_operand.vmem [shape: f32[160,1], index: 8, kind: input, shape index: {}]
  %s9 = inlined_call_operand.vmem [shape: f32[224,32], index: 9, kind: input, shape index: {}]
  %s10 = inlined_call_operand.vmem [shape: f32[128,5], index: 10, kind: input, shape index: {}]
  %s11 = inlined_call_operand.vmem [shape: f32[4,128], index: 11, kind: input, shape index: {}]
  %s12 = inlined_call_operand.vmem [shape: f32[4,1], index: 12, kind: input, shape index: {}]
  %s13 = inlined_call_operand.hbm [shape: f32[1,4,128], index: 13, kind: output, shape index: {}]
  %s14 = sld [smem:[#allocation0]]
  $region70: #{tpu_custom_call.1} parent=0
    _
  %s16 = ssub.s32 1, %s14
  %s17 = scalar_select 0, %s16, %s14
  $region1: #{tpu_custom_call.1} parent=0
    #allocation6 [shape = 'u8[2048]{0}', space=vmem, size = 0x800, scoped, tag = 'output window, operand 0, single buffered']
    #allocation7 [shape = 's32[1]{0}', space=sflag, size = 0x4, scoped, tag = 'scoped memory for tpu_custom_call.1']
    %18 = vsyncpa [#allocation7], 0
    // Predicated region
    $region2: #{tpu_custom_call.1} parent=1 // pred_check
      _
    $region3: #{tpu_custom_call.1} parent=1 // pred_check_branch
      %20 = sbr.rel (0) target = $region5
    $region4: #{tpu_custom_call.1} parent=1 // pred_region
      _
    $region5: #{tpu_custom_call.1} parent=1 // pred_fallthru
      _
    // Predicated region
    $region6: #{tpu_custom_call.1} parent=1 // pred_check
      _
    $region7: #{tpu_custom_call.1} parent=1 // pred_check_branch
      %22 = sbr.rel (0) target = $region9
    $region8: #{tpu_custom_call.1} parent=1 // pred_region
      _
    $region9: #{tpu_custom_call.1} parent=1 // pred_fallthru
      _
    // Predicated region
    $region10: #{tpu_custom_call.1} parent=1 // pred_check
      _
    $region11: #{tpu_custom_call.1} parent=1 // pred_check_branch
      %24 = sbr.rel (0) target = $region13
    $region12: #{tpu_custom_call.1} parent=1 // pred_region
      _
    $region13: #{tpu_custom_call.1} parent=1 // pred_fallthru
      _
    // Predicated region
    $region14: #{tpu_custom_call.1} parent=1 // pred_check
      _
    $region15: #{tpu_custom_call.1} parent=1 // pred_check_branch
      %26 = sbr.rel (0) target = $region17
    $region16: #{tpu_custom_call.1} parent=1 // pred_region
      _
    $region17: #{tpu_custom_call.1} parent=1 // pred_fallthru
      _
    // Predicated region
    $region18: #{tpu_custom_call.1} parent=1 // pred_check
      _
    $region19: #{tpu_custom_call.1} parent=1 // pred_check_branch
      %28 = sbr.rel (0) target = $region21
    $region20: #{tpu_custom_call.1} parent=1 // pred_region
      _
    $region21: #{tpu_custom_call.1} parent=1 // pred_fallthru
      _
    // Predicated region
    $region22: #{tpu_custom_call.1} parent=1 // pred_check
      _
    $region23: #{tpu_custom_call.1} parent=1 // pred_check_branch
      %30 = sbr.rel (0) target = $region25
    $region24: #{tpu_custom_call.1} parent=1 // pred_region
      _
    $region25: #{tpu_custom_call.1} parent=1 // pred_fallthru
      _
    // Predicated region
    $region26: #{tpu_custom_call.1} parent=1 // pred_check
      _
    $region27: #{tpu_custom_call.1} parent=1 // pred_check_branch
      %32 = sbr.rel (0) target = $region29
    $region28: #{tpu_custom_call.1} parent=1 // pred_region
      _
    $region29: #{tpu_custom_call.1} parent=1 // pred_fallthru
      _
    // Predicated region
    $region30: #{tpu_custom_call.1} parent=1 // pred_check
      _
    $region31: #{tpu_custom_call.1} parent=1 // pred_check_branch
      %34 = sbr.rel (0) target = $region33
    $region32: #{tpu_custom_call.1} parent=1 // pred_region
      _
    $region33: #{tpu_custom_call.1} parent=1 // pred_fallthru
      _
    // Predicated region
    $region34: #{tpu_custom_call.1} parent=1 // pred_check
      _
    $region35: #{tpu_custom_call.1} parent=1 // pred_check_branch
      %36 = sbr.rel (0) target = $region37
    $region36: #{tpu_custom_call.1} parent=1 // pred_region
      _
    $region37: #{tpu_custom_call.1} parent=1 // pred_fallthru
      _
    // Predicated region
    $region38: #{tpu_custom_call.1} parent=1 // pred_check
      _
    $region39: #{tpu_custom_call.1} parent=1 // pred_check_branch
      %38 = sbr.rel (0) target = $region41
    $region40: #{tpu_custom_call.1} parent=1 // pred_region
      _
    $region41: #{tpu_custom_call.1} parent=1 // pred_fallthru
      _
    // Predicated region
    $region42: #{tpu_custom_call.1} parent=1 // pred_check
      _
    $region43: #{tpu_custom_call.1} parent=1 // pred_check_branch
      %40 = sbr.rel (0) target = $region45
    $region44: #{tpu_custom_call.1} parent=1 // pred_region
      _
    $region45: #{tpu_custom_call.1} parent=1 // pred_fallthru
      _
    // Predicated region
    $region46: #{tpu_custom_call.1} parent=1 // pred_check
      _
    $region47: #{tpu_custom_call.1} parent=1 // pred_check_branch
      %42 = sbr.rel (0) target = $region49
    $region48: #{tpu_custom_call.1} parent=1 // pred_region
      _
    $region49: #{tpu_custom_call.1} parent=1 // pred_fallthru
      _
    // Predicated region
    $region50: #{tpu_custom_call.1} parent=1 // pred_check
      _
    $region51: #{tpu_custom_call.1} parent=1 // pred_check_branch
      %44 = sbr.rel (0) target = $region53
    $region52: #{tpu_custom_call.1} parent=1 // pred_region
      _
    $region53: #{tpu_custom_call.1} parent=1 // pred_fallthru
      _
    %p45 = scmp.eq.s32.totalorder 0, 0
    // Predicated region
    $region54: #{tpu_custom_call.1} parent=1 // pred_check
      %p46 = pneg %p45
    $region55: #{tpu_custom_call.1} parent=1 // pred_check_branch
      %48 = sbr.rel (%p46) target = $region57
    $region56: #{tpu_custom_call.1} parent=1 // pred_region
      %v49 = vld [vmem:[%s3] sm:$0xff]
      %v50 = vld [vmem:[%s3 + $0x8] sm:$0xff]
      %v51 = vld [vmem:[%s3 + $0x10] sm:$0xff]
      %v52 = vld [vmem:[%s3 + $0x18] sm:$0xff]
      %53 = vst [vmem:[#allocation2] sm:$0xff] %v49
      %54 = vst [vmem:[#allocation2 + $0x8] sm:$0xff] %v50
      %55 = vst [vmem:[#allocation2 + $0x10] sm:$0xff] %v51
      %56 = vst [vmem:[#allocation2 + $0x18] sm:$0xff] %v52
      %57 = vst [vmem:[#allocation3] sm:$0xff] 0.0
      %58 = vst [vmem:[#allocation3 + $0x8] sm:$0xff] 0.0
      %59 = vst [vmem:[#allocation3 + $0x10] sm:$0xff] 0.0
      %60 = vst [vmem:[#allocation3 + $0x18] sm:$0xff] 0.0
    $region57: #{tpu_custom_call.1} parent=1 // pred_fallthru
      _
    %v61 = vld [vmem:[%s0] sm:$0xff]
    %v62 = vld [vmem:[%s0 + $0x8] sm:$0xff]
    %v63 = vld [vmem:[%s0 + $0x10] sm:$0xff]
    %v64 = vld [vmem:[%s0 + $0x18] sm:$0xff]
    %v65 = vld [vmem:[%s1] sm:$0xff]
    %v66 = vld [vmem:[%s1 + $0x8] sm:$0xff]
    %v67 = vld [vmem:[%s1 + $0x10] sm:$0xff]
    %v68 = vld [vmem:[%s1 + $0x18] sm:$0xff]
    %v69 = vld [vmem:[%s2] sm:$0xff]
    %v70 = vld [vmem:[%s2 + $0x8] sm:$0xff]
    %v71 = vld [vmem:[%s2 + $0x10] sm:$0xff]
    %v72 = vld [vmem:[%s2 + $0x18] sm:$0xff]
    %v73 = vld [vmem:[%s6] sm:$0xf]
    %75 = vset.pattern.permute.xlu0 0
    %76 = vperm.xlu0 %75, %v73
    %v77 = vpop.permute.xlu0 %76
    %v79 = vunpack.c.l.s4 839922192
    %v80 = vunpack.c.0.s8 %v79
    %v81 = vlaneseq
    %v82 = vshrl.u32 %v81, 7
    %v83 = vsub.s32 %v80, %v82
    %v84 = vrot.slane %v77, %v83
    %v86 = vmul.f32 %v69, %v84
    %v87 = vmul.f32 %v70, %v84
    %v88 = vmul.f32 %v71, %v84
    %v89 = vmul.f32 %v72, %v84
    %90 = vset.pattern.permute.xlu0 1
    %91 = vperm.xlu0 %90, %v73
    %v92 = vpop.permute.xlu0 %91
    %v94 = vunpack.c.l.s4 839922192
    %v95 = vunpack.c.0.s8 %v94
    %v96 = vlaneseq
    %v97 = vshrl.u32 %v96, 7
    %v98 = vsub.s32 %v95, %v97
    %v99 = vrot.slane %v92, %v98
    %v101 = vadd.f32 %v86, %v99
    %v102 = vadd.f32 %v87, %v99
    %v103 = vadd.f32 %v88, %v99
    %v104 = vadd.f32 %v89, %v99
    %v105 = vmax.f32 %v101, 0.0
    %v106 = vmax.f32 %v102, 0.0
    %v107 = vmax.f32 %v103, 0.0
    %v108 = vmax.f32 %v104, 0.0
    %v109 = vsub.f32 0.0, %v105
    %v110 = vsub.f32 0.0, %v106
    %v111 = vsub.f32 0.0, %v107
    %v112 = vsub.f32 0.0, %v108
    %v113 = vmul.f32 %v109, 1.442695
    %v114 = vpow.pop %v113
    %v115 = vmul.f32 %v110, 1.442695
    %v116 = vpow.pop %v115
    %v117 = vmul.f32 %v111, 1.442695
    %v118 = vpow.pop %v117
    %v119 = vmul.f32 %v112, 1.442695
    %v120 = vpow.pop %v119
    %v121 = vsub.f32 1.0, %v65
    %v122 = vsub.f32 1.0, %v66
    %v123 = vsub.f32 1.0, %v67
    %v124 = vsub.f32 1.0, %v68
    %v125 = vmul.f32 %v65, %v61
    %v126 = vmul.f32 %v66, %v62
    %v127 = vmul.f32 %v67, %v63
    %v128 = vmul.f32 %v68, %v64
    %v129 = vmul.f32 %v114, %v61
    %v130 = vmul.f32 %v116, %v62
    %v131 = vmul.f32 %v118, %v63
    %v132 = vmul.f32 %v120, %v64
    %v133 = vsub.f32 1.0, %v114
    %v134 = vsub.f32 1.0, %v116
    %v135 = vsub.f32 1.0, %v118
    %v136 = vsub.f32 1.0, %v120
    %137 = vset.pattern.permute.xlu0 2
    %138 = vperm.xlu0 %137, %v73
    %v139 = vpop.permute.xlu0 %138
    %v141 = vunpack.c.l.s4 839922192
    %v142 = vunpack.c.0.s8 %v141
    %v143 = vlaneseq
    %v144 = vshrl.u32 %v143, 7
    %v145 = vsub.s32 %v142, %v144
    %v146 = vrot.slane %v139, %v145
    %v148 = vmul.f32 %v133, %v146
    %v149 = vmul.f32 %v134, %v146
    %v150 = vmul.f32 %v135, %v146
    %v151 = vmul.f32 %v136, %v146
    %v152 = vadd.f32 %v129, %v148
    %v153 = vadd.f32 %v130, %v149
    %v154 = vadd.f32 %v131, %v150
    %v155 = vadd.f32 %v132, %v151
    %v156 = vmul.f32 %v121, %v152
    %v157 = vmul.f32 %v122, %v153
    %v158 = vmul.f32 %v123, %v154
    %v159 = vmul.f32 %v124, %v155
    %v160 = vadd.f32 %v125, %v156
    %v161 = vadd.f32 %v126, %v157
    %v162 = vadd.f32 %v127, %v158
    %v163 = vadd.f32 %v128, %v159
    %v164 = vld [vmem:[%s7] sm:$0xff]
    %v165 = vld [vmem:[%s7 + $0x8] sm:$0xff]
    %v166 = vld [vmem:[%s7 + $0x10] sm:$0xff]
    %v167 = vld [vmem:[%s7 + $0x18] sm:$0xff]
    %v168 = vld [vmem:[%s7 + $0x20] sm:$0xff]
    %v169 = vld [vmem:[%s7 + $0x28] sm:$0xff]
    %v170 = vld [vmem:[%s7 + $0x30] sm:$0xff]
    %v171 = vld [vmem:[%s7 + $0x38] sm:$0xff]
    %v172 = vld [vmem:[%s7 + $0x40] sm:$0xff]
    %v173 = vld [vmem:[%s7 + $0x48] sm:$0xff]
    %v174 = vld [vmem:[%s7 + $0x50] sm:$0xff]
    %v175 = vld [vmem:[%s7 + $0x58] sm:$0xff]
    %v176 = vld [vmem:[%s7 + $0x60] sm:$0xff]
    %v177 = vld [vmem:[%s7 + $0x68] sm:$0xff]
    %v178 = vld [vmem:[%s7 + $0x70] sm:$0xff]
    %v179 = vld [vmem:[%s7 + $0x78] sm:$0xff]
    %v180 = vld [vmem:[%s7 + $0x80] sm:$0xff]
    %v181 = vld [vmem:[%s7 + $0x88] sm:$0xff]
    %v182 = vld [vmem:[%s7 + $0x90] sm:$0xff]
    %v183 = vld [vmem:[%s7 + $0x98] sm:$0xff]
    %v184 = vld [vmem:[%s7 + $0xa0] sm:$0xff]
    %v185 = vld [vmem:[%s7 + $0xa8] sm:$0xff]
    %v186 = vld [vmem:[%s7 + $0xb0] sm:$0xff]
    %v187 = vld [vmem:[%s7 + $0xb8] sm:$0xff]
    %v188 = vld [vmem:[%s7 + $0xc0] sm:$0xff]
    %v189 = vld [vmem:[%s7 + $0xc8] sm:$0xff]
    %v190 = vld [vmem:[%s7 + $0xd0] sm:$0xff]
    %v191 = vld [vmem:[%s7 + $0xd8] sm:$0xff]
    %v192 = vld [vmem:[%s8] sm:$0xff]
    %v193 = vld [vmem:[%s8 + $0x8] sm:$0xff]
    %v194 = vld [vmem:[%s8 + $0x10] sm:$0xff]
    %v195 = vld [vmem:[%s8 + $0x18] sm:$0xff]
    %v196 = vld [vmem:[%s8 + $0x20] sm:$0xff]
    %v197 = vld [vmem:[%s8 + $0x28] sm:$0xff]
    %v198 = vld [vmem:[%s8 + $0x30] sm:$0xff]
    %v199 = vld [vmem:[%s8 + $0x38] sm:$0xff]
    %v200 = vld [vmem:[%s8 + $0x40] sm:$0xff]
    %v201 = vld [vmem:[%s8 + $0x48] sm:$0xff]
    %v202 = vld [vmem:[%s8 + $0x50] sm:$0xff]
    %v203 = vld [vmem:[%s8 + $0x58] sm:$0xff]
    %v204 = vld [vmem:[%s8 + $0x60] sm:$0xff]
    %v205 = vld [vmem:[%s8 + $0x68] sm:$0xff]
    %v206 = vld [vmem:[%s8 + $0x70] sm:$0xff]
    %v207 = vld [vmem:[%s8 + $0x78] sm:$0xff]
    %v208 = vld [vmem:[%s8 + $0x80] sm:$0xff]
    %v209 = vld [vmem:[%s8 + $0x88] sm:$0xff]
    %v210 = vld [vmem:[%s8 + $0x90] sm:$0xff]
    %v211 = vld [vmem:[%s8 + $0x98] sm:$0xff]
    %213 = vset.pattern.permute.xlu0 0
    %214 = vperm.xlu0 %213, %v192
    %v215 = vpop.permute.xlu0 %214
    %218 = vset.pattern.permute.xlu0 0
    %219 = vperm.xlu0 %218, %v193
    %v220 = vpop.permute.xlu0 %219
    %223 = vset.pattern.permute.xlu0 0
    %224 = vperm.xlu0 %223, %v194
    %v225 = vpop.permute.xlu0 %224
    %228 = vset.pattern.permute.xlu0 0
    %229 = vperm.xlu0 %228, %v195
    %v230 = vpop.permute.xlu0 %229
    %v236 = vcombine.high %v69, %v69
    %v237 = vcombine.high %v70, %v70
    %v238 = vcombine.high %v71, %v71
    %v239 = vcombine.high %v72, %v72
    %vm240 = vcmask 31744
    %v242 = vsel %vm240, %v164, 0
    %v245 = vsel %vm240, %v165, 0
    %v248 = vsel %vm240, %v166, 0
    %v251 = vsel %vm240, %v167, 0
    %vm253 = vcmask 1043456
    %v254 = vsel %vm253, %v69, 0
    %v256 = vsel %vm253, %v236, 0
    %v258 = vsel %vm253, %v70, 0
    %v260 = vsel %vm253, %v237, 0
    %v262 = vsel %vm253, %v71, 0
    %v264 = vsel %vm253, %v238, 0
    %v266 = vsel %vm253, %v72, 0
    %v268 = vsel %vm253, %v239, 0
    %270 = vmatprep.subr.mxu0 %v256
    %271 = vmatpush1.msra.mxu0 %v254
    %272 = vmatprep.subr.mxu0 0.0
    %273 = vmatpush1.msra.mxu0 0.0
    %274 = vmatprep.subr.mxu0 0.0
    %275 = vmatpush1.msra.mxu0 0.0
    %276 = vmatprep.subr.mxu0 0.0
    %277 = vmatpush1.msra.mxu0 0.0
    %278 = vmatprep.subr.mxu0 0.0
    %279 = vmatpush1.msra.mxu0 0.0
    %280 = vmatprep.subr.mxu0 0.0
    %281 = vmatpush1.msra.mxu0 0.0
    %282 = vmatprep.subr.mxu0 0.0
    %283 = vmatpush1.msra.mxu0 0.0
    %284 = vmatprep.subr.mxu0 0.0
    %285 = vmatpush1.msra.mxu0 0.0
    %286 = vmatprep.subr.mxu0 0.0
    %287 = vmatpush1.msra.mxu0 0.0
    %288 = vmatprep.subr.mxu0 0.0
    %289 = vmatpush1.msra.mxu0 0.0
    %290 = vmatprep.subr.mxu0 0.0
    %291 = vmatpush1.msra.mxu0 0.0
    %292 = vmatprep.subr.mxu0 0.0
    %293 = vmatpush1.msra.mxu0 0.0
    %294 = vmatprep.subr.mxu0 0.0
    %295 = vmatpush1.msra.mxu0 0.0
    %296 = vmatprep.subr.mxu0 0.0
    %297 = vmatpush1.msra.mxu0 0.0
    %298 = vmatprep.subr.mxu0 0.0
    %299 = vmatpush1.msra.mxu0 0.0
    %300 = vmatprep.subr.mxu0 0.0
    %301 = vmatpush1.msra.mxu0 0.0
    %302 = vmatprep.subr.mxu0 0.0
    %303 = vmatpush1.msra.mxu0 0.0
    %304 = vmatprep.subr.mxu0 0.0
    %305 = vmatpush1.msra.mxu0 0.0
    %306 = vmatprep.subr.mxu0 0.0
    %307 = vmatpush1.msra.mxu0 0.0
    %308 = vmatprep.subr.mxu0 0.0
    %309 = vmatpush1.msra.mxu0 0.0
    %310 = vmatprep.subr.mxu0 0.0
    %311 = vmatpush1.msra.mxu0 0.0
    %312 = vmatprep.subr.mxu0 0.0
    %313 = vmatpush1.msra.mxu0 0.0
    %314 = vmatprep.subr.mxu0 0.0
    %315 = vmatpush1.msra.mxu0 0.0
    %316 = vmatprep.subr.mxu0 0.0
    %317 = vmatpush1.msra.mxu0 0.0
    %318 = vmatprep.subr.mxu0 0.0
    %319 = vmatpush1.msra.mxu0 0.0
    %320 = vmatprep.subr.mxu0 0.0
    %321 = vmatpush1.msra.mxu0 0.0
    %322 = vmatprep.subr.mxu0 0.0
    %323 = vmatpush1.msra.mxu0 0.0
    %324 = vmatprep.subr.mxu0 0.0
    %325 = vmatpush1.msra.mxu0 0.0
    %326 = vmatprep.subr.mxu0 0.0
    %327 = vmatpush1.msra.mxu0 0.0
    %328 = vmatprep.subr.mxu0 0.0
    %329 = vmatpush1.msra.mxu0 0.0
    %330 = vmatprep.subr.mxu0 0.0
    %331 = vmatpush1.msra.mxu0 0.0
    %332 = vmatprep.subr.mxu0 0.0
    %333 = vmatpush1.msra.mxu0 0.0
    %334 = vmatprep.mubr.f32.mxu0 0.0
    %335 = vmatmul.mubr.f32.gmra.mrb[0].mxu0 %v242
    %v336 = vpop.f32.mrb[0].mxu0
    %v337 = vadd.f32 %v215, %v336
    %v338 = vpop.f32.mrb[0].mxu0
    %v339 = vadd.f32 %v215, %v338
    %340 = vmatprep.mubr.f32.mxu0 0.0
    %341 = vmatmul.mubr.f32.gmra.mrb[0].mxu0 %v245
    %v342 = vpop.f32.mrb[0].mxu0
    %v343 = vadd.f32 %v220, %v342
    %v344 = vpop.f32.mrb[0].mxu0
    %v345 = vadd.f32 %v220, %v344
    %346 = vmatprep.mubr.f32.mxu0 0.0
    %347 = vmatmul.mubr.f32.gmra.mrb[0].mxu0 %v248
    %v348 = vpop.f32.mrb[0].mxu0
    %v349 = vadd.f32 %v225, %v348
    %v350 = vpop.f32.mrb[0].mxu0
    %v351 = vadd.f32 %v225, %v350
    %352 = vmatprep.mubr.f32.mxu0 0.0
    %353 = vmatmul.mubr.f32.gmra.mrb[0].mxu0 %v251
    %v354 = vpop.f32.mrb[0].mxu0
    %v355 = vadd.f32 %v230, %v354
    %v356 = vpop.f32.mrb[0].mxu0
    %v357 = vadd.f32 %v230, %v356
    %358 = vdwg.mxu0
    %359 = vmatprep.subr.mxu0 %v260
    %360 = vmatpush1.msra.mxu0 %v258
    %361 = vmatprep.subr.mxu0 0.0
    %362 = vmatpush1.msra.mxu0 0.0
    %363 = vmatprep.subr.mxu0 0.0
    %364 = vmatpush1.msra.mxu0 0.0
    %365 = vmatprep.subr.mxu0 0.0
    %366 = vmatpush1.msra.mxu0 0.0
    %367 = vmatprep.subr.mxu0 0.0
    %368 = vmatpush1.msra.mxu0 0.0
    %369 = vmatprep.subr.mxu0 0.0
    %370 = vmatpush1.msra.mxu0 0.0
    %371 = vmatprep.subr.mxu0 0.0
    %372 = vmatpush1.msra.mxu0 0.0
    %373 = vmatprep.subr.mxu0 0.0
    %374 = vmatpush1.msra.mxu0 0.0
    %375 = vmatprep.subr.mxu0 0.0
    %376 = vmatpush1.msra.mxu0 0.0
    %377 = vmatprep.subr.mxu0 0.0
    %378 = vmatpush1.msra.mxu0 0.0
    %379 = vmatprep.subr.mxu0 0.0
    %380 = vmatpush1.msra.mxu0 0.0
    %381 = vmatprep.subr.mxu0 0.0
    %382 = vmatpush1.msra.mxu0 0.0
    %383 = vmatprep.subr.mxu0 0.0
    %384 = vmatpush1.msra.mxu0 0.0
    %385 = vmatprep.subr.mxu0 0.0
    %386 = vmatpush1.msra.mxu0 0.0
    %387 = vmatprep.subr.mxu0 0.0
    %388 = vmatpush1.msra.mxu0 0.0
    %389 = vmatprep.subr.mxu0 0.0
    %390 = vmatpush1.msra.mxu0 0.0
    %391 = vmatprep.subr.mxu0 0.0
    %392 = vmatpush1.msra.mxu0 0.0
    %393 = vmatprep.subr.mxu0 0.0
    %394 = vmatpush1.msra.mxu0 0.0
    %395 = vmatprep.subr.mxu0 0.0
    %396 = vmatpush1.msra.mxu0 0.0
    %397 = vmatprep.subr.mxu0 0.0
    %398 = vmatpush1.msra.mxu0 0.0
    %399 = vmatprep.subr.mxu0 0.0
    %400 = vmatpush1.msra.mxu0 0.0
    %401 = vmatprep.subr.mxu0 0.0
    %402 = vmatpush1.msra.mxu0 0.0
    %403 = vmatprep.subr.mxu0 0.0
    %404 = vmatpush1.msra.mxu0 0.0
    %405 = vmatprep.subr.mxu0 0.0
    %406 = vmatpush1.msra.mxu0 0.0
    %407 = vmatprep.subr.mxu0 0.0
    %408 = vmatpush1.msra.mxu0 0.0
    %409 = vmatprep.subr.mxu0 0.0
    %410 = vmatpush1.msra.mxu0 0.0
    %411 = vmatprep.subr.mxu0 0.0
    %412 = vmatpush1.msra.mxu0 0.0
    %413 = vmatprep.subr.mxu0 0.0
    %414 = vmatpush1.msra.mxu0 0.0
    %415 = vmatprep.subr.mxu0 0.0
    %416 = vmatpush1.msra.mxu0 0.0
    %417 = vmatprep.subr.mxu0 0.0
    %418 = vmatpush1.msra.mxu0 0.0
    %419 = vmatprep.subr.mxu0 0.0
    %420 = vmatpush1.msra.mxu0 0.0
    %421 = vmatprep.subr.mxu0 0.0
    %422 = vmatpush1.msra.mxu0 0.0
    %423 = vmatprep.mubr.f32.mxu0 0.0
    %424 = vmatmul.mubr.f32.gmra.mrb[0].mxu0 %v242
    %v425 = vpop.f32.mrb[0].mxu0
    %v426 = vadd.f32 %v215, %v425
    %v427 = vpop.f32.mrb[0].mxu0
    %v428 = vadd.f32 %v215, %v427
    %429 = vmatprep.mubr.f32.mxu0 0.0
    %430 = vmatmul.mubr.f32.gmra.mrb[0].mxu0 %v245
    %v431 = vpop.f32.mrb[0].mxu0
    %v432 = vadd.f32 %v220, %v431
    %v433 = vpop.f32.mrb[0].mxu0
    %v434 = vadd.f32 %v220, %v433
    %435 = vmatprep.mubr.f32.mxu0 0.0
    %436 = vmatmul.mubr.f32.gmra.mrb[0].mxu0 %v248
    %v437 = vpop.f32.mrb[0].mxu0
    %v438 = vadd.f32 %v225, %v437
    %v439 = vpop.f32.mrb[0].mxu0
    %v440 = vadd.f32 %v225, %v439
    %441 = vmatprep.mubr.f32.mxu0 0.0
    %442 = vmatmul.mubr.f32.gmra.mrb[0].mxu0 %v251
    %v443 = vpop.f32.mrb[0].mxu0
    %v444 = vadd.f32 %v230, %v443
    %v445 = vpop.f32.mrb[0].mxu0
    %v446 = vadd.f32 %v230, %v445
    %447 = vdwg.mxu0
    %448 = vmatprep.subr.mxu0 %v264
    %449 = vmatpush1.msra.mxu0 %v262
    %450 = vmatprep.subr.mxu0 0.0
    %451 = vmatpush1.msra.mxu0 0.0
    %452 = vmatprep.subr.mxu0 0.0
    %453 = vmatpush1.msra.mxu0 0.0
    %454 = vmatprep.subr.mxu0 0.0
    %455 = vmatpush1.msra.mxu0 0.0
    %456 = vmatprep.subr.mxu0 0.0
    %457 = vmatpush1.msra.mxu0 0.0
    %458 = vmatprep.subr.mxu0 0.0
    %459 = vmatpush1.msra.mxu0 0.0
    %460 = vmatprep.subr.mxu0 0.0
    %461 = vmatpush1.msra.mxu0 0.0
    %462 = vmatprep.subr.mxu0 0.0
    %463 = vmatpush1.msra.mxu0 0.0
    %464 = vmatprep.subr.mxu0 0.0
    %465 = vmatpush1.msra.mxu0 0.0
    %466 = vmatprep.subr.mxu0 0.0
    %467 = vmatpush1.msra.mxu0 0.0
    %468 = vmatprep.subr.mxu0 0.0
    %469 = vmatpush1.msra.mxu0 0.0
    %470 = vmatprep.subr.mxu0 0.0
    %471 = vmatpush1.msra.mxu0 0.0
    %472 = vmatprep.subr.mxu0 0.0
    %473 = vmatpush1.msra.mxu0 0.0
    %474 = vmatprep.subr.mxu0 0.0
    %475 = vmatpush1.msra.mxu0 0.0
    %476 = vmatprep.subr.mxu0 0.0
    %477 = vmatpush1.msra.mxu0 0.0
    %478 = vmatprep.subr.mxu0 0.0
    %479 = vmatpush1.msra.mxu0 0.0
    %480 = vmatprep.subr.mxu0 0.0
    %481 = vmatpush1.msra.mxu0 0.0
    %482 = vmatprep.subr.mxu0 0.0
    %483 = vmatpush1.msra.mxu0 0.0
    %484 = vmatprep.subr.mxu0 0.0
    %485 = vmatpush1.msra.mxu0 0.0
    %486 = vmatprep.subr.mxu0 0.0
    %487 = vmatpush1.msra.mxu0 0.0
    %488 = vmatprep.subr.mxu0 0.0
    %489 = vmatpush1.msra.mxu0 0.0
    %490 = vmatprep.subr.mxu0 0.0
    %491 = vmatpush1.msra.mxu0 0.0
    %492 = vmatprep.subr.mxu0 0.0
    %493 = vmatpush1.msra.mxu0 0.0
    %494 = vmatprep.subr.mxu0 0.0
    %495 = vmatpush1.msra.mxu0 0.0
    %496 = vmatprep.subr.mxu0 0.0
    %497 = vmatpush1.msra.mxu0 0.0
    %498 = vmatprep.subr.mxu0 0.0
    %499 = vmatpush1.msra.mxu0 0.0
    %500 = vmatprep.subr.mxu0 0.0
    %501 = vmatpush1.msra.mxu0 0.0
    %502 = vmatprep.subr.mxu0 0.0
    %503 = vmatpush1.msra.mxu0 0.0
    %504 = vmatprep.subr.mxu0 0.0
    %505 = vmatpush1.msra.mxu0 0.0
    %506 = vmatprep.subr.mxu0 0.0
    %507 = vmatpush1.msra.mxu0 0.0
    %508 = vmatprep.subr.mxu0 0.0
    %509 = vmatpush1.msra.mxu0 0.0
    %510 = vmatprep.subr.mxu0 0.0
    %511 = vmatpush1.msra.mxu0 0.0
    %512 = vmatprep.mubr.f32.mxu0 0.0
    %513 = vmatmul.mubr.f32.gmra.mrb[0].mxu0 %v242
    %v514 = vpop.f32.mrb[0].mxu0
    %v515 = vadd.f32 %v215, %v514
    %v516 = vpop.f32.mrb[0].mxu0
    %v517 = vadd.f32 %v215, %v516
    %518 = vmatprep.mubr.f32.mxu0 0.0
    %519 = vmatmul.mubr.f32.gmra.mrb[0].mxu0 %v245
    %v520 = vpop.f32.mrb[0].mxu0
    %v521 = vadd.f32 %v220, %v520
    %v522 = vpop.f32.mrb[0].mxu0
    %v523 = vadd.f32 %v220, %v522
    %524 = vmatprep.mubr.f32.mxu0 0.0
    %525 = vmatmul.mubr.f32.gmra.mrb[0].mxu0 %v248
    %v526 = vpop.f32.mrb[0].mxu0
    %v527 = vadd.f32 %v225, %v526
    %v528 = vpop.f32.mrb[0].mxu0
    %v529 = vadd.f32 %v225, %v528
    %530 = vmatprep.mubr.f32.mxu0 0.0
    %531 = vmatmul.mubr.f32.gmra.mrb[0].mxu0 %v251
    %v532 = vpop.f32.mrb[0].mxu0
    %v533 = vadd.f32 %v230, %v532
    %v534 = vpop.f32.mrb[0].mxu0
    %v535 = vadd.f32 %v230, %v534
    %536 = vdwg.mxu0
    %537 = vmatprep.subr.mxu0 %v268
    %538 = vmatpush1.msra.mxu0 %v266
    %539 = vmatprep.subr.mxu0 0.0
    %540 = vmatpush1.msra.mxu0 0.0
    %541 = vmatprep.subr.mxu0 0.0
    %542 = vmatpush1.msra.mxu0 0.0
    %543 = vmatprep.subr.mxu0 0.0
    %544 = vmatpush1.msra.mxu0 0.0
    %545 = vmatprep.subr.mxu0 0.0
    %546 = vmatpush1.msra.mxu0 0.0
    %547 = vmatprep.subr.mxu0 0.0
    %548 = vmatpush1.msra.mxu0 0.0
    %549 = vmatprep.subr.mxu0 0.0
    %550 = vmatpush1.msra.mxu0 0.0
    %551 = vmatprep.subr.mxu0 0.0
    %552 = vmatpush1.msra.mxu0 0.0
    %553 = vmatprep.subr.mxu0 0.0
    %554 = vmatpush1.msra.mxu0 0.0
    %555 = vmatprep.subr.mxu0 0.0
    %556 = vmatpush1.msra.mxu0 0.0
    %557 = vmatprep.subr.mxu0 0.0
    %558 = vmatpush1.msra.mxu0 0.0
    %559 = vmatprep.subr.mxu0 0.0
    %560 = vmatpush1.msra.mxu0 0.0
    %561 = vmatprep.subr.mxu0 0.0
    %562 = vmatpush1.msra.mxu0 0.0
    %563 = vmatprep.subr.mxu0 0.0
    %564 = vmatpush1.msra.mxu0 0.0
    %565 = vmatprep.subr.mxu0 0.0
    %566 = vmatpush1.msra.mxu0 0.0
    %567 = vmatprep.subr.mxu0 0.0
    %568 = vmatpush1.msra.mxu0 0.0
    %569 = vmatprep.subr.mxu0 0.0
    %570 = vmatpush1.msra.mxu0 0.0
    %571 = vmatprep.subr.mxu0 0.0
    %572 = vmatpush1.msra.mxu0 0.0
    %573 = vmatprep.subr.mxu0 0.0
    %574 = vmatpush1.msra.mxu0 0.0
    %575 = vmatprep.subr.mxu0 0.0
    %576 = vmatpush1.msra.mxu0 0.0
    %577 = vmatprep.subr.mxu0 0.0
    %578 = vmatpush1.msra.mxu0 0.0
    %579 = vmatprep.subr.mxu0 0.0
    %580 = vmatpush1.msra.mxu0 0.0
    %581 = vmatprep.subr.mxu0 0.0
    %582 = vmatpush1.msra.mxu0 0.0
    %583 = vmatprep.subr.mxu0 0.0
    %584 = vmatpush1.msra.mxu0 0.0
    %585 = vmatprep.subr.mxu0 0.0
    %586 = vmatpush1.msra.mxu0 0.0
    %587 = vmatprep.subr.mxu0 0.0
    %588 = vmatpush1.msra.mxu0 0.0
    %589 = vmatprep.subr.mxu0 0.0
    %590 = vmatpush1.msra.mxu0 0.0
    %591 = vmatprep.subr.mxu0 0.0
    %592 = vmatpush1.msra.mxu0 0.0
    %593 = vmatprep.subr.mxu0 0.0
    %594 = vmatpush1.msra.mxu0 0.0
    %595 = vmatprep.subr.mxu0 0.0
    %596 = vmatpush1.msra.mxu0 0.0
    %597 = vmatprep.subr.mxu0 0.0
    %598 = vmatpush1.msra.mxu0 0.0
    %599 = vmatprep.subr.mxu0 0.0
    %600 = vmatpush1.msra.mxu0 0.0
    %601 = vmatprep.mubr.f32.mxu0 0.0
    %602 = vmatmul.mubr.f32.gmra.mrb[0].mxu0 %v242
    %v603 = vpop.f32.mrb[0].mxu0
    %v604 = vadd.f32 %v215, %v603
    %v605 = vpop.f32.mrb[0].mxu0
    %v606 = vadd.f32 %v215, %v605
    %607 = vmatprep.mubr.f32.mxu0 0.0
    %608 = vmatmul.mubr.f32.gmra.mrb[0].mxu0 %v245
    %v609 = vpop.f32.mrb[0].mxu0
    %v610 = vadd.f32 %v220, %v609
    %v611 = vpop.f32.mrb[0].mxu0
    %v612 = vadd.f32 %v220, %v611
    %613 = vmatprep.mubr.f32.mxu0 0.0
    %614 = vmatmul.mubr.f32.gmra.mrb[0].mxu0 %v248
    %v615 = vpop.f32.mrb[0].mxu0
    %v616 = vadd.f32 %v225, %v615
    %v617 = vpop.f32.mrb[0].mxu0
    %v618 = vadd.f32 %v225, %v617
    %619 = vmatprep.mubr.f32.mxu0 0.0
    %620 = vmatmul.mubr.f32.gmra.mrb[0].mxu0 %v251
    %v621 = vpop.f32.mrb[0].mxu0
    %v622 = vadd.f32 %v230, %v621
    %v623 = vpop.f32.mrb[0].mxu0
    %v624 = vadd.f32 %v230, %v623
    %625 = vdwg.mxu0
    %v626 = vmax.f32 %v337, 0.0
    %v627 = vmax.f32 %v339, 0.0
    %v628 = vmax.f32 %v426, 0.0
    %v629 = vmax.f32 %v428, 0.0
    %v630 = vmax.f32 %v515, 0.0
    %v631 = vmax.f32 %v517, 0.0
    %v632 = vmax.f32 %v604, 0.0
    %v633 = vmax.f32 %v606, 0.0
    %v634 = vmax.f32 %v343, 0.0
    %v635 = vmax.f32 %v345, 0.0
    %v636 = vmax.f32 %v432, 0.0
    %v637 = vmax.f32 %v434, 0.0
    %v638 = vmax.f32 %v521, 0.0
    %v639 = vmax.f32 %v523, 0.0
    %v640 = vmax.f32 %v610, 0.0
    %v641 = vmax.f32 %v612, 0.0
    %v642 = vmax.f32 %v349, 0.0
    %v643 = vmax.f32 %v351, 0.0
    %v644 = vmax.f32 %v438, 0.0
    %v645 = vmax.f32 %v440, 0.0
    %v646 = vmax.f32 %v527, 0.0
    %v647 = vmax.f32 %v529, 0.0
    %v648 = vmax.f32 %v616, 0.0
    %v649 = vmax.f32 %v618, 0.0
    %v650 = vmax.f32 %v355, 0.0
    %v651 = vmax.f32 %v357, 0.0
    %v652 = vmax.f32 %v444, 0.0
    %v653 = vmax.f32 %v446, 0.0
    %v654 = vmax.f32 %v533, 0.0
    %v655 = vmax.f32 %v535, 0.0
    %v656 = vmax.f32 %v622, 0.0
    %v657 = vmax.f32 %v624, 0.0
    %v658 = vsub.f32 0.0, %v626
    %v659 = vsub.f32 0.0, %v627
    %v660 = vsub.f32 0.0, %v628
    %v661 = vsub.f32 0.0, %v629
    %v662 = vsub.f32 0.0, %v630
    %v663 = vsub.f32 0.0, %v631
    %v664 = vsub.f32 0.0, %v632
    %v665 = vsub.f32 0.0, %v633
    %v666 = vsub.f32 0.0, %v634
    %v667 = vsub.f32 0.0, %v635
    %v668 = vsub.f32 0.0, %v636
    %v669 = vsub.f32 0.0, %v637
    %v670 = vsub.f32 0.0, %v638
    %v671 = vsub.f32 0.0, %v639
    %v672 = vsub.f32 0.0, %v640
    %v673 = vsub.f32 0.0, %v641
    %v674 = vsub.f32 0.0, %v642
    %v675 = vsub.f32 0.0, %v643
    %v676 = vsub.f32 0.0, %v644
    %v677 = vsub.f32 0.0, %v645
    %v678 = vsub.f32 0.0, %v646
    %v679 = vsub.f32 0.0, %v647
    %v680 = vsub.f32 0.0, %v648
    %v681 = vsub.f32 0.0, %v649
    %v682 = vsub.f32 0.0, %v650
    %v683 = vsub.f32 0.0, %v651
    %v684 = vsub.f32 0.0, %v652
    %v685 = vsub.f32 0.0, %v653
    %v686 = vsub.f32 0.0, %v654
    %v687 = vsub.f32 0.0, %v655
    %v688 = vsub.f32 0.0, %v656
    %v689 = vsub.f32 0.0, %v657
    %v690 = vmul.f32 %v658, 1.442695
    %v691 = vpow.pop %v690
    %v692 = vmul.f32 %v659, 1.442695
    %v693 = vpow.pop %v692
    %v694 = vmul.f32 %v660, 1.442695
    %v695 = vpow.pop %v694
    %v696 = vmul.f32 %v661, 1.442695
    %v697 = vpow.pop %v696
    %v698 = vmul.f32 %v662, 1.442695
    %v699 = vpow.pop %v698
    %v700 = vmul.f32 %v663, 1.442695
    %v701 = vpow.pop %v700
    %v702 = vmul.f32 %v664, 1.442695
    %v703 = vpow.pop %v702
    %v704 = vmul.f32 %v665, 1.442695
    %v705 = vpow.pop %v704
    %v706 = vmul.f32 %v666, 1.442695
    %v707 = vpow.pop %v706
    %v708 = vmul.f32 %v667, 1.442695
    %v709 = vpow.pop %v708
    %v710 = vmul.f32 %v668, 1.442695
    %v711 = vpow.pop %v710
    %v712 = vmul.f32 %v669, 1.442695
    %v713 = vpow.pop %v712
    %v714 = vmul.f32 %v670, 1.442695
    %v715 = vpow.pop %v714
    %v716 = vmul.f32 %v671, 1.442695
    %v717 = vpow.pop %v716
    %v718 = vmul.f32 %v672, 1.442695
    %v719 = vpow.pop %v718
    %v720 = vmul.f32 %v673, 1.442695
    %v721 = vpow.pop %v720
    %v722 = vmul.f32 %v674, 1.442695
    %v723 = vpow.pop %v722
    %v724 = vmul.f32 %v675, 1.442695
    %v725 = vpow.pop %v724
    %v726 = vmul.f32 %v676, 1.442695
    %v727 = vpow.pop %v726
    %v728 = vmul.f32 %v677, 1.442695
    %v729 = vpow.pop %v728
    %v730 = vmul.f32 %v678, 1.442695
    %v731 = vpow.pop %v730
    %v732 = vmul.f32 %v679, 1.442695
    %v733 = vpow.pop %v732
    %v734 = vmul.f32 %v680, 1.442695
    %v735 = vpow.pop %v734
    %v736 = vmul.f32 %v681, 1.442695
    %v737 = vpow.pop %v736
    %v738 = vmul.f32 %v682, 1.442695
    %v739 = vpow.pop %v738
    %v740 = vmul.f32 %v683, 1.442695
    %v741 = vpow.pop %v740
    %v742 = vmul.f32 %v684, 1.442695
    %v743 = vpow.pop %v742
    %v744 = vmul.f32 %v685, 1.442695
    %v745 = vpow.pop %v744
    %v746 = vmul.f32 %v686, 1.442695
    %v747 = vpow.pop %v746
    %v748 = vmul.f32 %v687, 1.442695
    %v749 = vpow.pop %v748
    %v750 = vmul.f32 %v688, 1.442695
    %v751 = vpow.pop %v750
    %v752 = vmul.f32 %v689, 1.442695
    %v753 = vpow.pop %v752
    %v758 = vcombine.high %v65, %v65
    %v759 = vcombine.high %v66, %v66
    %v760 = vcombine.high %v67, %v67
    %v761 = vcombine.high %v68, %v68
    %v763 = vsel %vm240, %v180, 0
    %v766 = vsel %vm240, %v181, 0
    %v769 = vsel %vm240, %v182, 0
    %v772 = vsel %vm240, %v183, 0
    %v775 = vsel %vm240, %v184, 0
    %v778 = vsel %vm240, %v185, 0
    %v781 = vsel %vm240, %v186, 0
    %v784 = vsel %vm240, %v187, 0
    %v787 = vsel %vm240, %v188, 0
    %v790 = vsel %vm240, %v189, 0
    %v793 = vsel %vm240, %v190, 0
    %v796 = vsel %vm240, %v191, 0
    %v798 = vsel %vm253, %v65, 0
    %v800 = vsel %vm253, %v758, 0
    %v802 = vsel %vm253, %v66, 0
    %v804 = vsel %vm253, %v759, 0
    %v806 = vsel %vm253, %v67, 0
    %v808 = vsel %vm253, %v760, 0
    %v810 = vsel %vm253, %v68, 0
    %v812 = vsel %vm253, %v761, 0
    %814 = vmatprep.subr.mxu0 %v800
    %815 = vmatpush1.msra.mxu0 %v798
    %816 = vmatprep.subr.mxu0 0.0
    %817 = vmatpush1.msra.mxu0 0.0
    %818 = vmatprep.subr.mxu0 0.0
    %819 = vmatpush1.msra.mxu0 0.0
    %820 = vmatprep.subr.mxu0 0.0
    %821 = vmatpush1.msra.mxu0 0.0
    %822 = vmatprep.subr.mxu0 0.0
    %823 = vmatpush1.msra.mxu0 0.0
    %824 = vmatprep.subr.mxu0 0.0
    %825 = vmatpush1.msra.mxu0 0.0
    %826 = vmatprep.subr.mxu0 0.0
    %827 = vmatpush1.msra.mxu0 0.0
    %828 = vmatprep.subr.mxu0 0.0
    %829 = vmatpush1.msra.mxu0 0.0
    %830 = vmatprep.subr.mxu0 0.0
    %831 = vmatpush1.msra.mxu0 0.0
    %832 = vmatprep.subr.mxu0 0.0
    %833 = vmatpush1.msra.mxu0 0.0
    %834 = vmatprep.subr.mxu0 0.0
    %835 = vmatpush1.msra.mxu0 0.0
    %836 = vmatprep.subr.mxu0 0.0
    %837 = vmatpush1.msra.mxu0 0.0
    %838 = vmatprep.subr.mxu0 0.0
    %839 = vmatpush1.msra.mxu0 0.0
    %840 = vmatprep.subr.mxu0 0.0
    %841 = vmatpush1.msra.mxu0 0.0
    %842 = vmatprep.subr.mxu0 0.0
    %843 = vmatpush1.msra.mxu0 0.0
    %844 = vmatprep.subr.mxu0 0.0
    %845 = vmatpush1.msra.mxu0 0.0
    %846 = vmatprep.subr.mxu0 0.0
    %847 = vmatpush1.msra.mxu0 0.0
    %848 = vmatprep.subr.mxu0 0.0
    %849 = vmatpush1.msra.mxu0 0.0
    %850 = vmatprep.subr.mxu0 0.0
    %851 = vmatpush1.msra.mxu0 0.0
    %852 = vmatprep.subr.mxu0 0.0
    %853 = vmatpush1.msra.mxu0 0.0
    %854 = vmatprep.subr.mxu0 0.0
    %855 = vmatpush1.msra.mxu0 0.0
    %856 = vmatprep.subr.mxu0 0.0
    %857 = vmatpush1.msra.mxu0 0.0
    %858 = vmatprep.subr.mxu0 0.0
    %859 = vmatpush1.msra.mxu0 0.0
    %860 = vmatprep.subr.mxu0 0.0
    %861 = vmatpush1.msra.mxu0 0.0
    %862 = vmatprep.subr.mxu0 0.0
    %863 = vmatpush1.msra.mxu0 0.0
    %864 = vmatprep.subr.mxu0 0.0
    %865 = vmatpush1.msra.mxu0 0.0
    %866 = vmatprep.subr.mxu0 0.0
    %867 = vmatpush1.msra.mxu0 0.0
    %868 = vmatprep.subr.mxu0 0.0
    %869 = vmatpush1.msra.mxu0 0.0
    %870 = vmatprep.subr.mxu0 0.0
    %871 = vmatpush1.msra.mxu0 0.0
    %872 = vmatprep.subr.mxu0 0.0
    %873 = vmatpush1.msra.mxu0 0.0
    %874 = vmatprep.subr.mxu0 0.0
    %875 = vmatpush1.msra.mxu0 0.0
    %876 = vmatprep.subr.mxu0 0.0
    %877 = vmatpush1.msra.mxu0 0.0
    %878 = vmatprep.mubr.f32.mxu0 0.0
    %879 = vmatmul.mubr.f32.gmra.mrb[0].mxu0 %v763
    %v880 = vpop.f32.mrb[0].mxu0
    %v881 = vadd.f32 0.0, %v880
    %v882 = vpop.f32.mrb[0].mxu0
    %v883 = vadd.f32 0.0, %v882
    %884 = vmatprep.mubr.f32.mxu0 0.0
    %885 = vmatmul.mubr.f32.gmra.mrb[0].mxu0 %v766
    %v886 = vpop.f32.mrb[0].mxu0
    %v887 = vadd.f32 0.0, %v886
    %v888 = vpop.f32.mrb[0].mxu0
    %v889 = vadd.f32 0.0, %v888
    %890 = vmatprep.mubr.f32.mxu0 0.0
    %891 = vmatmul.mubr.f32.gmra.mrb[0].mxu0 %v769
    %v892 = vpop.f32.mrb[0].mxu0
    %v893 = vadd.f32 0.0, %v892
    %v894 = vpop.f32.mrb[0].mxu0
    %v895 = vadd.f32 0.0, %v894
    %896 = vmatprep.mubr.f32.mxu0 0.0
    %897 = vmatmul.mubr.f32.gmra.mrb[0].mxu0 %v772
    %v898 = vpop.f32.mrb[0].mxu0
    %v899 = vadd.f32 0.0, %v898
    %v900 = vpop.f32.mrb[0].mxu0
    %v901 = vadd.f32 0.0, %v900
    %902 = vmatprep.mubr.f32.mxu0 0.0
    %903 = vmatmul.mubr.f32.gmra.mrb[0].mxu0 %v775
    %v904 = vpop.f32.mrb[0].mxu0
    %v905 = vadd.f32 0.0, %v904
    %v906 = vpop.f32.mrb[0].mxu0
    %v907 = vadd.f32 0.0, %v906
    %908 = vmatprep.mubr.f32.mxu0 0.0
    %909 = vmatmul.mubr.f32.gmra.mrb[0].mxu0 %v778
    %v910 = vpop.f32.mrb[0].mxu0
    %v911 = vadd.f32 0.0, %v910
    %v912 = vpop.f32.mrb[0].mxu0
    %v913 = vadd.f32 0.0, %v912
    %914 = vmatprep.mubr.f32.mxu0 0.0
    %915 = vmatmul.mubr.f32.gmra.mrb[0].mxu0 %v781
    %v916 = vpop.f32.mrb[0].mxu0
    %v917 = vadd.f32 0.0, %v916
    %v918 = vpop.f32.mrb[0].mxu0
    %v919 = vadd.f32 0.0, %v918
    %920 = vmatprep.mubr.f32.mxu0 0.0
    %921 = vmatmul.mubr.f32.gmra.mrb[0].mxu0 %v784
    %v922 = vpop.f32.mrb[0].mxu0
    %v923 = vadd.f32 0.0, %v922
    %v924 = vpop.f32.mrb[0].mxu0
    %v925 = vadd.f32 0.0, %v924
    %926 = vmatprep.mubr.f32.mxu0 0.0
    %927 = vmatmul.mubr.f32.gmra.mrb[0].mxu0 %v787
    %v928 = vpop.f32.mrb[0].mxu0
    %v929 = vadd.f32 0.0, %v928
    %v930 = vpop.f32.mrb[0].mxu0
    %v931 = vadd.f32 0.0, %v930
    %932 = vmatprep.mubr.f32.mxu0 0.0
    %933 = vmatmul.mubr.f32.gmra.mrb[0].mxu0 %v790
    %v934 = vpop.f32.mrb[0].mxu0
    %v935 = vadd.f32 0.0, %v934
    %v936 = vpop.f32.mrb[0].mxu0
    %v937 = vadd.f32 0.0, %v936
    %938 = vmatprep.mubr.f32.mxu0 0.0
    %939 = vmatmul.mubr.f32.gmra.mrb[0].mxu0 %v793
    %v940 = vpop.f32.mrb[0].mxu0
    %v941 = vadd.f32 0.0, %v940
    %v942 = vpop.f32.mrb[0].mxu0
    %v943 = vadd.f32 0.0, %v942
    %944 = vmatprep.mubr.f32.mxu0 0.0
    %945 = vmatmul.mubr.f32.gmra.mrb[0].mxu0 %v796
    %v946 = vpop.f32.mrb[0].mxu0
    %v947 = vadd.f32 0.0, %v946
    %v948 = vpop.f32.mrb[0].mxu0
    %v949 = vadd.f32 0.0, %v948
    %950 = vdwg.mxu0
    %951 = vmatprep.subr.mxu0 %v804
    %952 = vmatpush1.msra.mxu0 %v802
    %953 = vmatprep.subr.mxu0 0.0
    %954 = vmatpush1.msra.mxu0 0.0
    %955 = vmatprep.subr.mxu0 0.0
    %956 = vmatpush1.msra.mxu0 0.0
    %957 = vmatprep.subr.mxu0 0.0
    %958 = vmatpush1.msra.mxu0 0.0
    %959 = vmatprep.subr.mxu0 0.0
    %960 = vmatpush1.msra.mxu0 0.0
    %961 = vmatprep.subr.mxu0 0.0
    %962 = vmatpush1.msra.mxu0 0.0
    %963 = vmatprep.subr.mxu0 0.0
    %964 = vmatpush1.msra.mxu0 0.0
    %965 = vmatprep.subr.mxu0 0.0
    %966 = vmatpush1.msra.mxu0 0.0
    %967 = vmatprep.subr.mxu0 0.0
    %968 = vmatpush1.msra.mxu0 0.0
    %969 = vmatprep.subr.mxu0 0.0
    %970 = vmatpush1.msra.mxu0 0.0
    %971 = vmatprep.subr.mxu0 0.0
    %972 = vmatpush1.msra.mxu0 0.0
    %973 = vmatprep.subr.mxu0 0.0
    %974 = vmatpush1.msra.mxu0 0.0
    %975 = vmatprep.subr.mxu0 0.0
    %976 = vmatpush1.msra.mxu0 0.0
    %977 = vmatprep.subr.mxu0 0.0
    %978 = vmatpush1.msra.mxu0 0.0
    %979 = vmatprep.subr.mxu0 0.0
    %980 = vmatpush1.msra.mxu0 0.0
    %981 = vmatprep.subr.mxu0 0.0
    %982 = vmatpush1.msra.mxu0 0.0
    %983 = vmatprep.subr.mxu0 0.0
    %984 = vmatpush1.msra.mxu0 0.0
    %985 = vmatprep.subr.mxu0 0.0
    %986 = vmatpush1.msra.mxu0 0.0
    %987 = vmatprep.subr.mxu0 0.0
    %988 = vmatpush1.msra.mxu0 0.0
    %989 = vmatprep.subr.mxu0 0.0
    %990 = vmatpush1.msra.mxu0 0.0
    %991 = vmatprep.subr.mxu0 0.0
    %992 = vmatpush1.msra.mxu0 0.0
    %993 = vmatprep.subr.mxu0 0.0
    %994 = vmatpush1.msra.mxu0 0.0
    %995 = vmatprep.subr.mxu0 0.0
    %996 = vmatpush1.msra.mxu0 0.0
    %997 = vmatprep.subr.mxu0 0.0
    %998 = vmatpush1.msra.mxu0 0.0
    %999 = vmatprep.subr.mxu0 0.0
    %1000 = vmatpush1.msra.mxu0 0.0
    %1001 = vmatprep.subr.mxu0 0.0
    %1002 = vmatpush1.msra.mxu0 0.0
    %1003 = vmatprep.subr.mxu0 0.0
    %1004 = vmatpush1.msra.mxu0 0.0
    %1005 = vmatprep.subr.mxu0 0.0
    %1006 = vmatpush1.msra.mxu0 0.0
    %1007 = vmatprep.subr.mxu0 0.0
    %1008 = vmatpush1.msra.mxu0 0.0
    %1009 = vmatprep.subr.mxu0 0.0
    %1010 = vmatpush1.msra.mxu0 0.0
    %1011 = vmatprep.subr.mxu0 0.0
    %1012 = vmatpush1.msra.mxu0 0.0
    %1013 = vmatprep.subr.mxu0 0.0
    %1014 = vmatpush1.msra.mxu0 0.0
    %1015 = vmatprep.mubr.f32.mxu0 0.0
    %1016 = vmatmul.mubr.f32.gmra.mrb[0].mxu0 %v763
    %v1017 = vpop.f32.mrb[0].mxu0
    %v1018 = vadd.f32 0.0, %v1017
    %v1019 = vpop.f32.mrb[0].mxu0
    %v1020 = vadd.f32 0.0, %v1019
    %1021 = vmatprep.mubr.f32.mxu0 0.0
    %1022 = vmatmul.mubr.f32.gmra.mrb[0].mxu0 %v766
    %v1023 = vpop.f32.mrb[0].mxu0
    %v1024 = vadd.f32 0.0, %v1023
    %v1025 = vpop.f32.mrb[0].mxu0
    %v1026 = vadd.f32 0.0, %v1025
    %1027 = vmatprep.mubr.f32.mxu0 0.0
    %1028 = vmatmul.mubr.f32.gmra.mrb[0].mxu0 %v769
    %v1029 = vpop.f32.mrb[0].mxu0
    %v1030 = vadd.f32 0.0, %v1029
    %v1031 = vpop.f32.mrb[0].mxu0
    %v1032 = vadd.f32 0.0, %v1031
    %1033 = vmatprep.mubr.f32.mxu0 0.0
    %1034 = vmatmul.mubr.f32.gmra.mrb[0].mxu0 %v772
    %v1035 = vpop.f32.mrb[0].mxu0
    %v1036 = vadd.f32 0.0, %v1035
    %v1037 = vpop.f32.mrb[0].mxu0
    %v1038 = vadd.f32 0.0, %v1037
    %1039 = vmatprep.mubr.f32.mxu0 0.0
    %1040 = vmatmul.mubr.f32.gmra.mrb[0].mxu0 %v775
    %v1041 = vpop.f32.mrb[0].mxu0
    %v1042 = vadd.f32 0.0, %v1041
    %v1043 = vpop.f32.mrb[0].mxu0
    %v1044 = vadd.f32 0.0, %v1043
    %1045 = vmatprep.mubr.f32.mxu0 0.0
    %1046 = vmatmul.mubr.f32.gmra.mrb[0].mxu0 %v778
    %v1047 = vpop.f32.mrb[0].mxu0
    %v1048 = vadd.f32 0.0, %v1047
    %v1049 = vpop.f32.mrb[0].mxu0
    %v1050 = vadd.f32 0.0, %v1049
    %1051 = vmatprep.mubr.f32.mxu0 0.0
    %1052 = vmatmul.mubr.f32.gmra.mrb[0].mxu0 %v781
    %v1053 = vpop.f32.mrb[0].mxu0
    %v1054 = vadd.f32 0.0, %v1053
    %v1055 = vpop.f32.mrb[0].mxu0
    %v1056 = vadd.f32 0.0, %v1055
    %1057 = vmatprep.mubr.f32.mxu0 0.0
    %1058 = vmatmul.mubr.f32.gmra.mrb[0].mxu0 %v784
    %v1059 = vpop.f32.mrb[0].mxu0
    %v1060 = vadd.f32 0.0, %v1059
    %v1061 = vpop.f32.mrb[0].mxu0
    %v1062 = vadd.f32 0.0, %v1061
    %1063 = vmatprep.mubr.f32.mxu0 0.0
    %1064 = vmatmul.mubr.f32.gmra.mrb[0].mxu0 %v787
    %v1065 = vpop.f32.mrb[0].mxu0
    %v1066 = vadd.f32 0.0, %v1065
    %v1067 = vpop.f32.mrb[0].mxu0
    %v1068 = vadd.f32 0.0, %v1067
    %1069 = vmatprep.mubr.f32.mxu0 0.0
    %1070 = vmatmul.mubr.f32.gmra.mrb[0].mxu0 %v790
    %v1071 = vpop.f32.mrb[0].mxu0
    %v1072 = vadd.f32 0.0, %v1071
    %v1073 = vpop.f32.mrb[0].mxu0
    %v1074 = vadd.f32 0.0, %v1073
    %1075 = vmatprep.mubr.f32.mxu0 0.0
    %1076 = vmatmul.mubr.f32.gmra.mrb[0].mxu0 %v793
    %v1077 = vpop.f32.mrb[0].mxu0
    %v1078 = vadd.f32 0.0, %v1077
    %v1079 = vpop.f32.mrb[0].mxu0
    %v1080 = vadd.f32 0.0, %v1079
    %1081 = vmatprep.mubr.f32.mxu0 0.0
    %1082 = vmatmul.mubr.f32.gmra.mrb[0].mxu0 %v796
    %v1083 = vpop.f32.mrb[0].mxu0
    %v1084 = vadd.f32 0.0, %v1083
    %v1085 = vpop.f32.mrb[0].mxu0
    %v1086 = vadd.f32 0.0, %v1085
    %1087 = vdwg.mxu0
    %1088 = vmatprep.subr.mxu0 %v808
    %1089 = vmatpush1.msra.mxu0 %v806
    %1090 = vmatprep.subr.mxu0 0.0
    %1091 = vmatpush1.msra.mxu0 0.0
    %1092 = vmatprep.subr.mxu0 0.0
    %1093 = vmatpush1.msra.mxu0 0.0
    %1094 = vmatprep.subr.mxu0 0.0
    %1095 = vmatpush1.msra.mxu0 0.0
    %1096 = vmatprep.subr.mxu0 0.0
    %1097 = vmatpush1.msra.mxu0 0.0
    %1098 = vmatprep.subr.mxu0 0.0
    %1099 = vmatpush1.msra.mxu0 0.0
    %1100 = vmatprep.subr.mxu0 0.0
    %1101 = vmatpush1.msra.mxu0 0.0
    %1102 = vmatprep.subr.mxu0 0.0
    %1103 = vmatpush1.msra.mxu0 0.0
    %1104 = vmatprep.subr.mxu0 0.0
    %1105 = vmatpush1.msra.mxu0 0.0
    %1106 = vmatprep.subr.mxu0 0.0
    %1107 = vmatpush1.msra.mxu0 0.0
    %1108 = vmatprep.subr.mxu0 0.0
    %1109 = vmatpush1.msra.mxu0 0.0
    %1110 = vmatprep.subr.mxu0 0.0
    %1111 = vmatpush1.msra.mxu0 0.0
    %1112 = vmatprep.subr.mxu0 0.0
    %1113 = vmatpush1.msra.mxu0 0.0
    %1114 = vmatprep.subr.mxu0 0.0
    %1115 = vmatpush1.msra.mxu0 0.0
    %1116 = vmatprep.subr.mxu0 0.0
    %1117 = vmatpush1.msra.mxu0 0.0
    %1118 = vmatprep.subr.mxu0 0.0
    %1119 = vmatpush1.msra.mxu0 0.0
    %1120 = vmatprep.subr.mxu0 0.0
    %1121 = vmatpush1.msra.mxu0 0.0
    %1122 = vmatprep.subr.mxu0 0.0
    %1123 = vmatpush1.msra.mxu0 0.0
    %1124 = vmatprep.subr.mxu0 0.0
    %1125 = vmatpush1.msra.mxu0 0.0
    %1126 = vmatprep.subr.mxu0 0.0
    %1127 = vmatpush1.msra.mxu0 0.0
    %1128 = vmatprep.subr.mxu0 0.0
    %1129 = vmatpush1.msra.mxu0 0.0
    %1130 = vmatprep.subr.mxu0 0.0
    %1131 = vmatpush1.msra.mxu0 0.0
    %1132 = vmatprep.subr.mxu0 0.0
    %1133 = vmatpush1.msra.mxu0 0.0
    %1134 = vmatprep.subr.mxu0 0.0
    %1135 = vmatpush1.msra.mxu0 0.0
    %1136 = vmatprep.subr.mxu0 0.0
    %1137 = vmatpush1.msra.mxu0 0.0
    %1138 = vmatprep.subr.mxu0 0.0
    %1139 = vmatpush1.msra.mxu0 0.0
    %1140 = vmatprep.subr.mxu0 0.0
    %1141 = vmatpush1.msra.mxu0 0.0
    %1142 = vmatprep.subr.mxu0 0.0
    %1143 = vmatpush1.msra.mxu0 0.0
    %1144 = vmatprep.subr.mxu0 0.0
    %1145 = vmatpush1.msra.mxu0 0.0
    %1146 = vmatprep.subr.mxu0 0.0
    %1147 = vmatpush1.msra.mxu0 0.0
    %1148 = vmatprep.subr.mxu0 0.0
    %1149 = vmatpush1.msra.mxu0 0.0
    %1150 = vmatprep.subr.mxu0 0.0
    %1151 = vmatpush1.msra.mxu0 0.0
    %1152 = vmatprep.mubr.f32.mxu0 0.0
    %1153 = vmatmul.mubr.f32.gmra.mrb[0].mxu0 %v763
    %v1154 = vpop.f32.mrb[0].mxu0
    %v1155 = vadd.f32 0.0, %v1154
    %v1156 = vpop.f32.mrb[0].mxu0
    %v1157 = vadd.f32 0.0, %v1156
    %1158 = vmatprep.mubr.f32.mxu0 0.0
    %1159 = vmatmul.mubr.f32.gmra.mrb[0].mxu0 %v766
    %v1160 = vpop.f32.mrb[0].mxu0
    %v1161 = vadd.f32 0.0, %v1160
    %v1162 = vpop.f32.mrb[0].mxu0
    %v1163 = vadd.f32 0.0, %v1162
    %1164 = vmatprep.mubr.f32.mxu0 0.0
    %1165 = vmatmul.mubr.f32.gmra.mrb[0].mxu0 %v769
    %v1166 = vpop.f32.mrb[0].mxu0
    %v1167 = vadd.f32 0.0, %v1166
    %v1168 = vpop.f32.mrb[0].mxu0
    %v1169 = vadd.f32 0.0, %v1168
    %1170 = vmatprep.mubr.f32.mxu0 0.0
    %1171 = vmatmul.mubr.f32.gmra.mrb[0].mxu0 %v772
    %v1172 = vpop.f32.mrb[0].mxu0
    %v1173 = vadd.f32 0.0, %v1172
    %v1174 = vpop.f32.mrb[0].mxu0
    %v1175 = vadd.f32 0.0, %v1174
    %1176 = vmatprep.mubr.f32.mxu0 0.0
    %1177 = vmatmul.mubr.f32.gmra.mrb[0].mxu0 %v775
    %v1178 = vpop.f32.mrb[0].mxu0
    %v1179 = vadd.f32 0.0, %v1178
    %v1180 = vpop.f32.mrb[0].mxu0
    %v1181 = vadd.f32 0.0, %v1180
    %1182 = vmatprep.mubr.f32.mxu0 0.0
    %1183 = vmatmul.mubr.f32.gmra.mrb[0].mxu0 %v778
    %v1184 = vpop.f32.mrb[0].mxu0
    %v1185 = vadd.f32 0.0, %v1184
    %v1186 = vpop.f32.mrb[0].mxu0
    %v1187 = vadd.f32 0.0, %v1186
    %1188 = vmatprep.mubr.f32.mxu0 0.0
    %1189 = vmatmul.mubr.f32.gmra.mrb[0].mxu0 %v781
    %v1190 = vpop.f32.mrb[0].mxu0
    %v1191 = vadd.f32 0.0, %v1190
    %v1192 = vpop.f32.mrb[0].mxu0
    %v1193 = vadd.f32 0.0, %v1192
    %1194 = vmatprep.mubr.f32.mxu0 0.0
    %1195 = vmatmul.mubr.f32.gmra.mrb[0].mxu0 %v784
    %v1196 = vpop.f32.mrb[0].mxu0
    %v1197 = vadd.f32 0.0, %v1196
    %v1198 = vpop.f32.mrb[0].mxu0
    %v1199 = vadd.f32 0.0, %v1198
    %1200 = vmatprep.mubr.f32.mxu0 0.0
    %1201 = vmatmul.mubr.f32.gmra.mrb[0].mxu0 %v787
    %v1202 = vpop.f32.mrb[0].mxu0
    %v1203 = vadd.f32 0.0, %v1202
    %v1204 = vpop.f32.mrb[0].mxu0
    %v1205 = vadd.f32 0.0, %v1204
    %1206 = vmatprep.mubr.f32.mxu0 0.0
    %1207 = vmatmul.mubr.f32.gmra.mrb[0].mxu0 %v790
    %v1208 = vpop.f32.mrb[0].mxu0
    %v1209 = vadd.f32 0.0, %v1208
    %v1210 = vpop.f32.mrb[0].mxu0
    %v1211 = vadd.f32 0.0, %v1210
    %1212 = vmatprep.mubr.f32.mxu0 0.0
    %1213 = vmatmul.mubr.f32.gmra.mrb[0].mxu0 %v793
    %v1214 = vpop.f32.mrb[0].mxu0
    %v1215 = vadd.f32 0.0, %v1214
    %v1216 = vpop.f32.mrb[0].mxu0
    %v1217 = vadd.f32 0.0, %v1216
    %1218 = vmatprep.mubr.f32.mxu0 0.0
    %1219 = vmatmul.mubr.f32.gmra.mrb[0].mxu0 %v796
    %v1220 = vpop.f32.mrb[0].mxu0
    %v1221 = vadd.f32 0.0, %v1220
    %v1222 = vpop.f32.mrb[0].mxu0
    %v1223 = vadd.f32 0.0, %v1222
    %1224 = vdwg.mxu0
    %1225 = vmatprep.subr.mxu0 %v812
    %1226 = vmatpush1.msra.mxu0 %v810
    %1227 = vmatprep.subr.mxu0 0.0
    %1228 = vmatpush1.msra.mxu0 0.0
    %1229 = vmatprep.subr.mxu0 0.0
    %1230 = vmatpush1.msra.mxu0 0.0
    %1231 = vmatprep.subr.mxu0 0.0
    %1232 = vmatpush1.msra.mxu0 0.0
    %1233 = vmatprep.subr.mxu0 0.0
    %1234 = vmatpush1.msra.mxu0 0.0
    %1235 = vmatprep.subr.mxu0 0.0
    %1236 = vmatpush1.msra.mxu0 0.0
    %1237 = vmatprep.subr.mxu0 0.0
    %1238 = vmatpush1.msra.mxu0 0.0
    %1239 = vmatprep.subr.mxu0 0.0
    %1240 = vmatpush1.msra.mxu0 0.0
    %1241 = vmatprep.subr.mxu0 0.0
    %1242 = vmatpush1.msra.mxu0 0.0
    %1243 = vmatprep.subr.mxu0 0.0
    %1244 = vmatpush1.msra.mxu0 0.0
    %1245 = vmatprep.subr.mxu0 0.0
    %1246 = vmatpush1.msra.mxu0 0.0
    %1247 = vmatprep.subr.mxu0 0.0
    %1248 = vmatpush1.msra.mxu0 0.0
    %1249 = vmatprep.subr.mxu0 0.0
    %1250 = vmatpush1.msra.mxu0 0.0
    %1251 = vmatprep.subr.mxu0 0.0
    %1252 = vmatpush1.msra.mxu0 0.0
    %1253 = vmatprep.subr.mxu0 0.0
    %1254 = vmatpush1.msra.mxu0 0.0
    %1255 = vmatprep.subr.mxu0 0.0
    %1256 = vmatpush1.msra.mxu0 0.0
    %1257 = vmatprep.subr.mxu0 0.0
    %1258 = vmatpush1.msra.mxu0 0.0
    %1259 = vmatprep.subr.mxu0 0.0
    %1260 = vmatpush1.msra.mxu0 0.0
    %1261 = vmatprep.subr.mxu0 0.0
    %1262 = vmatpush1.msra.mxu0 0.0
    %1263 = vmatprep.subr.mxu0 0.0
    %1264 = vmatpush1.msra.mxu0 0.0
    %1265 = vmatprep.subr.mxu0 0.0
    %1266 = vmatpush1.msra.mxu0 0.0
    %1267 = vmatprep.subr.mxu0 0.0
    %1268 = vmatpush1.msra.mxu0 0.0
    %1269 = vmatprep.subr.mxu0 0.0
    %1270 = vmatpush1.msra.mxu0 0.0
    %1271 = vmatprep.subr.mxu0 0.0
    %1272 = vmatpush1.msra.mxu0 0.0
    %1273 = vmatprep.subr.mxu0 0.0
    %1274 = vmatpush1.msra.mxu0 0.0
    %1275 = vmatprep.subr.mxu0 0.0
    %1276 = vmatpush1.msra.mxu0 0.0
    %1277 = vmatprep.subr.mxu0 0.0
    %1278 = vmatpush1.msra.mxu0 0.0
    %1279 = vmatprep.subr.mxu0 0.0
    %1280 = vmatpush1.msra.mxu0 0.0
    %1281 = vmatprep.subr.mxu0 0.0
    %1282 = vmatpush1.msra.mxu0 0.0
    %1283 = vmatprep.subr.mxu0 0.0
    %1284 = vmatpush1.msra.mxu0 0.0
    %1285 = vmatprep.subr.mxu0 0.0
    %1286 = vmatpush1.msra.mxu0 0.0
    %1287 = vmatprep.subr.mxu0 0.0
    %1288 = vmatpush1.msra.mxu0 0.0
    %1289 = vmatprep.mubr.f32.mxu0 0.0
    %1290 = vmatmul.mubr.f32.gmra.mrb[0].mxu0 %v763
    %v1291 = vpop.f32.mrb[0].mxu0
    %v1292 = vadd.f32 0.0, %v1291
    %v1293 = vpop.f32.mrb[0].mxu0
    %v1294 = vadd.f32 0.0, %v1293
    %1295 = vmatprep.mubr.f32.mxu0 0.0
    %1296 = vmatmul.mubr.f32.gmra.mrb[0].mxu0 %v766
    %v1297 = vpop.f32.mrb[0].mxu0
    %v1298 = vadd.f32 0.0, %v1297
    %v1299 = vpop.f32.mrb[0].mxu0
    %v1300 = vadd.f32 0.0, %v1299
    %1301 = vmatprep.mubr.f32.mxu0 0.0
    %1302 = vmatmul.mubr.f32.gmra.mrb[0].mxu0 %v769
    %v1303 = vpop.f32.mrb[0].mxu0
    %v1304 = vadd.f32 0.0, %v1303
    %v1305 = vpop.f32.mrb[0].mxu0
    %v1306 = vadd.f32 0.0, %v1305
    %1307 = vmatprep.mubr.f32.mxu0 0.0
    %1308 = vmatmul.mubr.f32.gmra.mrb[0].mxu0 %v772
    %v1309 = vpop.f32.mrb[0].mxu0
    %v1310 = vadd.f32 0.0, %v1309
    %v1311 = vpop.f32.mrb[0].mxu0
    %v1312 = vadd.f32 0.0, %v1311
    %1313 = vmatprep.mubr.f32.mxu0 0.0
    %1314 = vmatmul.mubr.f32.gmra.mrb[0].mxu0 %v775
    %v1315 = vpop.f32.mrb[0].mxu0
    %v1316 = vadd.f32 0.0, %v1315
    %v1317 = vpop.f32.mrb[0].mxu0
    %v1318 = vadd.f32 0.0, %v1317
    %1319 = vmatprep.mubr.f32.mxu0 0.0
    %1320 = vmatmul.mubr.f32.gmra.mrb[0].mxu0 %v778
    %v1321 = vpop.f32.mrb[0].mxu0
    %v1322 = vadd.f32 0.0, %v1321
    %v1323 = vpop.f32.mrb[0].mxu0
    %v1324 = vadd.f32 0.0, %v1323
    %1325 = vmatprep.mubr.f32.mxu0 0.0
    %1326 = vmatmul.mubr.f32.gmra.mrb[0].mxu0 %v781
    %v1327 = vpop.f32.mrb[0].mxu0
    %v1328 = vadd.f32 0.0, %v1327
    %v1329 = vpop.f32.mrb[0].mxu0
    %v1330 = vadd.f32 0.0, %v1329
    %1331 = vmatprep.mubr.f32.mxu0 0.0
    %1332 = vmatmul.mubr.f32.gmra.mrb[0].mxu0 %v784
    %v1333 = vpop.f32.mrb[0].mxu0
    %v1334 = vadd.f32 0.0, %v1333
    %v1335 = vpop.f32.mrb[0].mxu0
    %v1336 = vadd.f32 0.0, %v1335
    %1337 = vmatprep.mubr.f32.mxu0 0.0
    %1338 = vmatmul.mubr.f32.gmra.mrb[0].mxu0 %v787
    %v1339 = vpop.f32.mrb[0].mxu0
    %v1340 = vadd.f32 0.0, %v1339
    %v1341 = vpop.f32.mrb[0].mxu0
    %v1342 = vadd.f32 0.0, %v1341
    %1343 = vmatprep.mubr.f32.mxu0 0.0
    %1344 = vmatmul.mubr.f32.gmra.mrb[0].mxu0 %v790
    %v1345 = vpop.f32.mrb[0].mxu0
    %v1346 = vadd.f32 0.0, %v1345
    %v1347 = vpop.f32.mrb[0].mxu0
    %v1348 = vadd.f32 0.0, %v1347
    %1349 = vmatprep.mubr.f32.mxu0 0.0
    %1350 = vmatmul.mubr.f32.gmra.mrb[0].mxu0 %v793
    %v1351 = vpop.f32.mrb[0].mxu0
    %v1352 = vadd.f32 0.0, %v1351
    %v1353 = vpop.f32.mrb[0].mxu0
    %v1354 = vadd.f32 0.0, %v1353
    %1355 = vmatprep.mubr.f32.mxu0 0.0
    %1356 = vmatmul.mubr.f32.gmra.mrb[0].mxu0 %v796
    %v1357 = vpop.f32.mrb[0].mxu0
    %v1358 = vadd.f32 0.0, %v1357
    %v1359 = vpop.f32.mrb[0].mxu0
    %v1360 = vadd.f32 0.0, %v1359
    %1361 = vdwg.mxu0
    %v1366 = vcombine.high %v160, %v160
    %v1367 = vcombine.high %v161, %v161
    %v1368 = vcombine.high %v162, %v162
    %v1369 = vcombine.high %v163, %v163
    %v1371 = vsel %vm240, %v168, 0
    %v1374 = vsel %vm240, %v169, 0
    %v1377 = vsel %vm240, %v170, 0
    %v1380 = vsel %vm240, %v171, 0
    %v1383 = vsel %vm240, %v172, 0
    %v1386 = vsel %vm240, %v173, 0
    %v1389 = vsel %vm240, %v174, 0
    %v1392 = vsel %vm240, %v175, 0
    %v1395 = vsel %vm240, %v176, 0
    %v1398 = vsel %vm240, %v177, 0
    %v1401 = vsel %vm240, %v178, 0
    %v1404 = vsel %vm240, %v179, 0
    %v1406 = vsel %vm253, %v160, 0
    %v1408 = vsel %vm253, %v1366, 0
    %v1410 = vsel %vm253, %v161, 0
    %v1412 = vsel %vm253, %v1367, 0
    %v1414 = vsel %vm253, %v162, 0
    %v1416 = vsel %vm253, %v1368, 0
    %v1418 = vsel %vm253, %v163, 0
    %v1420 = vsel %vm253, %v1369, 0
    %1422 = vmatprep.subr.mxu0 %v1408
    %1423 = vmatpush1.msra.mxu0 %v1406
    %1424 = vmatprep.subr.mxu0 0.0
    %1425 = vmatpush1.msra.mxu0 0.0
    %1426 = vmatprep.subr.mxu0 0.0
    %1427 = vmatpush1.msra.mxu0 0.0
    %1428 = vmatprep.subr.mxu0 0.0
    %1429 = vmatpush1.msra.mxu0 0.0
    %1430 = vmatprep.subr.mxu0 0.0
    %1431 = vmatpush1.msra.mxu0 0.0
    %1432 = vmatprep.subr.mxu0 0.0
    %1433 = vmatpush1.msra.mxu0 0.0
    %1434 = vmatprep.subr.mxu0 0.0
    %1435 = vmatpush1.msra.mxu0 0.0
    %1436 = vmatprep.subr.mxu0 0.0
    %1437 = vmatpush1.msra.mxu0 0.0
    %1438 = vmatprep.subr.mxu0 0.0
    %1439 = vmatpush1.msra.mxu0 0.0
    %1440 = vmatprep.subr.mxu0 0.0
    %1441 = vmatpush1.msra.mxu0 0.0
    %1442 = vmatprep.subr.mxu0 0.0
    %1443 = vmatpush1.msra.mxu0 0.0
    %1444 = vmatprep.subr.mxu0 0.0
    %1445 = vmatpush1.msra.mxu0 0.0
    %1446 = vmatprep.subr.mxu0 0.0
    %1447 = vmatpush1.msra.mxu0 0.0
    %1448 = vmatprep.subr.mxu0 0.0
    %1449 = vmatpush1.msra.mxu0 0.0
    %1450 = vmatprep.subr.mxu0 0.0
    %1451 = vmatpush1.msra.mxu0 0.0
    %1452 = vmatprep.subr.mxu0 0.0
    %1453 = vmatpush1.msra.mxu0 0.0
    %1454 = vmatprep.subr.mxu0 0.0
    %1455 = vmatpush1.msra.mxu0 0.0
    %1456 = vmatprep.subr.mxu0 0.0
    %1457 = vmatpush1.msra.mxu0 0.0
    %1458 = vmatprep.subr.mxu0 0.0
    %1459 = vmatpush1.msra.mxu0 0.0
    %1460 = vmatprep.subr.mxu0 0.0
    %1461 = vmatpush1.msra.mxu0 0.0
    %1462 = vmatprep.subr.mxu0 0.0
    %1463 = vmatpush1.msra.mxu0 0.0
    %1464 = vmatprep.subr.mxu0 0.0
    %1465 = vmatpush1.msra.mxu0 0.0
    %1466 = vmatprep.subr.mxu0 0.0
    %1467 = vmatpush1.msra.mxu0 0.0
    %1468 = vmatprep.subr.mxu0 0.0
    %1469 = vmatpush1.msra.mxu0 0.0
    %1470 = vmatprep.subr.mxu0 0.0
    %1471 = vmatpush1.msra.mxu0 0.0
    %1472 = vmatprep.subr.mxu0 0.0
    %1473 = vmatpush1.msra.mxu0 0.0
    %1474 = vmatprep.subr.mxu0 0.0
    %1475 = vmatpush1.msra.mxu0 0.0
    %1476 = vmatprep.subr.mxu0 0.0
    %1477 = vmatpush1.msra.mxu0 0.0
    %1478 = vmatprep.subr.mxu0 0.0
    %1479 = vmatpush1.msra.mxu0 0.0
    %1480 = vmatprep.subr.mxu0 0.0
    %1481 = vmatpush1.msra.mxu0 0.0
    %1482 = vmatprep.subr.mxu0 0.0
    %1483 = vmatpush1.msra.mxu0 0.0
    %1484 = vmatprep.subr.mxu0 0.0
    %1485 = vmatpush1.msra.mxu0 0.0
    %1486 = vmatprep.mubr.f32.mxu0 0.0
    %1487 = vmatmul.mubr.f32.gmra.mrb[0].mxu0 %v1371
    %v1488 = vpop.f32.mrb[0].mxu0
    %v1489 = vadd.f32 %v881, %v1488
    %v1490 = vpop.f32.mrb[0].mxu0
    %v1491 = vadd.f32 %v883, %v1490
    %1492 = vmatprep.mubr.f32.mxu0 0.0
    %1493 = vmatmul.mubr.f32.gmra.mrb[0].mxu0 %v1374
    %v1494 = vpop.f32.mrb[0].mxu0
    %v1495 = vadd.f32 %v887, %v1494
    %v1496 = vpop.f32.mrb[0].mxu0
    %v1497 = vadd.f32 %v889, %v1496
    %1498 = vmatprep.mubr.f32.mxu0 0.0
    %1499 = vmatmul.mubr.f32.gmra.mrb[0].mxu0 %v1377
    %v1500 = vpop.f32.mrb[0].mxu0
    %v1501 = vadd.f32 %v893, %v1500
    %v1502 = vpop.f32.mrb[0].mxu0
    %v1503 = vadd.f32 %v895, %v1502
    %1504 = vmatprep.mubr.f32.mxu0 0.0
    %1505 = vmatmul.mubr.f32.gmra.mrb[0].mxu0 %v1380
    %v1506 = vpop.f32.mrb[0].mxu0
    %v1507 = vadd.f32 %v899, %v1506
    %v1508 = vpop.f32.mrb[0].mxu0
    %v1509 = vadd.f32 %v901, %v1508
    %1510 = vmatprep.mubr.f32.mxu0 0.0
    %1511 = vmatmul.mubr.f32.gmra.mrb[0].mxu0 %v1383
    %v1512 = vpop.f32.mrb[0].mxu0
    %v1513 = vadd.f32 %v905, %v1512
    %v1514 = vpop.f32.mrb[0].mxu0
    %v1515 = vadd.f32 %v907, %v1514
    %1516 = vmatprep.mubr.f32.mxu0 0.0
    %1517 = vmatmul.mubr.f32.gmra.mrb[0].mxu0 %v1386
    %v1518 = vpop.f32.mrb[0].mxu0
    %v1519 = vadd.f32 %v911, %v1518
    %v1520 = vpop.f32.mrb[0].mxu0
    %v1521 = vadd.f32 %v913, %v1520
    %1522 = vmatprep.mubr.f32.mxu0 0.0
    %1523 = vmatmul.mubr.f32.gmra.mrb[0].mxu0 %v1389
    %v1524 = vpop.f32.mrb[0].mxu0
    %v1525 = vadd.f32 %v917, %v1524
    %v1526 = vpop.f32.mrb[0].mxu0
    %v1527 = vadd.f32 %v919, %v1526
    %1528 = vmatprep.mubr.f32.mxu0 0.0
    %1529 = vmatmul.mubr.f32.gmra.mrb[0].mxu0 %v1392
    %v1530 = vpop.f32.mrb[0].mxu0
    %v1531 = vadd.f32 %v923, %v1530
    %v1532 = vpop.f32.mrb[0].mxu0
    %v1533 = vadd.f32 %v925, %v1532
    %1534 = vmatprep.mubr.f32.mxu0 0.0
    %1535 = vmatmul.mubr.f32.gmra.mrb[0].mxu0 %v1395
    %v1536 = vpop.f32.mrb[0].mxu0
    %v1537 = vadd.f32 %v929, %v1536
    %v1538 = vpop.f32.mrb[0].mxu0
    %v1539 = vadd.f32 %v931, %v1538
    %1540 = vmatprep.mubr.f32.mxu0 0.0
    %1541 = vmatmul.mubr.f32.gmra.mrb[0].mxu0 %v1398
    %v1542 = vpop.f32.mrb[0].mxu0
    %v1543 = vadd.f32 %v935, %v1542
    %v1544 = vpop.f32.mrb[0].mxu0
    %v1545 = vadd.f32 %v937, %v1544
    %1546 = vmatprep.mubr.f32.mxu0 0.0
    %1547 = vmatmul.mubr.f32.gmra.mrb[0].mxu0 %v1401
    %v1548 = vpop.f32.mrb[0].mxu0
    %v1549 = vadd.f32 %v941, %v1548
    %v1550 = vpop.f32.mrb[0].mxu0
    %v1551 = vadd.f32 %v943, %v1550
    %1552 = vmatprep.mubr.f32.mxu0 0.0
    %1553 = vmatmul.mubr.f32.gmra.mrb[0].mxu0 %v1404
    %v1554 = vpop.f32.mrb[0].mxu0
    %v1555 = vadd.f32 %v947, %v1554
    %v1556 = vpop.f32.mrb[0].mxu0
    %v1557 = vadd.f32 %v949, %v1556
    %1558 = vdwg.mxu0
    %1559 = vmatprep.subr.mxu0 %v1412
    %1560 = vmatpush1.msra.mxu0 %v1410
    %1561 = vmatprep.subr.mxu0 0.0
    %1562 = vmatpush1.msra.mxu0 0.0
    %1563 = vmatprep.subr.mxu0 0.0
    %1564 = vmatpush1.msra.mxu0 0.0
    %1565 = vmatprep.subr.mxu0 0.0
    %1566 = vmatpush1.msra.mxu0 0.0
    %1567 = vmatprep.subr.mxu0 0.0
    %1568 = vmatpush1.msra.mxu0 0.0
    %1569 = vmatprep.subr.mxu0 0.0
    %1570 = vmatpush1.msra.mxu0 0.0
    %1571 = vmatprep.subr.mxu0 0.0
    %1572 = vmatpush1.msra.mxu0 0.0
    %1573 = vmatprep.subr.mxu0 0.0
    %1574 = vmatpush1.msra.mxu0 0.0
    %1575 = vmatprep.subr.mxu0 0.0
    %1576 = vmatpush1.msra.mxu0 0.0
    %1577 = vmatprep.subr.mxu0 0.0
    %1578 = vmatpush1.msra.mxu0 0.0
    %1579 = vmatprep.subr.mxu0 0.0
    %1580 = vmatpush1.msra.mxu0 0.0
    %1581 = vmatprep.subr.mxu0 0.0
    %1582 = vmatpush1.msra.mxu0 0.0
    %1583 = vmatprep.subr.mxu0 0.0
    %1584 = vmatpush1.msra.mxu0 0.0
    %1585 = vmatprep.subr.mxu0 0.0
    %1586 = vmatpush1.msra.mxu0 0.0
    %1587 = vmatprep.subr.mxu0 0.0
    %1588 = vmatpush1.msra.mxu0 0.0
    %1589 = vmatprep.subr.mxu0 0.0
    %1590 = vmatpush1.msra.mxu0 0.0
    %1591 = vmatprep.subr.mxu0 0.0
    %1592 = vmatpush1.msra.mxu0 0.0
    %1593 = vmatprep.subr.mxu0 0.0
    %1594 = vmatpush1.msra.mxu0 0.0
    %1595 = vmatprep.subr.mxu0 0.0
    %1596 = vmatpush1.msra.mxu0 0.0
    %1597 = vmatprep.subr.mxu0 0.0
    %1598 = vmatpush1.msra.mxu0 0.0
    %1599 = vmatprep.subr.mxu0 0.0
    %1600 = vmatpush1.msra.mxu0 0.0
    %1601 = vmatprep.subr.mxu0 0.0
    %1602 = vmatpush1.msra.mxu0 0.0
    %1603 = vmatprep.subr.mxu0 0.0
    %1604 = vmatpush1.msra.mxu0 0.0
    %1605 = vmatprep.subr.mxu0 0.0
    %1606 = vmatpush1.msra.mxu0 0.0
    %1607 = vmatprep.subr.mxu0 0.0
    %1608 = vmatpush1.msra.mxu0 0.0
    %1609 = vmatprep.subr.mxu0 0.0
    %1610 = vmatpush1.msra.mxu0 0.0
    %1611 = vmatprep.subr.mxu0 0.0
    %1612 = vmatpush1.msra.mxu0 0.0
    %1613 = vmatprep.subr.mxu0 0.0
    %1614 = vmatpush1.msra.mxu0 0.0
    %1615 = vmatprep.subr.mxu0 0.0
    %1616 = vmatpush1.msra.mxu0 0.0
    %1617 = vmatprep.subr.mxu0 0.0
    %1618 = vmatpush1.msra.mxu0 0.0
    %1619 = vmatprep.subr.mxu0 0.0
    %1620 = vmatpush1.msra.mxu0 0.0
    %1621 = vmatprep.subr.mxu0 0.0
    %1622 = vmatpush1.msra.mxu0 0.0
    %1623 = vmatprep.mubr.f32.mxu0 0.0
    %1624 = vmatmul.mubr.f32.gmra.mrb[0].mxu0 %v1371
    %v1625 = vpop.f32.mrb[0].mxu0
    %v1626 = vadd.f32 %v1018, %v1625
    %v1627 = vpop.f32.mrb[0].mxu0
    %v1628 = vadd.f32 %v1020, %v1627
    %1629 = vmatprep.mubr.f32.mxu0 0.0
    %1630 = vmatmul.mubr.f32.gmra.mrb[0].mxu0 %v1374
    %v1631 = vpop.f32.mrb[0].mxu0
    %v1632 = vadd.f32 %v1024, %v1631
    %v1633 = vpop.f32.mrb[0].mxu0
    %v1634 = vadd.f32 %v1026, %v1633
    %1635 = vmatprep.mubr.f32.mxu0 0.0
    %1636 = vmatmul.mubr.f32.gmra.mrb[0].mxu0 %v1377
    %v1637 = vpop.f32.mrb[0].mxu0
    %v1638 = vadd.f32 %v1030, %v1637
    %v1639 = vpop.f32.mrb[0].mxu0
    %v1640 = vadd.f32 %v1032, %v1639
    %1641 = vmatprep.mubr.f32.mxu0 0.0
    %1642 = vmatmul.mubr.f32.gmra.mrb[0].mxu0 %v1380
    %v1643 = vpop.f32.mrb[0].mxu0
    %v1644 = vadd.f32 %v1036, %v1643
    %v1645 = vpop.f32.mrb[0].mxu0
    %v1646 = vadd.f32 %v1038, %v1645
    %1647 = vmatprep.mubr.f32.mxu0 0.0
    %1648 = vmatmul.mubr.f32.gmra.mrb[0].mxu0 %v1383
    %v1649 = vpop.f32.mrb[0].mxu0
    %v1650 = vadd.f32 %v1042, %v1649
    %v1651 = vpop.f32.mrb[0].mxu0
    %v1652 = vadd.f32 %v1044, %v1651
    %1653 = vmatprep.mubr.f32.mxu0 0.0
    %1654 = vmatmul.mubr.f32.gmra.mrb[0].mxu0 %v1386
    %v1655 = vpop.f32.mrb[0].mxu0
    %v1656 = vadd.f32 %v1048, %v1655
    %v1657 = vpop.f32.mrb[0].mxu0
    %v1658 = vadd.f32 %v1050, %v1657
    %1659 = vmatprep.mubr.f32.mxu0 0.0
    %1660 = vmatmul.mubr.f32.gmra.mrb[0].mxu0 %v1389
    %v1661 = vpop.f32.mrb[0].mxu0
    %v1662 = vadd.f32 %v1054, %v1661
    %v1663 = vpop.f32.mrb[0].mxu0
    %v1664 = vadd.f32 %v1056, %v1663
    %1665 = vmatprep.mubr.f32.mxu0 0.0
    %1666 = vmatmul.mubr.f32.gmra.mrb[0].mxu0 %v1392
    %v1667 = vpop.f32.mrb[0].mxu0
    %v1668 = vadd.f32 %v1060, %v1667
    %v1669 = vpop.f32.mrb[0].mxu0
    %v1670 = vadd.f32 %v1062, %v1669
    %1671 = vmatprep.mubr.f32.mxu0 0.0
    %1672 = vmatmul.mubr.f32.gmra.mrb[0].mxu0 %v1395
    %v1673 = vpop.f32.mrb[0].mxu0
    %v1674 = vadd.f32 %v1066, %v1673
    %v1675 = vpop.f32.mrb[0].mxu0
    %v1676 = vadd.f32 %v1068, %v1675
    %1677 = vmatprep.mubr.f32.mxu0 0.0
    %1678 = vmatmul.mubr.f32.gmra.mrb[0].mxu0 %v1398
    %v1679 = vpop.f32.mrb[0].mxu0
    %v1680 = vadd.f32 %v1072, %v1679
    %v1681 = vpop.f32.mrb[0].mxu0
    %v1682 = vadd.f32 %v1074, %v1681
    %1683 = vmatprep.mubr.f32.mxu0 0.0
    %1684 = vmatmul.mubr.f32.gmra.mrb[0].mxu0 %v1401
    %v1685 = vpop.f32.mrb[0].mxu0
    %v1686 = vadd.f32 %v1078, %v1685
    %v1687 = vpop.f32.mrb[0].mxu0
    %v1688 = vadd.f32 %v1080, %v1687
    %1689 = vmatprep.mubr.f32.mxu0 0.0
    %1690 = vmatmul.mubr.f32.gmra.mrb[0].mxu0 %v1404
    %v1691 = vpop.f32.mrb[0].mxu0
    %v1692 = vadd.f32 %v1084, %v1691
    %v1693 = vpop.f32.mrb[0].mxu0
    %v1694 = vadd.f32 %v1086, %v1693
    %1695 = vdwg.mxu0
    %1696 = vmatprep.subr.mxu0 %v1416
    %1697 = vmatpush1.msra.mxu0 %v1414
    %1698 = vmatprep.subr.mxu0 0.0
    %1699 = vmatpush1.msra.mxu0 0.0
    %1700 = vmatprep.subr.mxu0 0.0
    %1701 = vmatpush1.msra.mxu0 0.0
    %1702 = vmatprep.subr.mxu0 0.0
    %1703 = vmatpush1.msra.mxu0 0.0
    %1704 = vmatprep.subr.mxu0 0.0
    %1705 = vmatpush1.msra.mxu0 0.0
    %1706 = vmatprep.subr.mxu0 0.0
    %1707 = vmatpush1.msra.mxu0 0.0
    %1708 = vmatprep.subr.mxu0 0.0
    %1709 = vmatpush1.msra.mxu0 0.0
    %1710 = vmatprep.subr.mxu0 0.0
    %1711 = vmatpush1.msra.mxu0 0.0
    %1712 = vmatprep.subr.mxu0 0.0
    %1713 = vmatpush1.msra.mxu0 0.0
    %1714 = vmatprep.subr.mxu0 0.0
    %1715 = vmatpush1.msra.mxu0 0.0
    %1716 = vmatprep.subr.mxu0 0.0
    %1717 = vmatpush1.msra.mxu0 0.0
    %1718 = vmatprep.subr.mxu0 0.0
    %1719 = vmatpush1.msra.mxu0 0.0
    %1720 = vmatprep.subr.mxu0 0.0
    %1721 = vmatpush1.msra.mxu0 0.0
    %1722 = vmatprep.subr.mxu0 0.0
    %1723 = vmatpush1.msra.mxu0 0.0
    %1724 = vmatprep.subr.mxu0 0.0
    %1725 = vmatpush1.msra.mxu0 0.0
    %1726 = vmatprep.subr.mxu0 0.0
    %1727 = vmatpush1.msra.mxu0 0.0
    %1728 = vmatprep.subr.mxu0 0.0
    %1729 = vmatpush1.msra.mxu0 0.0
    %1730 = vmatprep.subr.mxu0 0.0
    %1731 = vmatpush1.msra.mxu0 0.0
    %1732 = vmatprep.subr.mxu0 0.0
    %1733 = vmatpush1.msra.mxu0 0.0
    %1734 = vmatprep.subr.mxu0 0.0
    %1735 = vmatpush1.msra.mxu0 0.0
    %1736 = vmatprep.subr.mxu0 0.0
    %1737 = vmatpush1.msra.mxu0 0.0
    %1738 = vmatprep.subr.mxu0 0.0
    %1739 = vmatpush1.msra.mxu0 0.0
    %1740 = vmatprep.subr.mxu0 0.0
    %1741 = vmatpush1.msra.mxu0 0.0
    %1742 = vmatprep.subr.mxu0 0.0
    %1743 = vmatpush1.msra.mxu0 0.0
    %1744 = vmatprep.subr.mxu0 0.0
    %1745 = vmatpush1.msra.mxu0 0.0
    %1746 = vmatprep.subr.mxu0 0.0
    %1747 = vmatpush1.msra.mxu0 0.0
    %1748 = vmatprep.subr.mxu0 0.0
    %1749 = vmatpush1.msra.mxu0 0.0
    %1750 = vmatprep.subr.mxu0 0.0
    %1751 = vmatpush1.msra.mxu0 0.0
    %1752 = vmatprep.subr.mxu0 0.0
    %1753 = vmatpush1.msra.mxu0 0.0
    %1754 = vmatprep.subr.mxu0 0.0
    %1755 = vmatpush1.msra.mxu0 0.0
    %1756 = vmatprep.subr.mxu0 0.0
    %1757 = vmatpush1.msra.mxu0 0.0
    %1758 = vmatprep.subr.mxu0 0.0
    %1759 = vmatpush1.msra.mxu0 0.0
    %1760 = vmatprep.mubr.f32.mxu0 0.0
    %1761 = vmatmul.mubr.f32.gmra.mrb[0].mxu0 %v1371
    %v1762 = vpop.f32.mrb[0].mxu0
    %v1763 = vadd.f32 %v1155, %v1762
    %v1764 = vpop.f32.mrb[0].mxu0
    %v1765 = vadd.f32 %v1157, %v1764
    %1766 = vmatprep.mubr.f32.mxu0 0.0
    %1767 = vmatmul.mubr.f32.gmra.mrb[0].mxu0 %v1374
    %v1768 = vpop.f32.mrb[0].mxu0
    %v1769 = vadd.f32 %v1161, %v1768
    %v1770 = vpop.f32.mrb[0].mxu0
    %v1771 = vadd.f32 %v1163, %v1770
    %1772 = vmatprep.mubr.f32.mxu0 0.0
    %1773 = vmatmul.mubr.f32.gmra.mrb[0].mxu0 %v1377
    %v1774 = vpop.f32.mrb[0].mxu0
    %v1775 = vadd.f32 %v1167, %v1774
    %v1776 = vpop.f32.mrb[0].mxu0
    %v1777 = vadd.f32 %v1169, %v1776
    %1778 = vmatprep.mubr.f32.mxu0 0.0
    %1779 = vmatmul.mubr.f32.gmra.mrb[0].mxu0 %v1380
    %v1780 = vpop.f32.mrb[0].mxu0
    %v1781 = vadd.f32 %v1173, %v1780
    %v1782 = vpop.f32.mrb[0].mxu0
    %v1783 = vadd.f32 %v1175, %v1782
    %1784 = vmatprep.mubr.f32.mxu0 0.0
    %1785 = vmatmul.mubr.f32.gmra.mrb[0].mxu0 %v1383
    %v1786 = vpop.f32.mrb[0].mxu0
    %v1787 = vadd.f32 %v1179, %v1786
    %v1788 = vpop.f32.mrb[0].mxu0
    %v1789 = vadd.f32 %v1181, %v1788
    %1790 = vmatprep.mubr.f32.mxu0 0.0
    %1791 = vmatmul.mubr.f32.gmra.mrb[0].mxu0 %v1386
    %v1792 = vpop.f32.mrb[0].mxu0
    %v1793 = vadd.f32 %v1185, %v1792
    %v1794 = vpop.f32.mrb[0].mxu0
    %v1795 = vadd.f32 %v1187, %v1794
    %1796 = vmatprep.mubr.f32.mxu0 0.0
    %1797 = vmatmul.mubr.f32.gmra.mrb[0].mxu0 %v1389
    %v1798 = vpop.f32.mrb[0].mxu0
    %v1799 = vadd.f32 %v1191, %v1798
    %v1800 = vpop.f32.mrb[0].mxu0
    %v1801 = vadd.f32 %v1193, %v1800
    %1802 = vmatprep.mubr.f32.mxu0 0.0
    %1803 = vmatmul.mubr.f32.gmra.mrb[0].mxu0 %v1392
    %v1804 = vpop.f32.mrb[0].mxu0
    %v1805 = vadd.f32 %v1197, %v1804
    %v1806 = vpop.f32.mrb[0].mxu0
    %v1807 = vadd.f32 %v1199, %v1806
    %1808 = vmatprep.mubr.f32.mxu0 0.0
    %1809 = vmatmul.mubr.f32.gmra.mrb[0].mxu0 %v1395
    %v1810 = vpop.f32.mrb[0].mxu0
    %v1811 = vadd.f32 %v1203, %v1810
    %v1812 = vpop.f32.mrb[0].mxu0
    %v1813 = vadd.f32 %v1205, %v1812
    %1814 = vmatprep.mubr.f32.mxu0 0.0
    %1815 = vmatmul.mubr.f32.gmra.mrb[0].mxu0 %v1398
    %v1816 = vpop.f32.mrb[0].mxu0
    %v1817 = vadd.f32 %v1209, %v1816
    %v1818 = vpop.f32.mrb[0].mxu0
    %v1819 = vadd.f32 %v1211, %v1818
    %1820 = vmatprep.mubr.f32.mxu0 0.0
    %1821 = vmatmul.mubr.f32.gmra.mrb[0].mxu0 %v1401
    %v1822 = vpop.f32.mrb[0].mxu0
    %v1823 = vadd.f32 %v1215, %v1822
    %v1824 = vpop.f32.mrb[0].mxu0
    %v1825 = vadd.f32 %v1217, %v1824
    %1826 = vmatprep.mubr.f32.mxu0 0.0
    %1827 = vmatmul.mubr.f32.gmra.mrb[0].mxu0 %v1404
    %v1828 = vpop.f32.mrb[0].mxu0
    %v1829 = vadd.f32 %v1221, %v1828
    %v1830 = vpop.f32.mrb[0].mxu0
    %v1831 = vadd.f32 %v1223, %v1830
    %1832 = vdwg.mxu0
    %1833 = vmatprep.subr.mxu0 %v1420
    %1834 = vmatpush1.msra.mxu0 %v1418
    %1835 = vmatprep.subr.mxu0 0.0
    %1836 = vmatpush1.msra.mxu0 0.0
    %1837 = vmatprep.subr.mxu0 0.0
    %1838 = vmatpush1.msra.mxu0 0.0
    %1839 = vmatprep.subr.mxu0 0.0
    %1840 = vmatpush1.msra.mxu0 0.0
    %1841 = vmatprep.subr.mxu0 0.0
    %1842 = vmatpush1.msra.mxu0 0.0
    %1843 = vmatprep.subr.mxu0 0.0
    %1844 = vmatpush1.msra.mxu0 0.0
    %1845 = vmatprep.subr.mxu0 0.0
    %1846 = vmatpush1.msra.mxu0 0.0
    %1847 = vmatprep.subr.mxu0 0.0
    %1848 = vmatpush1.msra.mxu0 0.0
    %1849 = vmatprep.subr.mxu0 0.0
    %1850 = vmatpush1.msra.mxu0 0.0
    %1851 = vmatprep.subr.mxu0 0.0
    %1852 = vmatpush1.msra.mxu0 0.0
    %1853 = vmatprep.subr.mxu0 0.0
    %1854 = vmatpush1.msra.mxu0 0.0
    %1855 = vmatprep.subr.mxu0 0.0
    %1856 = vmatpush1.msra.mxu0 0.0
    %1857 = vmatprep.subr.mxu0 0.0
    %1858 = vmatpush1.msra.mxu0 0.0
    %1859 = vmatprep.subr.mxu0 0.0
    %1860 = vmatpush1.msra.mxu0 0.0
    %1861 = vmatprep.subr.mxu0 0.0
    %1862 = vmatpush1.msra.mxu0 0.0
    %1863 = vmatprep.subr.mxu0 0.0
    %1864 = vmatpush1.msra.mxu0 0.0
    %1865 = vmatprep.subr.mxu0 0.0
    %1866 = vmatpush1.msra.mxu0 0.0
    %1867 = vmatprep.subr.mxu0 0.0
    %1868 = vmatpush1.msra.mxu0 0.0
    %1869 = vmatprep.subr.mxu0 0.0
    %1870 = vmatpush1.msra.mxu0 0.0
    %1871 = vmatprep.subr.mxu0 0.0
    %1872 = vmatpush1.msra.mxu0 0.0
    %1873 = vmatprep.subr.mxu0 0.0
    %1874 = vmatpush1.msra.mxu0 0.0
    %1875 = vmatprep.subr.mxu0 0.0
    %1876 = vmatpush1.msra.mxu0 0.0
    %1877 = vmatprep.subr.mxu0 0.0
    %1878 = vmatpush1.msra.mxu0 0.0
    %1879 = vmatprep.subr.mxu0 0.0
    %1880 = vmatpush1.msra.mxu0 0.0
    %1881 = vmatprep.subr.mxu0 0.0
    %1882 = vmatpush1.msra.mxu0 0.0
    %1883 = vmatprep.subr.mxu0 0.0
    %1884 = vmatpush1.msra.mxu0 0.0
    %1885 = vmatprep.subr.mxu0 0.0
    %1886 = vmatpush1.msra.mxu0 0.0
    %1887 = vmatprep.subr.mxu0 0.0
    %1888 = vmatpush1.msra.mxu0 0.0
    %1889 = vmatprep.subr.mxu0 0.0
    %1890 = vmatpush1.msra.mxu0 0.0
    %1891 = vmatprep.subr.mxu0 0.0
    %1892 = vmatpush1.msra.mxu0 0.0
    %1893 = vmatprep.subr.mxu0 0.0
    %1894 = vmatpush1.msra.mxu0 0.0
    %1895 = vmatprep.subr.mxu0 0.0
    %1896 = vmatpush1.msra.mxu0 0.0
    %1897 = vmatprep.mubr.f32.mxu0 0.0
    %1898 = vmatmul.mubr.f32.gmra.mrb[0].mxu0 %v1371
    %v1899 = vpop.f32.mrb[0].mxu0
    %v1900 = vadd.f32 %v1292, %v1899
    %v1901 = vpop.f32.mrb[0].mxu0
    %v1902 = vadd.f32 %v1294, %v1901
    %1903 = vmatprep.mubr.f32.mxu0 0.0
    %1904 = vmatmul.mubr.f32.gmra.mrb[0].mxu0 %v1374
    %v1905 = vpop.f32.mrb[0].mxu0
    %v1906 = vadd.f32 %v1298, %v1905
    %v1907 = vpop.f32.mrb[0].mxu0
    %v1908 = vadd.f32 %v1300, %v1907
    %1909 = vmatprep.mubr.f32.mxu0 0.0
    %1910 = vmatmul.mubr.f32.gmra.mrb[0].mxu0 %v1377
    %v1911 = vpop.f32.mrb[0].mxu0
    %v1912 = vadd.f32 %v1304, %v1911
    %v1913 = vpop.f32.mrb[0].mxu0
    %v1914 = vadd.f32 %v1306, %v1913
    %1915 = vmatprep.mubr.f32.mxu0 0.0
    %1916 = vmatmul.mubr.f32.gmra.mrb[0].mxu0 %v1380
    %v1917 = vpop.f32.mrb[0].mxu0
    %v1918 = vadd.f32 %v1310, %v1917
    %v1919 = vpop.f32.mrb[0].mxu0
    %v1920 = vadd.f32 %v1312, %v1919
    %1921 = vmatprep.mubr.f32.mxu0 0.0
    %1922 = vmatmul.mubr.f32.gmra.mrb[0].mxu0 %v1383
    %v1923 = vpop.f32.mrb[0].mxu0
    %v1924 = vadd.f32 %v1316, %v1923
    %v1925 = vpop.f32.mrb[0].mxu0
    %v1926 = vadd.f32 %v1318, %v1925
    %1927 = vmatprep.mubr.f32.mxu0 0.0
    %1928 = vmatmul.mubr.f32.gmra.mrb[0].mxu0 %v1386
    %v1929 = vpop.f32.mrb[0].mxu0
    %v1930 = vadd.f32 %v1322, %v1929
    %v1931 = vpop.f32.mrb[0].mxu0
    %v1932 = vadd.f32 %v1324, %v1931
    %1933 = vmatprep.mubr.f32.mxu0 0.0
    %1934 = vmatmul.mubr.f32.gmra.mrb[0].mxu0 %v1389
    %v1935 = vpop.f32.mrb[0].mxu0
    %v1936 = vadd.f32 %v1328, %v1935
    %v1937 = vpop.f32.mrb[0].mxu0
    %v1938 = vadd.f32 %v1330, %v1937
    %1939 = vmatprep.mubr.f32.mxu0 0.0
    %1940 = vmatmul.mubr.f32.gmra.mrb[0].mxu0 %v1392
    %v1941 = vpop.f32.mrb[0].mxu0
    %v1942 = vadd.f32 %v1334, %v1941
    %v1943 = vpop.f32.mrb[0].mxu0
    %v1944 = vadd.f32 %v1336, %v1943
    %1945 = vmatprep.mubr.f32.mxu0 0.0
    %1946 = vmatmul.mubr.f32.gmra.mrb[0].mxu0 %v1395
    %v1947 = vpop.f32.mrb[0].mxu0
    %v1948 = vadd.f32 %v1340, %v1947
    %v1949 = vpop.f32.mrb[0].mxu0
    %v1950 = vadd.f32 %v1342, %v1949
    %1951 = vmatprep.mubr.f32.mxu0 0.0
    %1952 = vmatmul.mubr.f32.gmra.mrb[0].mxu0 %v1398
    %v1953 = vpop.f32.mrb[0].mxu0
    %v1954 = vadd.f32 %v1346, %v1953
    %v1955 = vpop.f32.mrb[0].mxu0
    %v1956 = vadd.f32 %v1348, %v1955
    %1957 = vmatprep.mubr.f32.mxu0 0.0
    %1958 = vmatmul.mubr.f32.gmra.mrb[0].mxu0 %v1401
    %v1959 = vpop.f32.mrb[0].mxu0
    %v1960 = vadd.f32 %v1352, %v1959
    %v1961 = vpop.f32.mrb[0].mxu0
    %v1962 = vadd.f32 %v1354, %v1961
    %1963 = vmatprep.mubr.f32.mxu0 0.0
    %1964 = vmatmul.mubr.f32.gmra.mrb[0].mxu0 %v1404
    %v1965 = vpop.f32.mrb[0].mxu0
    %v1966 = vadd.f32 %v1358, %v1965
    %v1967 = vpop.f32.mrb[0].mxu0
    %v1968 = vadd.f32 %v1360, %v1967
    %1969 = vdwg.mxu0
    %1971 = vset.pattern.permute.xlu0 0
    %1972 = vperm.xlu0 %1971, %v196
    %v1973 = vpop.permute.xlu0 %1972
    %1976 = vset.pattern.permute.xlu0 0
    %1977 = vperm.xlu0 %1976, %v197
    %v1978 = vpop.permute.xlu0 %1977
    %1981 = vset.pattern.permute.xlu0 0
    %1982 = vperm.xlu0 %1981, %v198
    %v1983 = vpop.permute.xlu0 %1982
    %1986 = vset.pattern.permute.xlu0 0
    %1987 = vperm.xlu0 %1986, %v199
    %v1988 = vpop.permute.xlu0 %1987
    %1991 = vset.pattern.permute.xlu0 0
    %1992 = vperm.xlu0 %1991, %v200
    %v1993 = vpop.permute.xlu0 %1992
    %1996 = vset.pattern.permute.xlu0 0
    %1997 = vperm.xlu0 %1996, %v201
    %v1998 = vpop.permute.xlu0 %1997
    %2001 = vset.pattern.permute.xlu0 0
    %2002 = vperm.xlu0 %2001, %v202
    %v2003 = vpop.permute.xlu0 %2002
    %2006 = vset.pattern.permute.xlu0 0
    %2007 = vperm.xlu0 %2006, %v203
    %v2008 = vpop.permute.xlu0 %2007
    %2011 = vset.pattern.permute.xlu0 0
    %2012 = vperm.xlu0 %2011, %v204
    %v2013 = vpop.permute.xlu0 %2012
    %2016 = vset.pattern.permute.xlu0 0
    %2017 = vperm.xlu0 %2016, %v205
    %v2018 = vpop.permute.xlu0 %2017
    %2021 = vset.pattern.permute.xlu0 0
    %2022 = vperm.xlu0 %2021, %v206
    %v2023 = vpop.permute.xlu0 %2022
    %2026 = vset.pattern.permute.xlu0 0
    %2027 = vperm.xlu0 %2026, %v207
    %v2028 = vpop.permute.xlu0 %2027
    %v2030 = vadd.f32 %v1489, %v1973
    %v2031 = vadd.f32 %v1491, %v1973
    %v2032 = vadd.f32 %v1626, %v1973
    %v2033 = vadd.f32 %v1628, %v1973
    %v2034 = vadd.f32 %v1763, %v1973
    %v2035 = vadd.f32 %v1765, %v1973
    %v2036 = vadd.f32 %v1900, %v1973
    %v2037 = vadd.f32 %v1902, %v1973
    %v2038 = vadd.f32 %v1495, %v1978
    %v2039 = vadd.f32 %v1497, %v1978
    %v2040 = vadd.f32 %v1632, %v1978
    %v2041 = vadd.f32 %v1634, %v1978
    %v2042 = vadd.f32 %v1769, %v1978
    %v2043 = vadd.f32 %v1771, %v1978
    %v2044 = vadd.f32 %v1906, %v1978
    %v2045 = vadd.f32 %v1908, %v1978
    %v2046 = vadd.f32 %v1501, %v1983
    %v2047 = vadd.f32 %v1503, %v1983
    %v2048 = vadd.f32 %v1638, %v1983
    %v2049 = vadd.f32 %v1640, %v1983
    %v2050 = vadd.f32 %v1775, %v1983
    %v2051 = vadd.f32 %v1777, %v1983
    %v2052 = vadd.f32 %v1912, %v1983
    %v2053 = vadd.f32 %v1914, %v1983
    %v2054 = vadd.f32 %v1507, %v1988
    %v2055 = vadd.f32 %v1509, %v1988
    %v2056 = vadd.f32 %v1644, %v1988
    %v2057 = vadd.f32 %v1646, %v1988
    %v2058 = vadd.f32 %v1781, %v1988
    %v2059 = vadd.f32 %v1783, %v1988
    %v2060 = vadd.f32 %v1918, %v1988
    %v2061 = vadd.f32 %v1920, %v1988
    %v2062 = vadd.f32 %v1513, %v1993
    %v2063 = vadd.f32 %v1515, %v1993
    %v2064 = vadd.f32 %v1650, %v1993
    %v2065 = vadd.f32 %v1652, %v1993
    %v2066 = vadd.f32 %v1787, %v1993
    %v2067 = vadd.f32 %v1789, %v1993
    %v2068 = vadd.f32 %v1924, %v1993
    %v2069 = vadd.f32 %v1926, %v1993
    %v2070 = vadd.f32 %v1519, %v1998
    %v2071 = vadd.f32 %v1521, %v1998
    %v2072 = vadd.f32 %v1656, %v1998
    %v2073 = vadd.f32 %v1658, %v1998
    %v2074 = vadd.f32 %v1793, %v1998
    %v2075 = vadd.f32 %v1795, %v1998
    %v2076 = vadd.f32 %v1930, %v1998
    %v2077 = vadd.f32 %v1932, %v1998
    %v2078 = vadd.f32 %v1525, %v2003
    %v2079 = vadd.f32 %v1527, %v2003
    %v2080 = vadd.f32 %v1662, %v2003
    %v2081 = vadd.f32 %v1664, %v2003
    %v2082 = vadd.f32 %v1799, %v2003
    %v2083 = vadd.f32 %v1801, %v2003
    %v2084 = vadd.f32 %v1936, %v2003
    %v2085 = vadd.f32 %v1938, %v2003
    %v2086 = vadd.f32 %v1531, %v2008
    %v2087 = vadd.f32 %v1533, %v2008
    %v2088 = vadd.f32 %v1668, %v2008
    %v2089 = vadd.f32 %v1670, %v2008
    %v2090 = vadd.f32 %v1805, %v2008
    %v2091 = vadd.f32 %v1807, %v2008
    %v2092 = vadd.f32 %v1942, %v2008
    %v2093 = vadd.f32 %v1944, %v2008
    %v2094 = vadd.f32 %v1537, %v2013
    %v2095 = vadd.f32 %v1539, %v2013
    %v2096 = vadd.f32 %v1674, %v2013
    %v2097 = vadd.f32 %v1676, %v2013
    %v2098 = vadd.f32 %v1811, %v2013
    %v2099 = vadd.f32 %v1813, %v2013
    %v2100 = vadd.f32 %v1948, %v2013
    %v2101 = vadd.f32 %v1950, %v2013
    %v2102 = vadd.f32 %v1543, %v2018
    %v2103 = vadd.f32 %v1545, %v2018
    %v2104 = vadd.f32 %v1680, %v2018
    %v2105 = vadd.f32 %v1682, %v2018
    %v2106 = vadd.f32 %v1817, %v2018
    %v2107 = vadd.f32 %v1819, %v2018
    %v2108 = vadd.f32 %v1954, %v2018
    %v2109 = vadd.f32 %v1956, %v2018
    %v2110 = vadd.f32 %v1549, %v2023
    %v2111 = vadd.f32 %v1551, %v2023
    %v2112 = vadd.f32 %v1686, %v2023
    %v2113 = vadd.f32 %v1688, %v2023
    %v2114 = vadd.f32 %v1823, %v2023
    %v2115 = vadd.f32 %v1825, %v2023
    %v2116 = vadd.f32 %v1960, %v2023
    %v2117 = vadd.f32 %v1962, %v2023
    %v2118 = vadd.f32 %v1555, %v2028
    %v2119 = vadd.f32 %v1557, %v2028
    %v2120 = vadd.f32 %v1692, %v2028
    %v2121 = vadd.f32 %v1694, %v2028
    %v2122 = vadd.f32 %v1829, %v2028
    %v2123 = vadd.f32 %v1831, %v2028
    %v2124 = vadd.f32 %v1966, %v2028
    %v2125 = vadd.f32 %v1968, %v2028
    %2126 = vst [vmem:[#allocation4] sm:$0xff] %v2030
    %2127 = vst [vmem:[#allocation4 + $0x8] sm:$0xff] %v2038
    %2128 = vst [vmem:[#allocation4 + $0x10] sm:$0xff] %v2046
    %2129 = vst [vmem:[#allocation4 + $0x18] sm:$0xff] %v2054
    %2130 = vst [vmem:[#allocation4 + $0x20] sm:$0xff] %v2062
    %2131 = vst [vmem:[#allocation4 + $0x28] sm:$0xff] %v2070
    %2132 = vst [vmem:[#allocation4 + $0x30] sm:$0xff] %v2078
    %2133 = vst [vmem:[#allocation4 + $0x38] sm:$0xff] %v2086
    %2134 = vst [vmem:[#allocation4 + $0x40] sm:$0xff] %v2094
    %2135 = vst [vmem:[#allocation4 + $0x48] sm:$0xff] %v2102
    %2136 = vst [vmem:[#allocation4 + $0x50] sm:$0xff] %v2110
    %2137 = vst [vmem:[#allocation4 + $0x58] sm:$0xff] %v2118
    %2138 = vst [vmem:[#allocation5] sm:$0xff] %v691
    %2139 = vst [vmem:[#allocation5 + $0x8] sm:$0xff] %v707
    %2140 = vst [vmem:[#allocation5 + $0x10] sm:$0xff] %v723
    %2141 = vst [vmem:[#allocation5 + $0x18] sm:$0xff] %v739
    %s2142 = scalar_lea.vmem [#allocation4], 96
    %2143 = vst [vmem:[%s2142] sm:$0xff] %v2031
    %2144 = vst [vmem:[%s2142 + $0x8] sm:$0xff] %v2039
    %2145 = vst [vmem:[%s2142 + $0x10] sm:$0xff] %v2047
    %2146 = vst [vmem:[%s2142 + $0x18] sm:$0xff] %v2055
    %2147 = vst [vmem:[%s2142 + $0x20] sm:$0xff] %v2063
    %2148 = vst [vmem:[%s2142 + $0x28] sm:$0xff] %v2071
    %2149 = vst [vmem:[%s2142 + $0x30] sm:$0xff] %v2079
    %2150 = vst [vmem:[%s2142 + $0x38] sm:$0xff] %v2087
    %2151 = vst [vmem:[%s2142 + $0x40] sm:$0xff] %v2095
    %2152 = vst [vmem:[%s2142 + $0x48] sm:$0xff] %v2103
    %2153 = vst [vmem:[%s2142 + $0x50] sm:$0xff] %v2111
    %2154 = vst [vmem:[%s2142 + $0x58] sm:$0xff] %v2119
    %s2155 = scalar_lea.vmem [#allocation5], 32
    %2156 = vst [vmem:[%s2155] sm:$0xff] %v693
    %2157 = vst [vmem:[%s2155 + $0x8] sm:$0xff] %v709
    %2158 = vst [vmem:[%s2155 + $0x10] sm:$0xff] %v725
    %2159 = vst [vmem:[%s2155 + $0x18] sm:$0xff] %v741
    %s2160 = scalar_lea.vmem [#allocation4], 192
    %2161 = vst [vmem:[%s2160] sm:$0xff] %v2032
    %2162 = vst [vmem:[%s2160 + $0x8] sm:$0xff] %v2040
    %2163 = vst [vmem:[%s2160 + $0x10] sm:$0xff] %v2048
    %2164 = vst [vmem:[%s2160 + $0x18] sm:$0xff] %v2056
    %2165 = vst [vmem:[%s2160 + $0x20] sm:$0xff] %v2064
    %2166 = vst [vmem:[%s2160 + $0x28] sm:$0xff] %v2072
    %2167 = vst [vmem:[%s2160 + $0x30] sm:$0xff] %v2080
    %2168 = vst [vmem:[%s2160 + $0x38] sm:$0xff] %v2088
    %2169 = vst [vmem:[%s2160 + $0x40] sm:$0xff] %v2096
    %2170 = vst [vmem:[%s2160 + $0x48] sm:$0xff] %v2104
    %2171 = vst [vmem:[%s2160 + $0x50] sm:$0xff] %v2112
    %2172 = vst [vmem:[%s2160 + $0x58] sm:$0xff] %v2120
    %s2173 = scalar_lea.vmem [#allocation5], 64
    %2174 = vst [vmem:[%s2173] sm:$0xff] %v695
    %2175 = vst [vmem:[%s2173 + $0x8] sm:$0xff] %v711
    %2176 = vst [vmem:[%s2173 + $0x10] sm:$0xff] %v727
    %2177 = vst [vmem:[%s2173 + $0x18] sm:$0xff] %v743
    %s2178 = scalar_lea.vmem [#allocation4], 288
    %2179 = vst [vmem:[%s2178] sm:$0xff] %v2033
    %2180 = vst [vmem:[%s2178 + $0x8] sm:$0xff] %v2041
    %2181 = vst [vmem:[%s2178 + $0x10] sm:$0xff] %v2049
    %2182 = vst [vmem:[%s2178 + $0x18] sm:$0xff] %v2057
    %2183 = vst [vmem:[%s2178 + $0x20] sm:$0xff] %v2065
    %2184 = vst [vmem:[%s2178 + $0x28] sm:$0xff] %v2073
    %2185 = vst [vmem:[%s2178 + $0x30] sm:$0xff] %v2081
    %2186 = vst [vmem:[%s2178 + $0x38] sm:$0xff] %v2089
    %2187 = vst [vmem:[%s2178 + $0x40] sm:$0xff] %v2097
    %2188 = vst [vmem:[%s2178 + $0x48] sm:$0xff] %v2105
    %2189 = vst [vmem:[%s2178 + $0x50] sm:$0xff] %v2113
    %2190 = vst [vmem:[%s2178 + $0x58] sm:$0xff] %v2121
    %s2191 = scalar_lea.vmem [#allocation5], 96
    %2192 = vst [vmem:[%s2191] sm:$0xff] %v697
    %2193 = vst [vmem:[%s2191 + $0x8] sm:$0xff] %v713
    %2194 = vst [vmem:[%s2191 + $0x10] sm:$0xff] %v729
    %2195 = vst [vmem:[%s2191 + $0x18] sm:$0xff] %v745
    %s2196 = scalar_lea.vmem [#allocation4], 384
    %2197 = vst [vmem:[%s2196] sm:$0xff] %v2034
    %2198 = vst [vmem:[%s2196 + $0x8] sm:$0xff] %v2042
    %2199 = vst [vmem:[%s2196 + $0x10] sm:$0xff] %v2050
    %2200 = vst [vmem:[%s2196 + $0x18] sm:$0xff] %v2058
    %2201 = vst [vmem:[%s2196 + $0x20] sm:$0xff] %v2066
    %2202 = vst [vmem:[%s2196 + $0x28] sm:$0xff] %v2074
    %2203 = vst [vmem:[%s2196 + $0x30] sm:$0xff] %v2082
    %2204 = vst [vmem:[%s2196 + $0x38] sm:$0xff] %v2090
    %2205 = vst [vmem:[%s2196 + $0x40] sm:$0xff] %v2098
    %2206 = vst [vmem:[%s2196 + $0x48] sm:$0xff] %v2106
    %2207 = vst [vmem:[%s2196 + $0x50] sm:$0xff] %v2114
    %2208 = vst [vmem:[%s2196 + $0x58] sm:$0xff] %v2122
    %s2209 = scalar_lea.vmem [#allocation5], 128
    %2210 = vst [vmem:[%s2209] sm:$0xff] %v699
    %2211 = vst [vmem:[%s2209 + $0x8] sm:$0xff] %v715
    %2212 = vst [vmem:[%s2209 + $0x10] sm:$0xff] %v731
    %2213 = vst [vmem:[%s2209 + $0x18] sm:$0xff] %v747
    %s2214 = scalar_lea.vmem [#allocation4], 480
    %2215 = vst [vmem:[%s2214] sm:$0xff] %v2035
    %2216 = vst [vmem:[%s2214 + $0x8] sm:$0xff] %v2043
    %2217 = vst [vmem:[%s2214 + $0x10] sm:$0xff] %v2051
    %2218 = vst [vmem:[%s2214 + $0x18] sm:$0xff] %v2059
    %2219 = vst [vmem:[%s2214 + $0x20] sm:$0xff] %v2067
    %2220 = vst [vmem:[%s2214 + $0x28] sm:$0xff] %v2075
    %2221 = vst [vmem:[%s2214 + $0x30] sm:$0xff] %v2083
    %2222 = vst [vmem:[%s2214 + $0x38] sm:$0xff] %v2091
    %2223 = vst [vmem:[%s2214 + $0x40] sm:$0xff] %v2099
    %2224 = vst [vmem:[%s2214 + $0x48] sm:$0xff] %v2107
    %2225 = vst [vmem:[%s2214 + $0x50] sm:$0xff] %v2115
    %2226 = vst [vmem:[%s2214 + $0x58] sm:$0xff] %v2123
    %s2227 = scalar_lea.vmem [#allocation5], 160
    %2228 = vst [vmem:[%s2227] sm:$0xff] %v701
    %2229 = vst [vmem:[%s2227 + $0x8] sm:$0xff] %v717
    %2230 = vst [vmem:[%s2227 + $0x10] sm:$0xff] %v733
    %2231 = vst [vmem:[%s2227 + $0x18] sm:$0xff] %v749
    %s2232 = scalar_lea.vmem [#allocation4], 576
    %2233 = vst [vmem:[%s2232] sm:$0xff] %v2036
    %2234 = vst [vmem:[%s2232 + $0x8] sm:$0xff] %v2044
    %2235 = vst [vmem:[%s2232 + $0x10] sm:$0xff] %v2052
    %2236 = vst [vmem:[%s2232 + $0x18] sm:$0xff] %v2060
    %2237 = vst [vmem:[%s2232 + $0x20] sm:$0xff] %v2068
    %2238 = vst [vmem:[%s2232 + $0x28] sm:$0xff] %v2076
    %2239 = vst [vmem:[%s2232 + $0x30] sm:$0xff] %v2084
    %2240 = vst [vmem:[%s2232 + $0x38] sm:$0xff] %v2092
    %2241 = vst [vmem:[%s2232 + $0x40] sm:$0xff] %v2100
    %2242 = vst [vmem:[%s2232 + $0x48] sm:$0xff] %v2108
    %2243 = vst [vmem:[%s2232 + $0x50] sm:$0xff] %v2116
    %2244 = vst [vmem:[%s2232 + $0x58] sm:$0xff] %v2124
    %s2245 = scalar_lea.vmem [#allocation5], 192
    %2246 = vst [vmem:[%s2245] sm:$0xff] %v703
    %2247 = vst [vmem:[%s2245 + $0x8] sm:$0xff] %v719
    %2248 = vst [vmem:[%s2245 + $0x10] sm:$0xff] %v735
    %2249 = vst [vmem:[%s2245 + $0x18] sm:$0xff] %v751
    %s2250 = scalar_lea.vmem [#allocation4], 672
    %2251 = vst [vmem:[%s2250] sm:$0xff] %v2037
    %2252 = vst [vmem:[%s2250 + $0x8] sm:$0xff] %v2045
    %2253 = vst [vmem:[%s2250 + $0x10] sm:$0xff] %v2053
    %2254 = vst [vmem:[%s2250 + $0x18] sm:$0xff] %v2061
    %2255 = vst [vmem:[%s2250 + $0x20] sm:$0xff] %v2069
    %2256 = vst [vmem:[%s2250 + $0x28] sm:$0xff] %v2077
    %2257 = vst [vmem:[%s2250 + $0x30] sm:$0xff] %v2085
    %2258 = vst [vmem:[%s2250 + $0x38] sm:$0xff] %v2093
    %2259 = vst [vmem:[%s2250 + $0x40] sm:$0xff] %v2101
    %2260 = vst [vmem:[%s2250 + $0x48] sm:$0xff] %v2109
    %2261 = vst [vmem:[%s2250 + $0x50] sm:$0xff] %v2117
    %2262 = vst [vmem:[%s2250 + $0x58] sm:$0xff] %v2125
    %s2263 = scalar_lea.vmem [#allocation5], 224
    %2264 = vst [vmem:[%s2263] sm:$0xff] %v705
    %2265 = vst [vmem:[%s2263 + $0x8] sm:$0xff] %v721
    %2266 = vst [vmem:[%s2263 + $0x10] sm:$0xff] %v737
    %2267 = vst [vmem:[%s2263 + $0x18] sm:$0xff] %v753
    %v2268 = vld [vmem:[%s9] sm:$0xff]
    %v2269 = vld [vmem:[%s9 + $0x8] sm:$0xff]
    %v2270 = vld [vmem:[%s9 + $0x10] sm:$0xff]
    %v2271 = vld [vmem:[%s9 + $0x18] sm:$0xff]
    %v2272 = vld [vmem:[%s9 + $0x20] sm:$0xff]
    %v2273 = vld [vmem:[%s9 + $0x28] sm:$0xff]
    %v2274 = vld [vmem:[%s9 + $0x30] sm:$0xff]
    %v2275 = vld [vmem:[%s9 + $0x38] sm:$0xff]
    %v2276 = vld [vmem:[%s9 + $0x40] sm:$0xff]
    %v2277 = vld [vmem:[%s9 + $0x48] sm:$0xff]
    %v2278 = vld [vmem:[%s9 + $0x50] sm:$0xff]
    %v2279 = vld [vmem:[%s9 + $0x58] sm:$0xff]
    %2281 = vset.pattern.permute.xlu0 0
    %2282 = vperm.xlu0 %2281, %v208
    %v2283 = vpop.permute.xlu0 %2282
    %2286 = vset.pattern.permute.xlu0 0
    %2287 = vperm.xlu0 %2286, %v209
    %v2288 = vpop.permute.xlu0 %2287
    %2291 = vset.pattern.permute.xlu0 0
    %2292 = vperm.xlu0 %2291, %v210
    %v2293 = vpop.permute.xlu0 %2292
    %2296 = vset.pattern.permute.xlu0 0
    %2297 = vperm.xlu0 %2296, %v211
    %v2298 = vpop.permute.xlu0 %2297
    %v2300 = vld [vmem:[%s4] sm:$0x1]
    %s2301 = smul.u32 0, 8
    %v2302 = vld [vmem:[#allocation2] sm:$0xff]
    %v2303 = vld [vmem:[#allocation2 + $0x8] sm:$0xff]
    %v2304 = vld [vmem:[#allocation2 + $0x10] sm:$0xff]
    %v2305 = vld [vmem:[#allocation2 + $0x18] sm:$0xff]
    %v2306 = vld [vmem:[#allocation3] sm:$0xff]
    %v2307 = vld [vmem:[#allocation3 + $0x8] sm:$0xff]
    %v2308 = vld [vmem:[#allocation3 + $0x10] sm:$0xff]
    %v2309 = vld [vmem:[#allocation3 + $0x18] sm:$0xff]
    %v2310 = vld [vmem:[#allocation4] sm:$0xff]
    %v2311 = vld [vmem:[#allocation4 + $0x8] sm:$0xff]
    %v2312 = vld [vmem:[#allocation4 + $0x10] sm:$0xff]
    %v2313 = vld [vmem:[#allocation4 + $0x18] sm:$0xff]
    %v2314 = vld [vmem:[#allocation4 + $0x20] sm:$0xff]
    %v2315 = vld [vmem:[#allocation4 + $0x28] sm:$0xff]
    %v2316 = vld [vmem:[#allocation4 + $0x30] sm:$0xff]
    %v2317 = vld [vmem:[#allocation4 + $0x38] sm:$0xff]
    %v2318 = vld [vmem:[#allocation4 + $0x40] sm:$0xff]
    %v2319 = vld [vmem:[#allocation4 + $0x48] sm:$0xff]
    %v2320 = vld [vmem:[#allocation4 + $0x50] sm:$0xff]
    %v2321 = vld [vmem:[#allocation4 + $0x58] sm:$0xff]
    %v2322 = vld [vmem:[#allocation5] sm:$0xff]
    %v2323 = vld [vmem:[#allocation5 + $0x8] sm:$0xff]
    %v2324 = vld [vmem:[#allocation5 + $0x10] sm:$0xff]
    %v2325 = vld [vmem:[#allocation5 + $0x18] sm:$0xff]
    %v2326 = vmul.f32 %v2322, %v2302
    %v2327 = vmul.f32 %v2323, %v2303
    %v2328 = vmul.f32 %v2324, %v2304
    %v2329 = vmul.f32 %v2325, %v2305
    %vm2330 = vcmask 261120
    %v2332 = vsel %vm2330, %v2268, 0
    %v2335 = vsel %vm2330, %v2269, 0
    %v2338 = vsel %vm2330, %v2270, 0
    %v2341 = vsel %vm2330, %v2271, 0
    %v2344 = vsel %vm2330, %v2272, 0
    %v2347 = vsel %vm2330, %v2273, 0
    %v2350 = vsel %vm2330, %v2274, 0
    %v2353 = vsel %vm2330, %v2275, 0
    %v2356 = vsel %vm2330, %v2276, 0
    %v2359 = vsel %vm2330, %v2277, 0
    %v2362 = vsel %vm2330, %v2278, 0
    %v2365 = vsel %vm2330, %v2279, 0
    %2367 = vmatprep.subr.mxu0 0.0
    %2368 = vmatpush1.msra.mxu0 %v2326
    %2369 = vmatprep.subr.mxu0 0.0
    %2370 = vmatpush1.msra.mxu0 %v2327
    %2371 = vmatprep.subr.mxu0 0.0
    %2372 = vmatpush1.msra.mxu0 %v2328
    %2373 = vmatprep.subr.mxu0 0.0
    %2374 = vmatpush1.msra.mxu0 %v2329
    %2375 = vmatprep.subr.mxu0 0.0
    %2376 = vmatpush1.msra.mxu0 0.0
    %2377 = vmatprep.subr.mxu0 0.0
    %2378 = vmatpush1.msra.mxu0 0.0
    %2379 = vmatprep.subr.mxu0 0.0
    %2380 = vmatpush1.msra.mxu0 0.0
    %2381 = vmatprep.subr.mxu0 0.0
    %2382 = vmatpush1.msra.mxu0 0.0
    %2383 = vmatprep.subr.mxu0 0.0
    %2384 = vmatpush1.msra.mxu0 0.0
    %2385 = vmatprep.subr.mxu0 0.0
    %2386 = vmatpush1.msra.mxu0 0.0
    %2387 = vmatprep.subr.mxu0 0.0
    %2388 = vmatpush1.msra.mxu0 0.0
    %2389 = vmatprep.subr.mxu0 0.0
    %2390 = vmatpush1.msra.mxu0 0.0
    %2391 = vmatprep.subr.mxu0 0.0
    %2392 = vmatpush1.msra.mxu0 0.0
    %2393 = vmatprep.subr.mxu0 0.0
    %2394 = vmatpush1.msra.mxu0 0.0
    %2395 = vmatprep.subr.mxu0 0.0
    %2396 = vmatpush1.msra.mxu0 0.0
    %2397 = vmatprep.subr.mxu0 0.0
    %2398 = vmatpush1.msra.mxu0 0.0
    %2399 = vmatprep.subr.mxu0 0.0
    %2400 = vmatpush1.msra.mxu0 0.0
    %2401 = vmatprep.subr.mxu0 0.0
    %2402 = vmatpush1.msra.mxu0 0.0
    %2403 = vmatprep.subr.mxu0 0.0
    %2404 = vmatpush1.msra.mxu0 0.0
    %2405 = vmatprep.subr.mxu0 0.0
    %2406 = vmatpush1.msra.mxu0 0.0
    %2407 = vmatprep.subr.mxu0 0.0
    %2408 = vmatpush1.msra.mxu0 0.0
    %2409 = vmatprep.subr.mxu0 0.0
    %2410 = vmatpush1.msra.mxu0 0.0
    %2411 = vmatprep.subr.mxu0 0.0
    %2412 = vmatpush1.msra.mxu0 0.0
    %2413 = vmatprep.subr.mxu0 0.0
    %2414 = vmatpush1.msra.mxu0 0.0
    %2415 = vmatprep.subr.mxu0 0.0
    %2416 = vmatpush1.msra.mxu0 0.0
    %2417 = vmatprep.subr.mxu0 0.0
    %2418 = vmatpush1.msra.mxu0 0.0
    %2419 = vmatprep.subr.mxu0 0.0
    %2420 = vmatpush1.msra.mxu0 0.0
    %2421 = vmatprep.subr.mxu0 0.0
    %2422 = vmatpush1.msra.mxu0 0.0
    %2423 = vmatprep.subr.mxu0 0.0
    %2424 = vmatpush1.msra.mxu0 0.0
    %2425 = vmatprep.subr.mxu0 0.0
    %2426 = vmatpush1.msra.mxu0 0.0
    %2427 = vmatprep.subr.mxu0 0.0
    %2428 = vmatpush1.msra.mxu0 0.0
    %2429 = vmatprep.subr.mxu0 0.0
    %2430 = vmatpush1.msra.mxu0 0.0
    %2431 = vmatprep.mubr.f32.mxu0 0.0
    %2432 = vmatmul.mubr.f32.gmra.mrb[0].mxu0 %v2332
    %v2433 = vpop.f32.mrb[0].mxu0
    %v2434 = vadd.f32 0.0, %v2433
    %v2435 = vpop.f32.mrb[0].mxu0
    %2436 = vmatprep.mubr.f32.mxu0 0.0
    %2437 = vmatmul.mubr.f32.gmra.mrb[0].mxu0 %v2335
    %v2438 = vpop.f32.mrb[0].mxu0
    %v2439 = vadd.f32 0.0, %v2438
    %v2440 = vpop.f32.mrb[0].mxu0
    %2441 = vmatprep.mubr.f32.mxu0 0.0
    %2442 = vmatmul.mubr.f32.gmra.mrb[0].mxu0 %v2338
    %v2443 = vpop.f32.mrb[0].mxu0
    %v2444 = vadd.f32 0.0, %v2443
    %v2445 = vpop.f32.mrb[0].mxu0
    %2446 = vmatprep.mubr.f32.mxu0 0.0
    %2447 = vmatmul.mubr.f32.gmra.mrb[0].mxu0 %v2341
    %v2448 = vpop.f32.mrb[0].mxu0
    %v2449 = vadd.f32 0.0, %v2448
    %v2450 = vpop.f32.mrb[0].mxu0
    %2451 = vmatprep.mubr.f32.mxu0 0.0
    %2452 = vmatmul.mubr.f32.gmra.mrb[0].mxu0 %v2344
    %v2453 = vpop.f32.mrb[0].mxu0
    %v2454 = vadd.f32 0.0, %v2453
    %v2455 = vpop.f32.mrb[0].mxu0
    %2456 = vmatprep.mubr.f32.mxu0 0.0
    %2457 = vmatmul.mubr.f32.gmra.mrb[0].mxu0 %v2347
    %v2458 = vpop.f32.mrb[0].mxu0
    %v2459 = vadd.f32 0.0, %v2458
    %v2460 = vpop.f32.mrb[0].mxu0
    %2461 = vmatprep.mubr.f32.mxu0 0.0
    %2462 = vmatmul.mubr.f32.gmra.mrb[0].mxu0 %v2350
    %v2463 = vpop.f32.mrb[0].mxu0
    %v2464 = vadd.f32 0.0, %v2463
    %v2465 = vpop.f32.mrb[0].mxu0
    %2466 = vmatprep.mubr.f32.mxu0 0.0
    %2467 = vmatmul.mubr.f32.gmra.mrb[0].mxu0 %v2353
    %v2468 = vpop.f32.mrb[0].mxu0
    %v2469 = vadd.f32 0.0, %v2468
    %v2470 = vpop.f32.mrb[0].mxu0
    %2471 = vmatprep.mubr.f32.mxu0 0.0
    %2472 = vmatmul.mubr.f32.gmra.mrb[0].mxu0 %v2356
    %v2473 = vpop.f32.mrb[0].mxu0
    %v2474 = vadd.f32 0.0, %v2473
    %v2475 = vpop.f32.mrb[0].mxu0
    %2476 = vmatprep.mubr.f32.mxu0 0.0
    %2477 = vmatmul.mubr.f32.gmra.mrb[0].mxu0 %v2359
    %v2478 = vpop.f32.mrb[0].mxu0
    %v2479 = vadd.f32 0.0, %v2478
    %v2480 = vpop.f32.mrb[0].mxu0
    %2481 = vmatprep.mubr.f32.mxu0 0.0
    %2482 = vmatmul.mubr.f32.gmra.mrb[0].mxu0 %v2362
    %v2483 = vpop.f32.mrb[0].mxu0
    %v2484 = vadd.f32 0.0, %v2483
    %v2485 = vpop.f32.mrb[0].mxu0
    %2486 = vmatprep.mubr.f32.mxu0 0.0
    %2487 = vmatmul.mubr.f32.gmra.mrb[0].mxu0 %v2365
    %v2488 = vpop.f32.mrb[0].mxu0
    %v2489 = vadd.f32 0.0, %v2488
    %v2490 = vpop.f32.mrb[0].mxu0
    %2491 = vdwg.mxu0
    %v2492 = vadd.f32 %v2310, %v2434
    %v2493 = vadd.f32 %v2311, %v2439
    %v2494 = vadd.f32 %v2312, %v2444
    %v2495 = vadd.f32 %v2313, %v2449
    %v2496 = vxor.u32 %v2492, 2147483648
    %v2497 = vxor.u32 %v2493, 2147483648
    %v2498 = vxor.u32 %v2494, 2147483648
    %v2499 = vxor.u32 %v2495, 2147483648
    %v2500 = vmul.f32 %v2496, 1.442695
    %v2501 = vpow.pop %v2500
    %v2502 = vmul.f32 %v2497, 1.442695
    %v2503 = vpow.pop %v2502
    %v2504 = vmul.f32 %v2498, 1.442695
    %v2505 = vpow.pop %v2504
    %v2506 = vmul.f32 %v2499, 1.442695
    %v2507 = vpow.pop %v2506
    %v2508 = vadd.f32 %v2501, 1.0
    %v2509 = vadd.f32 %v2503, 1.0
    %v2510 = vadd.f32 %v2505, 1.0
    %v2511 = vadd.f32 %v2507, 1.0
    %v2512 = vrcp.pop %v2508
    %v2513 = vmul.f32 1.0, %v2512
    %v2514 = vrcp.pop %v2509
    %v2515 = vmul.f32 1.0, %v2514
    %v2516 = vrcp.pop %v2510
    %v2517 = vmul.f32 1.0, %v2516
    %v2518 = vrcp.pop %v2511
    %v2519 = vmul.f32 1.0, %v2518
    %v2520 = vadd.f32 %v2314, %v2454
    %v2521 = vadd.f32 %v2315, %v2459
    %v2522 = vadd.f32 %v2316, %v2464
    %v2523 = vadd.f32 %v2317, %v2469
    %v2524 = vxor.u32 %v2520, 2147483648
    %v2525 = vxor.u32 %v2521, 2147483648
    %v2526 = vxor.u32 %v2522, 2147483648
    %v2527 = vxor.u32 %v2523, 2147483648
    %v2528 = vmul.f32 %v2524, 1.442695
    %v2529 = vpow.pop %v2528
    %v2530 = vmul.f32 %v2525, 1.442695
    %v2531 = vpow.pop %v2530
    %v2532 = vmul.f32 %v2526, 1.442695
    %v2533 = vpow.pop %v2532
    %v2534 = vmul.f32 %v2527, 1.442695
    %v2535 = vpow.pop %v2534
    %v2536 = vadd.f32 %v2529, 1.0
    %v2537 = vadd.f32 %v2531, 1.0
    %v2538 = vadd.f32 %v2533, 1.0
    %v2539 = vadd.f32 %v2535, 1.0
    %v2540 = vrcp.pop %v2536
    %v2541 = vmul.f32 1.0, %v2540
    %v2542 = vrcp.pop %v2537
    %v2543 = vmul.f32 1.0, %v2542
    %v2544 = vrcp.pop %v2538
    %v2545 = vmul.f32 1.0, %v2544
    %v2546 = vrcp.pop %v2539
    %v2547 = vmul.f32 1.0, %v2546
    %v2548 = vadd.f32 %v2474, %v2283
    %v2549 = vadd.f32 %v2479, %v2288
    %v2550 = vadd.f32 %v2484, %v2293
    %v2551 = vadd.f32 %v2489, %v2298
    %v2552 = vmul.f32 %v2513, %v2548
    %v2553 = vmul.f32 %v2515, %v2549
    %v2554 = vmul.f32 %v2517, %v2550
    %v2555 = vmul.f32 %v2519, %v2551
    %v2556 = vadd.f32 %v2318, %v2552
    %v2557 = vadd.f32 %v2319, %v2553
    %v2558 = vadd.f32 %v2320, %v2554
    %v2559 = vadd.f32 %v2321, %v2555
    %v2560 = vtanh.pop %v2556
    %v2561 = vtanh.pop %v2557
    %v2562 = vtanh.pop %v2558
    %v2563 = vtanh.pop %v2559
    %v2564 = vsub.f32 1.0, %v2541
    %v2565 = vsub.f32 1.0, %v2543
    %v2566 = vsub.f32 1.0, %v2545
    %v2567 = vsub.f32 1.0, %v2547
    %v2568 = vmul.f32 %v2564, %v2560
    %v2569 = vmul.f32 %v2565, %v2561
    %v2570 = vmul.f32 %v2566, %v2562
    %v2571 = vmul.f32 %v2567, %v2563
    %v2572 = vmul.f32 %v2541, %v2326
    %v2573 = vmul.f32 %v2543, %v2327
    %v2574 = vmul.f32 %v2545, %v2328
    %v2575 = vmul.f32 %v2547, %v2329
    %v2576 = vadd.f32 %v2568, %v2572
    %v2577 = vadd.f32 %v2569, %v2573
    %v2578 = vadd.f32 %v2570, %v2574
    %v2579 = vadd.f32 %v2571, %v2575
    %v2580 = vstv %s2301
    %vm2581 = vcmp.eq.s32.totalorder %v2300, %v2580
    %v2582 = vsel %vm2581, 1, 0
    %v2583 = vlaneseq
    %v2584 = vshrl.u32 %v2583, 7
    %v2585 = vsub.s32 0, %v2584
    %v2586 = vrot.slane %v2582, %v2585
    %vm2587 = vcmp.eq.s32.totalorder %v2586, 1
    %v2588 = vsel %vm2587, %v2576, %v2306
    %v2589 = vsel %vm2587, %v2577, %v2307
    %v2590 = vsel %vm2587, %v2578, %v2308
    %v2591 = vsel %vm2587, %v2579, %v2309
    %v2592 = vld [vmem:[%s2142] sm:$0xff]
    %v2593 = vld [vmem:[%s2142 + $0x8] sm:$0xff]
    %v2594 = vld [vmem:[%s2142 + $0x10] sm:$0xff]
    %v2595 = vld [vmem:[%s2142 + $0x18] sm:$0xff]
    %v2596 = vld [vmem:[%s2142 + $0x20] sm:$0xff]
    %v2597 = vld [vmem:[%s2142 + $0x28] sm:$0xff]
    %v2598 = vld [vmem:[%s2142 + $0x30] sm:$0xff]
    %v2599 = vld [vmem:[%s2142 + $0x38] sm:$0xff]
    %v2600 = vld [vmem:[%s2142 + $0x40] sm:$0xff]
    %v2601 = vld [vmem:[%s2142 + $0x48] sm:$0xff]
    %v2602 = vld [vmem:[%s2142 + $0x50] sm:$0xff]
    %v2603 = vld [vmem:[%s2142 + $0x58] sm:$0xff]
    %v2604 = vld [vmem:[%s2155] sm:$0xff]
    %v2605 = vld [vmem:[%s2155 + $0x8] sm:$0xff]
    %v2606 = vld [vmem:[%s2155 + $0x10] sm:$0xff]
    %v2607 = vld [vmem:[%s2155 + $0x18] sm:$0xff]
    %v2608 = vmul.f32 %v2604, %v2576
    %v2609 = vmul.f32 %v2605, %v2577
    %v2610 = vmul.f32 %v2606, %v2578
    %v2611 = vmul.f32 %v2607, %v2579
    %2612 = vmatprep.subr.mxu0 0.0
    %2613 = vmatpush1.msra.mxu0 %v2608
    %2614 = vmatprep.subr.mxu0 0.0
    %2615 = vmatpush1.msra.mxu0 %v2609
    %2616 = vmatprep.subr.mxu0 0.0
    %2617 = vmatpush1.msra.mxu0 %v2610
    %2618 = vmatprep.subr.mxu0 0.0
    %2619 = vmatpush1.msra.mxu0 %v2611
    %2620 = vmatprep.subr.mxu0 0.0
    %2621 = vmatpush1.msra.mxu0 0.0
    %2622 = vmatprep.subr.mxu0 0.0
    %2623 = vmatpush1.msra.mxu0 0.0
    %2624 = vmatprep.subr.mxu0 0.0
    %2625 = vmatpush1.msra.mxu0 0.0
    %2626 = vmatprep.subr.mxu0 0.0
    %2627 = vmatpush1.msra.mxu0 0.0
    %2628 = vmatprep.subr.mxu0 0.0
    %2629 = vmatpush1.msra.mxu0 0.0
    %2630 = vmatprep.subr.mxu0 0.0
    %2631 = vmatpush1.msra.mxu0 0.0
    %2632 = vmatprep.subr.mxu0 0.0
    %2633 = vmatpush1.msra.mxu0 0.0
    %2634 = vmatprep.subr.mxu0 0.0
    %2635 = vmatpush1.msra.mxu0 0.0
    %2636 = vmatprep.subr.mxu0 0.0
    %2637 = vmatpush1.msra.mxu0 0.0
    %2638 = vmatprep.subr.mxu0 0.0
    %2639 = vmatpush1.msra.mxu0 0.0
    %2640 = vmatprep.subr.mxu0 0.0
    %2641 = vmatpush1.msra.mxu0 0.0
    %2642 = vmatprep.subr.mxu0 0.0
    %2643 = vmatpush1.msra.mxu0 0.0
    %2644 = vmatprep.subr.mxu0 0.0
    %2645 = vmatpush1.msra.mxu0 0.0
    %2646 = vmatprep.subr.mxu0 0.0
    %2647 = vmatpush1.msra.mxu0 0.0
    %2648 = vmatprep.subr.mxu0 0.0
    %2649 = vmatpush1.msra.mxu0 0.0
    %2650 = vmatprep.subr.mxu0 0.0
    %2651 = vmatpush1.msra.mxu0 0.0
    %2652 = vmatprep.subr.mxu0 0.0
    %2653 = vmatpush1.msra.mxu0 0.0
    %2654 = vmatprep.subr.mxu0 0.0
    %2655 = vmatpush1.msra.mxu0 0.0
    %2656 = vmatprep.subr.mxu0 0.0
    %2657 = vmatpush1.msra.mxu0 0.0
    %2658 = vmatprep.subr.mxu0 0.0
    %2659 = vmatpush1.msra.mxu0 0.0
    %2660 = vmatprep.subr.mxu0 0.0
    %2661 = vmatpush1.msra.mxu0 0.0
    %2662 = vmatprep.subr.mxu0 0.0
    %2663 = vmatpush1.msra.mxu0 0.0
    %2664 = vmatprep.subr.mxu0 0.0
    %2665 = vmatpush1.msra.mxu0 0.0
    %2666 = vmatprep.subr.mxu0 0.0
    %2667 = vmatpush1.msra.mxu0 0.0
    %2668 = vmatprep.subr.mxu0 0.0
    %2669 = vmatpush1.msra.mxu0 0.0
    %2670 = vmatprep.subr.mxu0 0.0
    %2671 = vmatpush1.msra.mxu0 0.0
    %2672 = vmatprep.subr.mxu0 0.0
    %2673 = vmatpush1.msra.mxu0 0.0
    %2674 = vmatprep.subr.mxu0 0.0
    %2675 = vmatpush1.msra.mxu0 0.0
    %2676 = vmatprep.mubr.f32.mxu0 0.0
    %2677 = vmatmul.mubr.f32.gmra.mrb[0].mxu0 %v2332
    %v2678 = vpop.f32.mrb[0].mxu0
    %v2679 = vadd.f32 0.0, %v2678
    %v2680 = vpop.f32.mrb[0].mxu0
    %2681 = vmatprep.mubr.f32.mxu0 0.0
    %2682 = vmatmul.mubr.f32.gmra.mrb[0].mxu0 %v2335
    %v2683 = vpop.f32.mrb[0].mxu0
    %v2684 = vadd.f32 0.0, %v2683
    %v2685 = vpop.f32.mrb[0].mxu0
    %2686 = vmatprep.mubr.f32.mxu0 0.0
    %2687 = vmatmul.mubr.f32.gmra.mrb[0].mxu0 %v2338
    %v2688 = vpop.f32.mrb[0].mxu0
    %v2689 = vadd.f32 0.0, %v2688
    %v2690 = vpop.f32.mrb[0].mxu0
    %2691 = vmatprep.mubr.f32.mxu0 0.0
    %2692 = vmatmul.mubr.f32.gmra.mrb[0].mxu0 %v2341
    %v2693 = vpop.f32.mrb[0].mxu0
    %v2694 = vadd.f32 0.0, %v2693
    %v2695 = vpop.f32.mrb[0].mxu0
    %2696 = vmatprep.mubr.f32.mxu0 0.0
    %2697 = vmatmul.mubr.f32.gmra.mrb[0].mxu0 %v2344
    %v2698 = vpop.f32.mrb[0].mxu0
    %v2699 = vadd.f32 0.0, %v2698
    %v2700 = vpop.f32.mrb[0].mxu0
    %2701 = vmatprep.mubr.f32.mxu0 0.0
    %2702 = vmatmul.mubr.f32.gmra.mrb[0].mxu0 %v2347
    %v2703 = vpop.f32.mrb[0].mxu0
    %v2704 = vadd.f32 0.0, %v2703
    %v2705 = vpop.f32.mrb[0].mxu0
    %2706 = vmatprep.mubr.f32.mxu0 0.0
    %2707 = vmatmul.mubr.f32.gmra.mrb[0].mxu0 %v2350
    %v2708 = vpop.f32.mrb[0].mxu0
    %v2709 = vadd.f32 0.0, %v2708
    %v2710 = vpop.f32.mrb[0].mxu0
    %2711 = vmatprep.mubr.f32.mxu0 0.0
    %2712 = vmatmul.mubr.f32.gmra.mrb[0].mxu0 %v2353
    %v2713 = vpop.f32.mrb[0].mxu0
    %v2714 = vadd.f32 0.0, %v2713
    %v2715 = vpop.f32.mrb[0].mxu0
    %2716 = vmatprep.mubr.f32.mxu0 0.0
    %2717 = vmatmul.mubr.f32.gmra.mrb[0].mxu0 %v2356
    %v2718 = vpop.f32.mrb[0].mxu0
    %v2719 = vadd.f32 0.0, %v2718
    %v2720 = vpop.f32.mrb[0].mxu0
    %2721 = vmatprep.mubr.f32.mxu0 0.0
    %2722 = vmatmul.mubr.f32.gmra.mrb[0].mxu0 %v2359
    %v2723 = vpop.f32.mrb[0].mxu0
    %v2724 = vadd.f32 0.0, %v2723
    %v2725 = vpop.f32.mrb[0].mxu0
    %2726 = vmatprep.mubr.f32.mxu0 0.0
    %2727 = vmatmul.mubr.f32.gmra.mrb[0].mxu0 %v2362
    %v2728 = vpop.f32.mrb[0].mxu0
    %v2729 = vadd.f32 0.0, %v2728
    %v2730 = vpop.f32.mrb[0].mxu0
    %2731 = vmatprep.mubr.f32.mxu0 0.0
    %2732 = vmatmul.mubr.f32.gmra.mrb[0].mxu0 %v2365
    %v2733 = vpop.f32.mrb[0].mxu0
    %v2734 = vadd.f32 0.0, %v2733
    %v2735 = vpop.f32.mrb[0].mxu0
    %2736 = vdwg.mxu0
    %v2737 = vadd.f32 %v2592, %v2679
    %v2738 = vadd.f32 %v2593, %v2684
    %v2739 = vadd.f32 %v2594, %v2689
    %v2740 = vadd.f32 %v2595, %v2694
    %v2741 = vxor.u32 %v2737, 2147483648
    %v2742 = vxor.u32 %v2738, 2147483648
    %v2743 = vxor.u32 %v2739, 2147483648
    %v2744 = vxor.u32 %v2740, 2147483648
    %v2745 = vmul.f32 %v2741, 1.442695
    %v2746 = vpow.pop %v2745
    %v2747 = vmul.f32 %v2742, 1.442695
    %v2748 = vpow.pop %v2747
    %v2749 = vmul.f32 %v2743, 1.442695
    %v2750 = vpow.pop %v2749
    %v2751 = vmul.f32 %v2744, 1.442695
    %v2752 = vpow.pop %v2751
    %v2753 = vadd.f32 %v2746, 1.0
    %v2754 = vadd.f32 %v2748, 1.0
    %v2755 = vadd.f32 %v2750, 1.0
    %v2756 = vadd.f32 %v2752, 1.0
    %v2757 = vrcp.pop %v2753
    %v2758 = vmul.f32 1.0, %v2757
    %v2759 = vrcp.pop %v2754
    %v2760 = vmul.f32 1.0, %v2759
    %v2761 = vrcp.pop %v2755
    %v2762 = vmul.f32 1.0, %v2761
    %v2763 = vrcp.pop %v2756
    %v2764 = vmul.f32 1.0, %v2763
    %v2765 = vadd.f32 %v2596, %v2699
    %v2766 = vadd.f32 %v2597, %v2704
    %v2767 = vadd.f32 %v2598, %v2709
    %v2768 = vadd.f32 %v2599, %v2714
    %v2769 = vxor.u32 %v2765, 2147483648
    %v2770 = vxor.u32 %v2766, 2147483648
    %v2771 = vxor.u32 %v2767, 2147483648
    %v2772 = vxor.u32 %v2768, 2147483648
    %v2773 = vmul.f32 %v2769, 1.442695
    %v2774 = vpow.pop %v2773
    %v2775 = vmul.f32 %v2770, 1.442695
    %v2776 = vpow.pop %v2775
    %v2777 = vmul.f32 %v2771, 1.442695
    %v2778 = vpow.pop %v2777
    %v2779 = vmul.f32 %v2772, 1.442695
    %v2780 = vpow.pop %v2779
    %v2781 = vadd.f32 %v2774, 1.0
    %v2782 = vadd.f32 %v2776, 1.0
    %v2783 = vadd.f32 %v2778, 1.0
    %v2784 = vadd.f32 %v2780, 1.0
    %v2785 = vrcp.pop %v2781
    %v2786 = vmul.f32 1.0, %v2785
    %v2787 = vrcp.pop %v2782
    %v2788 = vmul.f32 1.0, %v2787
    %v2789 = vrcp.pop %v2783
    %v2790 = vmul.f32 1.0, %v2789
    %v2791 = vrcp.pop %v2784
    %v2792 = vmul.f32 1.0, %v2791
    %v2793 = vadd.f32 %v2719, %v2283
    %v2794 = vadd.f32 %v2724, %v2288
    %v2795 = vadd.f32 %v2729, %v2293
    %v2796 = vadd.f32 %v2734, %v2298
    %v2797 = vmul.f32 %v2758, %v2793
    %v2798 = vmul.f32 %v2760, %v2794
    %v2799 = vmul.f32 %v2762, %v2795
    %v2800 = vmul.f32 %v2764, %v2796
    %v2801 = vadd.f32 %v2600, %v2797
    %v2802 = vadd.f32 %v2601, %v2798
    %v2803 = vadd.f32 %v2602, %v2799
    %v2804 = vadd.f32 %v2603, %v2800
    %v2805 = vtanh.pop %v2801
    %v2806 = vtanh.pop %v2802
    %v2807 = vtanh.pop %v2803
    %v2808 = vtanh.pop %v2804
    %v2809 = vsub.f32 1.0, %v2786
    %v2810 = vsub.f32 1.0, %v2788
    %v2811 = vsub.f32 1.0, %v2790
    %v2812 = vsub.f32 1.0, %v2792
    %v2813 = vmul.f32 %v2809, %v2805
    %v2814 = vmul.f32 %v2810, %v2806
    %v2815 = vmul.f32 %v2811, %v2807
    %v2816 = vmul.f32 %v2812, %v2808
    %v2817 = vmul.f32 %v2786, %v2608
    %v2818 = vmul.f32 %v2788, %v2609
    %v2819 = vmul.f32 %v2790, %v2610
    %v2820 = vmul.f32 %v2792, %v2611
    %v2821 = vadd.f32 %v2813, %v2817
    %v2822 = vadd.f32 %v2814, %v2818
    %v2823 = vadd.f32 %v2815, %v2819
    %v2824 = vadd.f32 %v2816, %v2820
    %s2825 = sadd.s32 %s2301, 1
    %v2826 = vstv %s2825
    %vm2827 = vcmp.eq.s32.totalorder %v2300, %v2826
    %v2828 = vsel %vm2827, 1, 0
    %v2829 = vlaneseq
    %v2830 = vshrl.u32 %v2829, 7
    %v2831 = vsub.s32 0, %v2830
    %v2832 = vrot.slane %v2828, %v2831
    %vm2833 = vcmp.eq.s32.totalorder %v2832, 1
    %v2834 = vsel %vm2833, %v2821, %v2588
    %v2835 = vsel %vm2833, %v2822, %v2589
    %v2836 = vsel %vm2833, %v2823, %v2590
    %v2837 = vsel %vm2833, %v2824, %v2591
    %v2838 = vld [vmem:[%s2160] sm:$0xff]
    %v2839 = vld [vmem:[%s2160 + $0x8] sm:$0xff]
    %v2840 = vld [vmem:[%s2160 + $0x10] sm:$0xff]
    %v2841 = vld [vmem:[%s2160 + $0x18] sm:$0xff]
    %v2842 = vld [vmem:[%s2160 + $0x20] sm:$0xff]
    %v2843 = vld [vmem:[%s2160 + $0x28] sm:$0xff]
    %v2844 = vld [vmem:[%s2160 + $0x30] sm:$0xff]
    %v2845 = vld [vmem:[%s2160 + $0x38] sm:$0xff]
    %v2846 = vld [vmem:[%s2160 + $0x40] sm:$0xff]
    %v2847 = vld [vmem:[%s2160 + $0x48] sm:$0xff]
    %v2848 = vld [vmem:[%s2160 + $0x50] sm:$0xff]
    %v2849 = vld [vmem:[%s2160 + $0x58] sm:$0xff]
    %v2850 = vld [vmem:[%s2173] sm:$0xff]
    %v2851 = vld [vmem:[%s2173 + $0x8] sm:$0xff]
    %v2852 = vld [vmem:[%s2173 + $0x10] sm:$0xff]
    %v2853 = vld [vmem:[%s2173 + $0x18] sm:$0xff]
    %v2854 = vmul.f32 %v2850, %v2821
    %v2855 = vmul.f32 %v2851, %v2822
    %v2856 = vmul.f32 %v2852, %v2823
    %v2857 = vmul.f32 %v2853, %v2824
    %2858 = vmatprep.subr.mxu0 0.0
    %2859 = vmatpush1.msra.mxu0 %v2854
    %2860 = vmatprep.subr.mxu0 0.0
    %2861 = vmatpush1.msra.mxu0 %v2855
    %2862 = vmatprep.subr.mxu0 0.0
    %2863 = vmatpush1.msra.mxu0 %v2856
    %2864 = vmatprep.subr.mxu0 0.0
    %2865 = vmatpush1.msra.mxu0 %v2857
    %2866 = vmatprep.subr.mxu0 0.0
    %2867 = vmatpush1.msra.mxu0 0.0
    %2868 = vmatprep.subr.mxu0 0.0
    %2869 = vmatpush1.msra.mxu0 0.0
    %2870 = vmatprep.subr.mxu0 0.0
    %2871 = vmatpush1.msra.mxu0 0.0
    %2872 = vmatprep.subr.mxu0 0.0
    %2873 = vmatpush1.msra.mxu0 0.0
    %2874 = vmatprep.subr.mxu0 0.0
    %2875 = vmatpush1.msra.mxu0 0.0
    %2876 = vmatprep.subr.mxu0 0.0
    %2877 = vmatpush1.msra.mxu0 0.0
    %2878 = vmatprep.subr.mxu0 0.0
    %2879 = vmatpush1.msra.mxu0 0.0
    %2880 = vmatprep.subr.mxu0 0.0
    %2881 = vmatpush1.msra.mxu0 0.0
    %2882 = vmatprep.subr.mxu0 0.0
    %2883 = vmatpush1.msra.mxu0 0.0
    %2884 = vmatprep.subr.mxu0 0.0
    %2885 = vmatpush1.msra.mxu0 0.0
    %2886 = vmatprep.subr.mxu0 0.0
    %2887 = vmatpush1.msra.mxu0 0.0
    %2888 = vmatprep.subr.mxu0 0.0
    %2889 = vmatpush1.msra.mxu0 0.0
    %2890 = vmatprep.subr.mxu0 0.0
    %2891 = vmatpush1.msra.mxu0 0.0
    %2892 = vmatprep.subr.mxu0 0.0
    %2893 = vmatpush1.msra.mxu0 0.0
    %2894 = vmatprep.subr.mxu0 0.0
    %2895 = vmatpush1.msra.mxu0 0.0
    %2896 = vmatprep.subr.mxu0 0.0
    %2897 = vmatpush1.msra.mxu0 0.0
    %2898 = vmatprep.subr.mxu0 0.0
    %2899 = vmatpush1.msra.mxu0 0.0
    %2900 = vmatprep.subr.mxu0 0.0
    %2901 = vmatpush1.msra.mxu0 0.0
    %2902 = vmatprep.subr.mxu0 0.0
    %2903 = vmatpush1.msra.mxu0 0.0
    %2904 = vmatprep.subr.mxu0 0.0
    %2905 = vmatpush1.msra.mxu0 0.0
    %2906 = vmatprep.subr.mxu0 0.0
    %2907 = vmatpush1.msra.mxu0 0.0
    %2908 = vmatprep.subr.mxu0 0.0
    %2909 = vmatpush1.msra.mxu0 0.0
    %2910 = vmatprep.subr.mxu0 0.0
    %2911 = vmatpush1.msra.mxu0 0.0
    %2912 = vmatprep.subr.mxu0 0.0
    %2913 = vmatpush1.msra.mxu0 0.0
    %2914 = vmatprep.subr.mxu0 0.0
    %2915 = vmatpush1.msra.mxu0 0.0
    %2916 = vmatprep.subr.mxu0 0.0
    %2917 = vmatpush1.msra.mxu0 0.0
    %2918 = vmatprep.subr.mxu0 0.0
    %2919 = vmatpush1.msra.mxu0 0.0
    %2920 = vmatprep.subr.mxu0 0.0
    %2921 = vmatpush1.msra.mxu0 0.0
    %2922 = vmatprep.mubr.f32.mxu0 0.0
    %2923 = vmatmul.mubr.f32.gmra.mrb[0].mxu0 %v2332
    %v2924 = vpop.f32.mrb[0].mxu0
    %v2925 = vadd.f32 0.0, %v2924
    %v2926 = vpop.f32.mrb[0].mxu0
    %2927 = vmatprep.mubr.f32.mxu0 0.0
    %2928 = vmatmul.mubr.f32.gmra.mrb[0].mxu0 %v2335
    %v2929 = vpop.f32.mrb[0].mxu0
    %v2930 = vadd.f32 0.0, %v2929
    %v2931 = vpop.f32.mrb[0].mxu0
    %2932 = vmatprep.mubr.f32.mxu0 0.0
    %2933 = vmatmul.mubr.f32.gmra.mrb[0].mxu0 %v2338
    %v2934 = vpop.f32.mrb[0].mxu0
    %v2935 = vadd.f32 0.0, %v2934
    %v2936 = vpop.f32.mrb[0].mxu0
    %2937 = vmatprep.mubr.f32.mxu0 0.0
    %2938 = vmatmul.mubr.f32.gmra.mrb[0].mxu0 %v2341
    %v2939 = vpop.f32.mrb[0].mxu0
    %v2940 = vadd.f32 0.0, %v2939
    %v2941 = vpop.f32.mrb[0].mxu0
    %2942 = vmatprep.mubr.f32.mxu0 0.0
    %2943 = vmatmul.mubr.f32.gmra.mrb[0].mxu0 %v2344
    %v2944 = vpop.f32.mrb[0].mxu0
    %v2945 = vadd.f32 0.0, %v2944
    %v2946 = vpop.f32.mrb[0].mxu0
    %2947 = vmatprep.mubr.f32.mxu0 0.0
    %2948 = vmatmul.mubr.f32.gmra.mrb[0].mxu0 %v2347
    %v2949 = vpop.f32.mrb[0].mxu0
    %v2950 = vadd.f32 0.0, %v2949
    %v2951 = vpop.f32.mrb[0].mxu0
    %2952 = vmatprep.mubr.f32.mxu0 0.0
    %2953 = vmatmul.mubr.f32.gmra.mrb[0].mxu0 %v2350
    %v2954 = vpop.f32.mrb[0].mxu0
    %v2955 = vadd.f32 0.0, %v2954
    %v2956 = vpop.f32.mrb[0].mxu0
    %2957 = vmatprep.mubr.f32.mxu0 0.0
    %2958 = vmatmul.mubr.f32.gmra.mrb[0].mxu0 %v2353
    %v2959 = vpop.f32.mrb[0].mxu0
    %v2960 = vadd.f32 0.0, %v2959
    %v2961 = vpop.f32.mrb[0].mxu0
    %2962 = vmatprep.mubr.f32.mxu0 0.0
    %2963 = vmatmul.mubr.f32.gmra.mrb[0].mxu0 %v2356
    %v2964 = vpop.f32.mrb[0].mxu0
    %v2965 = vadd.f32 0.0, %v2964
    %v2966 = vpop.f32.mrb[0].mxu0
    %2967 = vmatprep.mubr.f32.mxu0 0.0
    %2968 = vmatmul.mubr.f32.gmra.mrb[0].mxu0 %v2359
    %v2969 = vpop.f32.mrb[0].mxu0
    %v2970 = vadd.f32 0.0, %v2969
    %v2971 = vpop.f32.mrb[0].mxu0
    %2972 = vmatprep.mubr.f32.mxu0 0.0
    %2973 = vmatmul.mubr.f32.gmra.mrb[0].mxu0 %v2362
    %v2974 = vpop.f32.mrb[0].mxu0
    %v2975 = vadd.f32 0.0, %v2974
    %v2976 = vpop.f32.mrb[0].mxu0
    %2977 = vmatprep.mubr.f32.mxu0 0.0
    %2978 = vmatmul.mubr.f32.gmra.mrb[0].mxu0 %v2365
    %v2979 = vpop.f32.mrb[0].mxu0
    %v2980 = vadd.f32 0.0, %v2979
    %v2981 = vpop.f32.mrb[0].mxu0
    %2982 = vdwg.mxu0
    %v2983 = vadd.f32 %v2838, %v2925
    %v2984 = vadd.f32 %v2839, %v2930
    %v2985 = vadd.f32 %v2840, %v2935
    %v2986 = vadd.f32 %v2841, %v2940
    %v2987 = vxor.u32 %v2983, 2147483648
    %v2988 = vxor.u32 %v2984, 2147483648
    %v2989 = vxor.u32 %v2985, 2147483648
    %v2990 = vxor.u32 %v2986, 2147483648
    %v2991 = vmul.f32 %v2987, 1.442695
    %v2992 = vpow.pop %v2991
    %v2993 = vmul.f32 %v2988, 1.442695
    %v2994 = vpow.pop %v2993
    %v2995 = vmul.f32 %v2989, 1.442695
    %v2996 = vpow.pop %v2995
    %v2997 = vmul.f32 %v2990, 1.442695
    %v2998 = vpow.pop %v2997
    %v2999 = vadd.f32 %v2992, 1.0
    %v3000 = vadd.f32 %v2994, 1.0
    %v3001 = vadd.f32 %v2996, 1.0
    %v3002 = vadd.f32 %v2998, 1.0
    %v3003 = vrcp.pop %v2999
    %v3004 = vmul.f32 1.0, %v3003
    %v3005 = vrcp.pop %v3000
    %v3006 = vmul.f32 1.0, %v3005
    %v3007 = vrcp.pop %v3001
    %v3008 = vmul.f32 1.0, %v3007
    %v3009 = vrcp.pop %v3002
    %v3010 = vmul.f32 1.0, %v3009
    %v3011 = vadd.f32 %v2842, %v2945
    %v3012 = vadd.f32 %v2843, %v2950
    %v3013 = vadd.f32 %v2844, %v2955
    %v3014 = vadd.f32 %v2845, %v2960
    %v3015 = vxor.u32 %v3011, 2147483648
    %v3016 = vxor.u32 %v3012, 2147483648
    %v3017 = vxor.u32 %v3013, 2147483648
    %v3018 = vxor.u32 %v3014, 2147483648
    %v3019 = vmul.f32 %v3015, 1.442695
    %v3020 = vpow.pop %v3019
    %v3021 = vmul.f32 %v3016, 1.442695
    %v3022 = vpow.pop %v3021
    %v3023 = vmul.f32 %v3017, 1.442695
    %v3024 = vpow.pop %v3023
    %v3025 = vmul.f32 %v3018, 1.442695
    %v3026 = vpow.pop %v3025
    %v3027 = vadd.f32 %v3020, 1.0
    %v3028 = vadd.f32 %v3022, 1.0
    %v3029 = vadd.f32 %v3024, 1.0
    %v3030 = vadd.f32 %v3026, 1.0
    %v3031 = vrcp.pop %v3027
    %v3032 = vmul.f32 1.0, %v3031
    %v3033 = vrcp.pop %v3028
    %v3034 = vmul.f32 1.0, %v3033
    %v3035 = vrcp.pop %v3029
    %v3036 = vmul.f32 1.0, %v3035
    %v3037 = vrcp.pop %v3030
    %v3038 = vmul.f32 1.0, %v3037
    %v3039 = vadd.f32 %v2965, %v2283
    %v3040 = vadd.f32 %v2970, %v2288
    %v3041 = vadd.f32 %v2975, %v2293
    %v3042 = vadd.f32 %v2980, %v2298
    %v3043 = vmul.f32 %v3004, %v3039
    %v3044 = vmul.f32 %v3006, %v3040
    %v3045 = vmul.f32 %v3008, %v3041
    %v3046 = vmul.f32 %v3010, %v3042
    %v3047 = vadd.f32 %v2846, %v3043
    %v3048 = vadd.f32 %v2847, %v3044
    %v3049 = vadd.f32 %v2848, %v3045
    %v3050 = vadd.f32 %v2849, %v3046
    %v3051 = vtanh.pop %v3047
    %v3052 = vtanh.pop %v3048
    %v3053 = vtanh.pop %v3049
    %v3054 = vtanh.pop %v3050
    %v3055 = vsub.f32 1.0, %v3032
    %v3056 = vsub.f32 1.0, %v3034
    %v3057 = vsub.f32 1.0, %v3036
    %v3058 = vsub.f32 1.0, %v3038
    %v3059 = vmul.f32 %v3055, %v3051
    %v3060 = vmul.f32 %v3056, %v3052
    %v3061 = vmul.f32 %v3057, %v3053
    %v3062 = vmul.f32 %v3058, %v3054
    %v3063 = vmul.f32 %v3032, %v2854
    %v3064 = vmul.f32 %v3034, %v2855
    %v3065 = vmul.f32 %v3036, %v2856
    %v3066 = vmul.f32 %v3038, %v2857
    %v3067 = vadd.f32 %v3059, %v3063
    %v3068 = vadd.f32 %v3060, %v3064
    %v3069 = vadd.f32 %v3061, %v3065
    %v3070 = vadd.f32 %v3062, %v3066
    %s3071 = sadd.s32 %s2301, 2
    %v3072 = vstv %s3071
    %vm3073 = vcmp.eq.s32.totalorder %v2300, %v3072
    %v3074 = vsel %vm3073, 1, 0
    %v3075 = vlaneseq
    %v3076 = vshrl.u32 %v3075, 7
    %v3077 = vsub.s32 0, %v3076
    %v3078 = vrot.slane %v3074, %v3077
    %vm3079 = vcmp.eq.s32.totalorder %v3078, 1
    %v3080 = vsel %vm3079, %v3067, %v2834
    %v3081 = vsel %vm3079, %v3068, %v2835
    %v3082 = vsel %vm3079, %v3069, %v2836
    %v3083 = vsel %vm3079, %v3070, %v2837
    %v3084 = vld [vmem:[%s2178] sm:$0xff]
    %v3085 = vld [vmem:[%s2178 + $0x8] sm:$0xff]
    %v3086 = vld [vmem:[%s2178 + $0x10] sm:$0xff]
    %v3087 = vld [vmem:[%s2178 + $0x18] sm:$0xff]
    %v3088 = vld [vmem:[%s2178 + $0x20] sm:$0xff]
    %v3089 = vld [vmem:[%s2178 + $0x28] sm:$0xff]
    %v3090 = vld [vmem:[%s2178 + $0x30] sm:$0xff]
    %v3091 = vld [vmem:[%s2178 + $0x38] sm:$0xff]
    %v3092 = vld [vmem:[%s2178 + $0x40] sm:$0xff]
    %v3093 = vld [vmem:[%s2178 + $0x48] sm:$0xff]
    %v3094 = vld [vmem:[%s2178 + $0x50] sm:$0xff]
    %v3095 = vld [vmem:[%s2178 + $0x58] sm:$0xff]
    %v3096 = vld [vmem:[%s2191] sm:$0xff]
    %v3097 = vld [vmem:[%s2191 + $0x8] sm:$0xff]
    %v3098 = vld [vmem:[%s2191 + $0x10] sm:$0xff]
    %v3099 = vld [vmem:[%s2191 + $0x18] sm:$0xff]
    %v3100 = vmul.f32 %v3096, %v3067
    %v3101 = vmul.f32 %v3097, %v3068
    %v3102 = vmul.f32 %v3098, %v3069
    %v3103 = vmul.f32 %v3099, %v3070
    %3104 = vmatprep.subr.mxu0 0.0
    %3105 = vmatpush1.msra.mxu0 %v3100
    %3106 = vmatprep.subr.mxu0 0.0
    %3107 = vmatpush1.msra.mxu0 %v3101
    %3108 = vmatprep.subr.mxu0 0.0
    %3109 = vmatpush1.msra.mxu0 %v3102
    %3110 = vmatprep.subr.mxu0 0.0
    %3111 = vmatpush1.msra.mxu0 %v3103
    %3112 = vmatprep.subr.mxu0 0.0
    %3113 = vmatpush1.msra.mxu0 0.0
    %3114 = vmatprep.subr.mxu0 0.0
    %3115 = vmatpush1.msra.mxu0 0.0
    %3116 = vmatprep.subr.mxu0 0.0
    %3117 = vmatpush1.msra.mxu0 0.0
    %3118 = vmatprep.subr.mxu0 0.0
    %3119 = vmatpush1.msra.mxu0 0.0
    %3120 = vmatprep.subr.mxu0 0.0
    %3121 = vmatpush1.msra.mxu0 0.0
    %3122 = vmatprep.subr.mxu0 0.0
    %3123 = vmatpush1.msra.mxu0 0.0
    %3124 = vmatprep.subr.mxu0 0.0
    %3125 = vmatpush1.msra.mxu0 0.0
    %3126 = vmatprep.subr.mxu0 0.0
    %3127 = vmatpush1.msra.mxu0 0.0
    %3128 = vmatprep.subr.mxu0 0.0
    %3129 = vmatpush1.msra.mxu0 0.0
    %3130 = vmatprep.subr.mxu0 0.0
    %3131 = vmatpush1.msra.mxu0 0.0
    %3132 = vmatprep.subr.mxu0 0.0
    %3133 = vmatpush1.msra.mxu0 0.0
    %3134 = vmatprep.subr.mxu0 0.0
    %3135 = vmatpush1.msra.mxu0 0.0
    %3136 = vmatprep.subr.mxu0 0.0
    %3137 = vmatpush1.msra.mxu0 0.0
    %3138 = vmatprep.subr.mxu0 0.0
    %3139 = vmatpush1.msra.mxu0 0.0
    %3140 = vmatprep.subr.mxu0 0.0
    %3141 = vmatpush1.msra.mxu0 0.0
    %3142 = vmatprep.subr.mxu0 0.0
    %3143 = vmatpush1.msra.mxu0 0.0
    %3144 = vmatprep.subr.mxu0 0.0
    %3145 = vmatpush1.msra.mxu0 0.0
    %3146 = vmatprep.subr.mxu0 0.0
    %3147 = vmatpush1.msra.mxu0 0.0
    %3148 = vmatprep.subr.mxu0 0.0
    %3149 = vmatpush1.msra.mxu0 0.0
    %3150 = vmatprep.subr.mxu0 0.0
    %3151 = vmatpush1.msra.mxu0 0.0
    %3152 = vmatprep.subr.mxu0 0.0
    %3153 = vmatpush1.msra.mxu0 0.0
    %3154 = vmatprep.subr.mxu0 0.0
    %3155 = vmatpush1.msra.mxu0 0.0
    %3156 = vmatprep.subr.mxu0 0.0
    %3157 = vmatpush1.msra.mxu0 0.0
    %3158 = vmatprep.subr.mxu0 0.0
    %3159 = vmatpush1.msra.mxu0 0.0
    %3160 = vmatprep.subr.mxu0 0.0
    %3161 = vmatpush1.msra.mxu0 0.0
    %3162 = vmatprep.subr.mxu0 0.0
    %3163 = vmatpush1.msra.mxu0 0.0
    %3164 = vmatprep.subr.mxu0 0.0
    %3165 = vmatpush1.msra.mxu0 0.0
    %3166 = vmatprep.subr.mxu0 0.0
    %3167 = vmatpush1.msra.mxu0 0.0
    %3168 = vmatprep.mubr.f32.mxu0 0.0
    %3169 = vmatmul.mubr.f32.gmra.mrb[0].mxu0 %v2332
    %v3170 = vpop.f32.mrb[0].mxu0
    %v3171 = vadd.f32 0.0, %v3170
    %v3172 = vpop.f32.mrb[0].mxu0
    %3173 = vmatprep.mubr.f32.mxu0 0.0
    %3174 = vmatmul.mubr.f32.gmra.mrb[0].mxu0 %v2335
    %v3175 = vpop.f32.mrb[0].mxu0
    %v3176 = vadd.f32 0.0, %v3175
    %v3177 = vpop.f32.mrb[0].mxu0
    %3178 = vmatprep.mubr.f32.mxu0 0.0
    %3179 = vmatmul.mubr.f32.gmra.mrb[0].mxu0 %v2338
    %v3180 = vpop.f32.mrb[0].mxu0
    %v3181 = vadd.f32 0.0, %v3180
    %v3182 = vpop.f32.mrb[0].mxu0
    %3183 = vmatprep.mubr.f32.mxu0 0.0
    %3184 = vmatmul.mubr.f32.gmra.mrb[0].mxu0 %v2341
    %v3185 = vpop.f32.mrb[0].mxu0
    %v3186 = vadd.f32 0.0, %v3185
    %v3187 = vpop.f32.mrb[0].mxu0
    %3188 = vmatprep.mubr.f32.mxu0 0.0
    %3189 = vmatmul.mubr.f32.gmra.mrb[0].mxu0 %v2344
    %v3190 = vpop.f32.mrb[0].mxu0
    %v3191 = vadd.f32 0.0, %v3190
    %v3192 = vpop.f32.mrb[0].mxu0
    %3193 = vmatprep.mubr.f32.mxu0 0.0
    %3194 = vmatmul.mubr.f32.gmra.mrb[0].mxu0 %v2347
    %v3195 = vpop.f32.mrb[0].mxu0
    %v3196 = vadd.f32 0.0, %v3195
    %v3197 = vpop.f32.mrb[0].mxu0
    %3198 = vmatprep.mubr.f32.mxu0 0.0
    %3199 = vmatmul.mubr.f32.gmra.mrb[0].mxu0 %v2350
    %v3200 = vpop.f32.mrb[0].mxu0
    %v3201 = vadd.f32 0.0, %v3200
    %v3202 = vpop.f32.mrb[0].mxu0
    %3203 = vmatprep.mubr.f32.mxu0 0.0
    %3204 = vmatmul.mubr.f32.gmra.mrb[0].mxu0 %v2353
    %v3205 = vpop.f32.mrb[0].mxu0
    %v3206 = vadd.f32 0.0, %v3205
    %v3207 = vpop.f32.mrb[0].mxu0
    %3208 = vmatprep.mubr.f32.mxu0 0.0
    %3209 = vmatmul.mubr.f32.gmra.mrb[0].mxu0 %v2356
    %v3210 = vpop.f32.mrb[0].mxu0
    %v3211 = vadd.f32 0.0, %v3210
    %v3212 = vpop.f32.mrb[0].mxu0
    %3213 = vmatprep.mubr.f32.mxu0 0.0
    %3214 = vmatmul.mubr.f32.gmra.mrb[0].mxu0 %v2359
    %v3215 = vpop.f32.mrb[0].mxu0
    %v3216 = vadd.f32 0.0, %v3215
    %v3217 = vpop.f32.mrb[0].mxu0
    %3218 = vmatprep.mubr.f32.mxu0 0.0
    %3219 = vmatmul.mubr.f32.gmra.mrb[0].mxu0 %v2362
    %v3220 = vpop.f32.mrb[0].mxu0
    %v3221 = vadd.f32 0.0, %v3220
    %v3222 = vpop.f32.mrb[0].mxu0
    %3223 = vmatprep.mubr.f32.mxu0 0.0
    %3224 = vmatmul.mubr.f32.gmra.mrb[0].mxu0 %v2365
    %v3225 = vpop.f32.mrb[0].mxu0
    %v3226 = vadd.f32 0.0, %v3225
    %v3227 = vpop.f32.mrb[0].mxu0
    %3228 = vdwg.mxu0
    %v3229 = vadd.f32 %v3084, %v3171
    %v3230 = vadd.f32 %v3085, %v3176
    %v3231 = vadd.f32 %v3086, %v3181
    %v3232 = vadd.f32 %v3087, %v3186
    %v3233 = vxor.u32 %v3229, 2147483648
    %v3234 = vxor.u32 %v3230, 2147483648
    %v3235 = vxor.u32 %v3231, 2147483648
    %v3236 = vxor.u32 %v3232, 2147483648
    %v3237 = vmul.f32 %v3233, 1.442695
    %v3238 = vpow.pop %v3237
    %v3239 = vmul.f32 %v3234, 1.442695
    %v3240 = vpow.pop %v3239
    %v3241 = vmul.f32 %v3235, 1.442695
    %v3242 = vpow.pop %v3241
    %v3243 = vmul.f32 %v3236, 1.442695
    %v3244 = vpow.pop %v3243
    %v3245 = vadd.f32 %v3238, 1.0
    %v3246 = vadd.f32 %v3240, 1.0
    %v3247 = vadd.f32 %v3242, 1.0
    %v3248 = vadd.f32 %v3244, 1.0
    %v3249 = vrcp.pop %v3245
    %v3250 = vmul.f32 1.0, %v3249
    %v3251 = vrcp.pop %v3246
    %v3252 = vmul.f32 1.0, %v3251
    %v3253 = vrcp.pop %v3247
    %v3254 = vmul.f32 1.0, %v3253
    %v3255 = vrcp.pop %v3248
    %v3256 = vmul.f32 1.0, %v3255
    %v3257 = vadd.f32 %v3088, %v3191
    %v3258 = vadd.f32 %v3089, %v3196
    %v3259 = vadd.f32 %v3090, %v3201
    %v3260 = vadd.f32 %v3091, %v3206
    %v3261 = vxor.u32 %v3257, 2147483648
    %v3262 = vxor.u32 %v3258, 2147483648
    %v3263 = vxor.u32 %v3259, 2147483648
    %v3264 = vxor.u32 %v3260, 2147483648
    %v3265 = vmul.f32 %v3261, 1.442695
    %v3266 = vpow.pop %v3265
    %v3267 = vmul.f32 %v3262, 1.442695
    %v3268 = vpow.pop %v3267
    %v3269 = vmul.f32 %v3263, 1.442695
    %v3270 = vpow.pop %v3269
    %v3271 = vmul.f32 %v3264, 1.442695
    %v3272 = vpow.pop %v3271
    %v3273 = vadd.f32 %v3266, 1.0
    %v3274 = vadd.f32 %v3268, 1.0
    %v3275 = vadd.f32 %v3270, 1.0
    %v3276 = vadd.f32 %v3272, 1.0
    %v3277 = vrcp.pop %v3273
    %v3278 = vmul.f32 1.0, %v3277
    %v3279 = vrcp.pop %v3274
    %v3280 = vmul.f32 1.0, %v3279
    %v3281 = vrcp.pop %v3275
    %v3282 = vmul.f32 1.0, %v3281
    %v3283 = vrcp.pop %v3276
    %v3284 = vmul.f32 1.0, %v3283
    %v3285 = vadd.f32 %v3211, %v2283
    %v3286 = vadd.f32 %v3216, %v2288
    %v3287 = vadd.f32 %v3221, %v2293
    %v3288 = vadd.f32 %v3226, %v2298
    %v3289 = vmul.f32 %v3250, %v3285
    %v3290 = vmul.f32 %v3252, %v3286
    %v3291 = vmul.f32 %v3254, %v3287
    %v3292 = vmul.f32 %v3256, %v3288
    %v3293 = vadd.f32 %v3092, %v3289
    %v3294 = vadd.f32 %v3093, %v3290
    %v3295 = vadd.f32 %v3094, %v3291
    %v3296 = vadd.f32 %v3095, %v3292
    %v3297 = vtanh.pop %v3293
    %v3298 = vtanh.pop %v3294
    %v3299 = vtanh.pop %v3295
    %v3300 = vtanh.pop %v3296
    %v3301 = vsub.f32 1.0, %v3278
    %v3302 = vsub.f32 1.0, %v3280
    %v3303 = vsub.f32 1.0, %v3282
    %v3304 = vsub.f32 1.0, %v3284
    %v3305 = vmul.f32 %v3301, %v3297
    %v3306 = vmul.f32 %v3302, %v3298
    %v3307 = vmul.f32 %v3303, %v3299
    %v3308 = vmul.f32 %v3304, %v3300
    %v3309 = vmul.f32 %v3278, %v3100
    %v3310 = vmul.f32 %v3280, %v3101
    %v3311 = vmul.f32 %v3282, %v3102
    %v3312 = vmul.f32 %v3284, %v3103
    %v3313 = vadd.f32 %v3305, %v3309
    %v3314 = vadd.f32 %v3306, %v3310
    %v3315 = vadd.f32 %v3307, %v3311
    %v3316 = vadd.f32 %v3308, %v3312
    %s3317 = sadd.s32 %s2301, 3
    %v3318 = vstv %s3317
    %vm3319 = vcmp.eq.s32.totalorder %v2300, %v3318
    %v3320 = vsel %vm3319, 1, 0
    %v3321 = vlaneseq
    %v3322 = vshrl.u32 %v3321, 7
    %v3323 = vsub.s32 0, %v3322
    %v3324 = vrot.slane %v3320, %v3323
    %vm3325 = vcmp.eq.s32.totalorder %v3324, 1
    %v3326 = vsel %vm3325, %v3313, %v3080
    %v3327 = vsel %vm3325, %v3314, %v3081
    %v3328 = vsel %vm3325, %v3315, %v3082
    %v3329 = vsel %vm3325, %v3316, %v3083
    %v3330 = vld [vmem:[%s2196] sm:$0xff]
    %v3331 = vld [vmem:[%s2196 + $0x8] sm:$0xff]
    %v3332 = vld [vmem:[%s2196 + $0x10] sm:$0xff]
    %v3333 = vld [vmem:[%s2196 + $0x18] sm:$0xff]
    %v3334 = vld [vmem:[%s2196 + $0x20] sm:$0xff]
    %v3335 = vld [vmem:[%s2196 + $0x28] sm:$0xff]
    %v3336 = vld [vmem:[%s2196 + $0x30] sm:$0xff]
    %v3337 = vld [vmem:[%s2196 + $0x38] sm:$0xff]
    %v3338 = vld [vmem:[%s2196 + $0x40] sm:$0xff]
    %v3339 = vld [vmem:[%s2196 + $0x48] sm:$0xff]
    %v3340 = vld [vmem:[%s2196 + $0x50] sm:$0xff]
    %v3341 = vld [vmem:[%s2196 + $0x58] sm:$0xff]
    %v3342 = vld [vmem:[%s2209] sm:$0xff]
    %v3343 = vld [vmem:[%s2209 + $0x8] sm:$0xff]
    %v3344 = vld [vmem:[%s2209 + $0x10] sm:$0xff]
    %v3345 = vld [vmem:[%s2209 + $0x18] sm:$0xff]
    %v3346 = vmul.f32 %v3342, %v3313
    %v3347 = vmul.f32 %v3343, %v3314
    %v3348 = vmul.f32 %v3344, %v3315
    %v3349 = vmul.f32 %v3345, %v3316
    %3350 = vmatprep.subr.mxu0 0.0
    %3351 = vmatpush1.msra.mxu0 %v3346
    %3352 = vmatprep.subr.mxu0 0.0
    %3353 = vmatpush1.msra.mxu0 %v3347
    %3354 = vmatprep.subr.mxu0 0.0
    %3355 = vmatpush1.msra.mxu0 %v3348
    %3356 = vmatprep.subr.mxu0 0.0
    %3357 = vmatpush1.msra.mxu0 %v3349
    %3358 = vmatprep.subr.mxu0 0.0
    %3359 = vmatpush1.msra.mxu0 0.0
    %3360 = vmatprep.subr.mxu0 0.0
    %3361 = vmatpush1.msra.mxu0 0.0
    %3362 = vmatprep.subr.mxu0 0.0
    %3363 = vmatpush1.msra.mxu0 0.0
    %3364 = vmatprep.subr.mxu0 0.0
    %3365 = vmatpush1.msra.mxu0 0.0
    %3366 = vmatprep.subr.mxu0 0.0
    %3367 = vmatpush1.msra.mxu0 0.0
    %3368 = vmatprep.subr.mxu0 0.0
    %3369 = vmatpush1.msra.mxu0 0.0
    %3370 = vmatprep.subr.mxu0 0.0
    %3371 = vmatpush1.msra.mxu0 0.0
    %3372 = vmatprep.subr.mxu0 0.0
    %3373 = vmatpush1.msra.mxu0 0.0
    %3374 = vmatprep.subr.mxu0 0.0
    %3375 = vmatpush1.msra.mxu0 0.0
    %3376 = vmatprep.subr.mxu0 0.0
    %3377 = vmatpush1.msra.mxu0 0.0
    %3378 = vmatprep.subr.mxu0 0.0
    %3379 = vmatpush1.msra.mxu0 0.0
    %3380 = vmatprep.subr.mxu0 0.0
    %3381 = vmatpush1.msra.mxu0 0.0
    %3382 = vmatprep.subr.mxu0 0.0
    %3383 = vmatpush1.msra.mxu0 0.0
    %3384 = vmatprep.subr.mxu0 0.0
    %3385 = vmatpush1.msra.mxu0 0.0
    %3386 = vmatprep.subr.mxu0 0.0
    %3387 = vmatpush1.msra.mxu0 0.0
    %3388 = vmatprep.subr.mxu0 0.0
    %3389 = vmatpush1.msra.mxu0 0.0
    %3390 = vmatprep.subr.mxu0 0.0
    %3391 = vmatpush1.msra.mxu0 0.0
    %3392 = vmatprep.subr.mxu0 0.0
    %3393 = vmatpush1.msra.mxu0 0.0
    %3394 = vmatprep.subr.mxu0 0.0
    %3395 = vmatpush1.msra.mxu0 0.0
    %3396 = vmatprep.subr.mxu0 0.0
    %3397 = vmatpush1.msra.mxu0 0.0
    %3398 = vmatprep.subr.mxu0 0.0
    %3399 = vmatpush1.msra.mxu0 0.0
    %3400 = vmatprep.subr.mxu0 0.0
    %3401 = vmatpush1.msra.mxu0 0.0
    %3402 = vmatprep.subr.mxu0 0.0
    %3403 = vmatpush1.msra.mxu0 0.0
    %3404 = vmatprep.subr.mxu0 0.0
    %3405 = vmatpush1.msra.mxu0 0.0
    %3406 = vmatprep.subr.mxu0 0.0
    %3407 = vmatpush1.msra.mxu0 0.0
    %3408 = vmatprep.subr.mxu0 0.0
    %3409 = vmatpush1.msra.mxu0 0.0
    %3410 = vmatprep.subr.mxu0 0.0
    %3411 = vmatpush1.msra.mxu0 0.0
    %3412 = vmatprep.subr.mxu0 0.0
    %3413 = vmatpush1.msra.mxu0 0.0
    %3414 = vmatprep.mubr.f32.mxu0 0.0
    %3415 = vmatmul.mubr.f32.gmra.mrb[0].mxu0 %v2332
    %v3416 = vpop.f32.mrb[0].mxu0
    %v3417 = vadd.f32 0.0, %v3416
    %v3418 = vpop.f32.mrb[0].mxu0
    %3419 = vmatprep.mubr.f32.mxu0 0.0
    %3420 = vmatmul.mubr.f32.gmra.mrb[0].mxu0 %v2335
    %v3421 = vpop.f32.mrb[0].mxu0
    %v3422 = vadd.f32 0.0, %v3421
    %v3423 = vpop.f32.mrb[0].mxu0
    %3424 = vmatprep.mubr.f32.mxu0 0.0
    %3425 = vmatmul.mubr.f32.gmra.mrb[0].mxu0 %v2338
    %v3426 = vpop.f32.mrb[0].mxu0
    %v3427 = vadd.f32 0.0, %v3426
    %v3428 = vpop.f32.mrb[0].mxu0
    %3429 = vmatprep.mubr.f32.mxu0 0.0
    %3430 = vmatmul.mubr.f32.gmra.mrb[0].mxu0 %v2341
    %v3431 = vpop.f32.mrb[0].mxu0
    %v3432 = vadd.f32 0.0, %v3431
    %v3433 = vpop.f32.mrb[0].mxu0
    %3434 = vmatprep.mubr.f32.mxu0 0.0
    %3435 = vmatmul.mubr.f32.gmra.mrb[0].mxu0 %v2344
    %v3436 = vpop.f32.mrb[0].mxu0
    %v3437 = vadd.f32 0.0, %v3436
    %v3438 = vpop.f32.mrb[0].mxu0
    %3439 = vmatprep.mubr.f32.mxu0 0.0
    %3440 = vmatmul.mubr.f32.gmra.mrb[0].mxu0 %v2347
    %v3441 = vpop.f32.mrb[0].mxu0
    %v3442 = vadd.f32 0.0, %v3441
    %v3443 = vpop.f32.mrb[0].mxu0
    %3444 = vmatprep.mubr.f32.mxu0 0.0
    %3445 = vmatmul.mubr.f32.gmra.mrb[0].mxu0 %v2350
    %v3446 = vpop.f32.mrb[0].mxu0
    %v3447 = vadd.f32 0.0, %v3446
    %v3448 = vpop.f32.mrb[0].mxu0
    %3449 = vmatprep.mubr.f32.mxu0 0.0
    %3450 = vmatmul.mubr.f32.gmra.mrb[0].mxu0 %v2353
    %v3451 = vpop.f32.mrb[0].mxu0
    %v3452 = vadd.f32 0.0, %v3451
    %v3453 = vpop.f32.mrb[0].mxu0
    %3454 = vmatprep.mubr.f32.mxu0 0.0
    %3455 = vmatmul.mubr.f32.gmra.mrb[0].mxu0 %v2356
    %v3456 = vpop.f32.mrb[0].mxu0
    %v3457 = vadd.f32 0.0, %v3456
    %v3458 = vpop.f32.mrb[0].mxu0
    %3459 = vmatprep.mubr.f32.mxu0 0.0
    %3460 = vmatmul.mubr.f32.gmra.mrb[0].mxu0 %v2359
    %v3461 = vpop.f32.mrb[0].mxu0
    %v3462 = vadd.f32 0.0, %v3461
    %v3463 = vpop.f32.mrb[0].mxu0
    %3464 = vmatprep.mubr.f32.mxu0 0.0
    %3465 = vmatmul.mubr.f32.gmra.mrb[0].mxu0 %v2362
    %v3466 = vpop.f32.mrb[0].mxu0
    %v3467 = vadd.f32 0.0, %v3466
    %v3468 = vpop.f32.mrb[0].mxu0
    %3469 = vmatprep.mubr.f32.mxu0 0.0
    %3470 = vmatmul.mubr.f32.gmra.mrb[0].mxu0 %v2365
    %v3471 = vpop.f32.mrb[0].mxu0
    %v3472 = vadd.f32 0.0, %v3471
    %v3473 = vpop.f32.mrb[0].mxu0
    %3474 = vdwg.mxu0
    %v3475 = vadd.f32 %v3330, %v3417
    %v3476 = vadd.f32 %v3331, %v3422
    %v3477 = vadd.f32 %v3332, %v3427
    %v3478 = vadd.f32 %v3333, %v3432
    %v3479 = vxor.u32 %v3475, 2147483648
    %v3480 = vxor.u32 %v3476, 2147483648
    %v3481 = vxor.u32 %v3477, 2147483648
    %v3482 = vxor.u32 %v3478, 2147483648
    %v3483 = vmul.f32 %v3479, 1.442695
    %v3484 = vpow.pop %v3483
    %v3485 = vmul.f32 %v3480, 1.442695
    %v3486 = vpow.pop %v3485
    %v3487 = vmul.f32 %v3481, 1.442695
    %v3488 = vpow.pop %v3487
    %v3489 = vmul.f32 %v3482, 1.442695
    %v3490 = vpow.pop %v3489
    %v3491 = vadd.f32 %v3484, 1.0
    %v3492 = vadd.f32 %v3486, 1.0
    %v3493 = vadd.f32 %v3488, 1.0
    %v3494 = vadd.f32 %v3490, 1.0
    %v3495 = vrcp.pop %v3491
    %v3496 = vmul.f32 1.0, %v3495
    %v3497 = vrcp.pop %v3492
    %v3498 = vmul.f32 1.0, %v3497
    %v3499 = vrcp.pop %v3493
    %v3500 = vmul.f32 1.0, %v3499
    %v3501 = vrcp.pop %v3494
    %v3502 = vmul.f32 1.0, %v3501
    %v3503 = vadd.f32 %v3334, %v3437
    %v3504 = vadd.f32 %v3335, %v3442
    %v3505 = vadd.f32 %v3336, %v3447
    %v3506 = vadd.f32 %v3337, %v3452
    %v3507 = vxor.u32 %v3503, 2147483648
    %v3508 = vxor.u32 %v3504, 2147483648
    %v3509 = vxor.u32 %v3505, 2147483648
    %v3510 = vxor.u32 %v3506, 2147483648
    %v3511 = vmul.f32 %v3507, 1.442695
    %v3512 = vpow.pop %v3511
    %v3513 = vmul.f32 %v3508, 1.442695
    %v3514 = vpow.pop %v3513
    %v3515 = vmul.f32 %v3509, 1.442695
    %v3516 = vpow.pop %v3515
    %v3517 = vmul.f32 %v3510, 1.442695
    %v3518 = vpow.pop %v3517
    %v3519 = vadd.f32 %v3512, 1.0
    %v3520 = vadd.f32 %v3514, 1.0
    %v3521 = vadd.f32 %v3516, 1.0
    %v3522 = vadd.f32 %v3518, 1.0
    %v3523 = vrcp.pop %v3519
    %v3524 = vmul.f32 1.0, %v3523
    %v3525 = vrcp.pop %v3520
    %v3526 = vmul.f32 1.0, %v3525
    %v3527 = vrcp.pop %v3521
    %v3528 = vmul.f32 1.0, %v3527
    %v3529 = vrcp.pop %v3522
    %v3530 = vmul.f32 1.0, %v3529
    %v3531 = vadd.f32 %v3457, %v2283
    %v3532 = vadd.f32 %v3462, %v2288
    %v3533 = vadd.f32 %v3467, %v2293
    %v3534 = vadd.f32 %v3472, %v2298
    %v3535 = vmul.f32 %v3496, %v3531
    %v3536 = vmul.f32 %v3498, %v3532
    %v3537 = vmul.f32 %v3500, %v3533
    %v3538 = vmul.f32 %v3502, %v3534
    %v3539 = vadd.f32 %v3338, %v3535
    %v3540 = vadd.f32 %v3339, %v3536
    %v3541 = vadd.f32 %v3340, %v3537
    %v3542 = vadd.f32 %v3341, %v3538
    %v3543 = vtanh.pop %v3539
    %v3544 = vtanh.pop %v3540
    %v3545 = vtanh.pop %v3541
    %v3546 = vtanh.pop %v3542
    %v3547 = vsub.f32 1.0, %v3524
    %v3548 = vsub.f32 1.0, %v3526
    %v3549 = vsub.f32 1.0, %v3528
    %v3550 = vsub.f32 1.0, %v3530
    %v3551 = vmul.f32 %v3547, %v3543
    %v3552 = vmul.f32 %v3548, %v3544
    %v3553 = vmul.f32 %v3549, %v3545
    %v3554 = vmul.f32 %v3550, %v3546
    %v3555 = vmul.f32 %v3524, %v3346
    %v3556 = vmul.f32 %v3526, %v3347
    %v3557 = vmul.f32 %v3528, %v3348
    %v3558 = vmul.f32 %v3530, %v3349
    %v3559 = vadd.f32 %v3551, %v3555
    %v3560 = vadd.f32 %v3552, %v3556
    %v3561 = vadd.f32 %v3553, %v3557
    %v3562 = vadd.f32 %v3554, %v3558
    %s3563 = sadd.s32 %s2301, 4
    %v3564 = vstv %s3563
    %vm3565 = vcmp.eq.s32.totalorder %v2300, %v3564
    %v3566 = vsel %vm3565, 1, 0
    %v3567 = vlaneseq
    %v3568 = vshrl.u32 %v3567, 7
    %v3569 = vsub.s32 0, %v3568
    %v3570 = vrot.slane %v3566, %v3569
    %vm3571 = vcmp.eq.s32.totalorder %v3570, 1
    %v3572 = vsel %vm3571, %v3559, %v3326
    %v3573 = vsel %vm3571, %v3560, %v3327
    %v3574 = vsel %vm3571, %v3561, %v3328
    %v3575 = vsel %vm3571, %v3562, %v3329
    %v3576 = vld [vmem:[%s2214] sm:$0xff]
    %v3577 = vld [vmem:[%s2214 + $0x8] sm:$0xff]
    %v3578 = vld [vmem:[%s2214 + $0x10] sm:$0xff]
    %v3579 = vld [vmem:[%s2214 + $0x18] sm:$0xff]
    %v3580 = vld [vmem:[%s2214 + $0x20] sm:$0xff]
    %v3581 = vld [vmem:[%s2214 + $0x28] sm:$0xff]
    %v3582 = vld [vmem:[%s2214 + $0x30] sm:$0xff]
    %v3583 = vld [vmem:[%s2214 + $0x38] sm:$0xff]
    %v3584 = vld [vmem:[%s2214 + $0x40] sm:$0xff]
    %v3585 = vld [vmem:[%s2214 + $0x48] sm:$0xff]
    %v3586 = vld [vmem:[%s2214 + $0x50] sm:$0xff]
    %v3587 = vld [vmem:[%s2214 + $0x58] sm:$0xff]
    %v3588 = vld [vmem:[%s2227] sm:$0xff]
    %v3589 = vld [vmem:[%s2227 + $0x8] sm:$0xff]
    %v3590 = vld [vmem:[%s2227 + $0x10] sm:$0xff]
    %v3591 = vld [vmem:[%s2227 + $0x18] sm:$0xff]
    %v3592 = vmul.f32 %v3588, %v3559
    %v3593 = vmul.f32 %v3589, %v3560
    %v3594 = vmul.f32 %v3590, %v3561
    %v3595 = vmul.f32 %v3591, %v3562
    %3596 = vmatprep.subr.mxu0 0.0
    %3597 = vmatpush1.msra.mxu0 %v3592
    %3598 = vmatprep.subr.mxu0 0.0
    %3599 = vmatpush1.msra.mxu0 %v3593
    %3600 = vmatprep.subr.mxu0 0.0
    %3601 = vmatpush1.msra.mxu0 %v3594
    %3602 = vmatprep.subr.mxu0 0.0
    %3603 = vmatpush1.msra.mxu0 %v3595
    %3604 = vmatprep.subr.mxu0 0.0
    %3605 = vmatpush1.msra.mxu0 0.0
    %3606 = vmatprep.subr.mxu0 0.0
    %3607 = vmatpush1.msra.mxu0 0.0
    %3608 = vmatprep.subr.mxu0 0.0
    %3609 = vmatpush1.msra.mxu0 0.0
    %3610 = vmatprep.subr.mxu0 0.0
    %3611 = vmatpush1.msra.mxu0 0.0
    %3612 = vmatprep.subr.mxu0 0.0
    %3613 = vmatpush1.msra.mxu0 0.0
    %3614 = vmatprep.subr.mxu0 0.0
    %3615 = vmatpush1.msra.mxu0 0.0
    %3616 = vmatprep.subr.mxu0 0.0
    %3617 = vmatpush1.msra.mxu0 0.0
    %3618 = vmatprep.subr.mxu0 0.0
    %3619 = vmatpush1.msra.mxu0 0.0
    %3620 = vmatprep.subr.mxu0 0.0
    %3621 = vmatpush1.msra.mxu0 0.0
    %3622 = vmatprep.subr.mxu0 0.0
    %3623 = vmatpush1.msra.mxu0 0.0
    %3624 = vmatprep.subr.mxu0 0.0
    %3625 = vmatpush1.msra.mxu0 0.0
    %3626 = vmatprep.subr.mxu0 0.0
    %3627 = vmatpush1.msra.mxu0 0.0
    %3628 = vmatprep.subr.mxu0 0.0
    %3629 = vmatpush1.msra.mxu0 0.0
    %3630 = vmatprep.subr.mxu0 0.0
    %3631 = vmatpush1.msra.mxu0 0.0
    %3632 = vmatprep.subr.mxu0 0.0
    %3633 = vmatpush1.msra.mxu0 0.0
    %3634 = vmatprep.subr.mxu0 0.0
    %3635 = vmatpush1.msra.mxu0 0.0
    %3636 = vmatprep.subr.mxu0 0.0
    %3637 = vmatpush1.msra.mxu0 0.0
    %3638 = vmatprep.subr.mxu0 0.0
    %3639 = vmatpush1.msra.mxu0 0.0
    %3640 = vmatprep.subr.mxu0 0.0
    %3641 = vmatpush1.msra.mxu0 0.0
    %3642 = vmatprep.subr.mxu0 0.0
    %3643 = vmatpush1.msra.mxu0 0.0
    %3644 = vmatprep.subr.mxu0 0.0
    %3645 = vmatpush1.msra.mxu0 0.0
    %3646 = vmatprep.subr.mxu0 0.0
    %3647 = vmatpush1.msra.mxu0 0.0
    %3648 = vmatprep.subr.mxu0 0.0
    %3649 = vmatpush1.msra.mxu0 0.0
    %3650 = vmatprep.subr.mxu0 0.0
    %3651 = vmatpush1.msra.mxu0 0.0
    %3652 = vmatprep.subr.mxu0 0.0
    %3653 = vmatpush1.msra.mxu0 0.0
    %3654 = vmatprep.subr.mxu0 0.0
    %3655 = vmatpush1.msra.mxu0 0.0
    %3656 = vmatprep.subr.mxu0 0.0
    %3657 = vmatpush1.msra.mxu0 0.0
    %3658 = vmatprep.subr.mxu0 0.0
    %3659 = vmatpush1.msra.mxu0 0.0
    %3660 = vmatprep.mubr.f32.mxu0 0.0
    %3661 = vmatmul.mubr.f32.gmra.mrb[0].mxu0 %v2332
    %v3662 = vpop.f32.mrb[0].mxu0
    %v3663 = vadd.f32 0.0, %v3662
    %v3664 = vpop.f32.mrb[0].mxu0
    %3665 = vmatprep.mubr.f32.mxu0 0.0
    %3666 = vmatmul.mubr.f32.gmra.mrb[0].mxu0 %v2335
    %v3667 = vpop.f32.mrb[0].mxu0
    %v3668 = vadd.f32 0.0, %v3667
    %v3669 = vpop.f32.mrb[0].mxu0
    %3670 = vmatprep.mubr.f32.mxu0 0.0
    %3671 = vmatmul.mubr.f32.gmra.mrb[0].mxu0 %v2338
    %v3672 = vpop.f32.mrb[0].mxu0
    %v3673 = vadd.f32 0.0, %v3672
    %v3674 = vpop.f32.mrb[0].mxu0
    %3675 = vmatprep.mubr.f32.mxu0 0.0
    %3676 = vmatmul.mubr.f32.gmra.mrb[0].mxu0 %v2341
    %v3677 = vpop.f32.mrb[0].mxu0
    %v3678 = vadd.f32 0.0, %v3677
    %v3679 = vpop.f32.mrb[0].mxu0
    %3680 = vmatprep.mubr.f32.mxu0 0.0
    %3681 = vmatmul.mubr.f32.gmra.mrb[0].mxu0 %v2344
    %v3682 = vpop.f32.mrb[0].mxu0
    %v3683 = vadd.f32 0.0, %v3682
    %v3684 = vpop.f32.mrb[0].mxu0
    %3685 = vmatprep.mubr.f32.mxu0 0.0
    %3686 = vmatmul.mubr.f32.gmra.mrb[0].mxu0 %v2347
    %v3687 = vpop.f32.mrb[0].mxu0
    %v3688 = vadd.f32 0.0, %v3687
    %v3689 = vpop.f32.mrb[0].mxu0
    %3690 = vmatprep.mubr.f32.mxu0 0.0
    %3691 = vmatmul.mubr.f32.gmra.mrb[0].mxu0 %v2350
    %v3692 = vpop.f32.mrb[0].mxu0
    %v3693 = vadd.f32 0.0, %v3692
    %v3694 = vpop.f32.mrb[0].mxu0
    %3695 = vmatprep.mubr.f32.mxu0 0.0
    %3696 = vmatmul.mubr.f32.gmra.mrb[0].mxu0 %v2353
    %v3697 = vpop.f32.mrb[0].mxu0
    %v3698 = vadd.f32 0.0, %v3697
    %v3699 = vpop.f32.mrb[0].mxu0
    %3700 = vmatprep.mubr.f32.mxu0 0.0
    %3701 = vmatmul.mubr.f32.gmra.mrb[0].mxu0 %v2356
    %v3702 = vpop.f32.mrb[0].mxu0
    %v3703 = vadd.f32 0.0, %v3702
    %v3704 = vpop.f32.mrb[0].mxu0
    %3705 = vmatprep.mubr.f32.mxu0 0.0
    %3706 = vmatmul.mubr.f32.gmra.mrb[0].mxu0 %v2359
    %v3707 = vpop.f32.mrb[0].mxu0
    %v3708 = vadd.f32 0.0, %v3707
    %v3709 = vpop.f32.mrb[0].mxu0
    %3710 = vmatprep.mubr.f32.mxu0 0.0
    %3711 = vmatmul.mubr.f32.gmra.mrb[0].mxu0 %v2362
    %v3712 = vpop.f32.mrb[0].mxu0
    %v3713 = vadd.f32 0.0, %v3712
    %v3714 = vpop.f32.mrb[0].mxu0
    %3715 = vmatprep.mubr.f32.mxu0 0.0
    %3716 = vmatmul.mubr.f32.gmra.mrb[0].mxu0 %v2365
    %v3717 = vpop.f32.mrb[0].mxu0
    %v3718 = vadd.f32 0.0, %v3717
    %v3719 = vpop.f32.mrb[0].mxu0
    %3720 = vdwg.mxu0
    %v3721 = vadd.f32 %v3576, %v3663
    %v3722 = vadd.f32 %v3577, %v3668
    %v3723 = vadd.f32 %v3578, %v3673
    %v3724 = vadd.f32 %v3579, %v3678
    %v3725 = vxor.u32 %v3721, 2147483648
    %v3726 = vxor.u32 %v3722, 2147483648
    %v3727 = vxor.u32 %v3723, 2147483648
    %v3728 = vxor.u32 %v3724, 2147483648
    %v3729 = vmul.f32 %v3725, 1.442695
    %v3730 = vpow.pop %v3729
    %v3731 = vmul.f32 %v3726, 1.442695
    %v3732 = vpow.pop %v3731
    %v3733 = vmul.f32 %v3727, 1.442695
    %v3734 = vpow.pop %v3733
    %v3735 = vmul.f32 %v3728, 1.442695
    %v3736 = vpow.pop %v3735
    %v3737 = vadd.f32 %v3730, 1.0
    %v3738 = vadd.f32 %v3732, 1.0
    %v3739 = vadd.f32 %v3734, 1.0
    %v3740 = vadd.f32 %v3736, 1.0
    %v3741 = vrcp.pop %v3737
    %v3742 = vmul.f32 1.0, %v3741
    %v3743 = vrcp.pop %v3738
    %v3744 = vmul.f32 1.0, %v3743
    %v3745 = vrcp.pop %v3739
    %v3746 = vmul.f32 1.0, %v3745
    %v3747 = vrcp.pop %v3740
    %v3748 = vmul.f32 1.0, %v3747
    %v3749 = vadd.f32 %v3580, %v3683
    %v3750 = vadd.f32 %v3581, %v3688
    %v3751 = vadd.f32 %v3582, %v3693
    %v3752 = vadd.f32 %v3583, %v3698
    %v3753 = vxor.u32 %v3749, 2147483648
    %v3754 = vxor.u32 %v3750, 2147483648
    %v3755 = vxor.u32 %v3751, 2147483648
    %v3756 = vxor.u32 %v3752, 2147483648
    %v3757 = vmul.f32 %v3753, 1.442695
    %v3758 = vpow.pop %v3757
    %v3759 = vmul.f32 %v3754, 1.442695
    %v3760 = vpow.pop %v3759
    %v3761 = vmul.f32 %v3755, 1.442695
    %v3762 = vpow.pop %v3761
    %v3763 = vmul.f32 %v3756, 1.442695
    %v3764 = vpow.pop %v3763
    %v3765 = vadd.f32 %v3758, 1.0
    %v3766 = vadd.f32 %v3760, 1.0
    %v3767 = vadd.f32 %v3762, 1.0
    %v3768 = vadd.f32 %v3764, 1.0
    %v3769 = vrcp.pop %v3765
    %v3770 = vmul.f32 1.0, %v3769
    %v3771 = vrcp.pop %v3766
    %v3772 = vmul.f32 1.0, %v3771
    %v3773 = vrcp.pop %v3767
    %v3774 = vmul.f32 1.0, %v3773
    %v3775 = vrcp.pop %v3768
    %v3776 = vmul.f32 1.0, %v3775
    %v3777 = vadd.f32 %v3703, %v2283
    %v3778 = vadd.f32 %v3708, %v2288
    %v3779 = vadd.f32 %v3713, %v2293
    %v3780 = vadd.f32 %v3718, %v2298
    %v3781 = vmul.f32 %v3742, %v3777
    %v3782 = vmul.f32 %v3744, %v3778
    %v3783 = vmul.f32 %v3746, %v3779
    %v3784 = vmul.f32 %v3748, %v3780
    %v3785 = vadd.f32 %v3584, %v3781
    %v3786 = vadd.f32 %v3585, %v3782
    %v3787 = vadd.f32 %v3586, %v3783
    %v3788 = vadd.f32 %v3587, %v3784
    %v3789 = vtanh.pop %v3785
    %v3790 = vtanh.pop %v3786
    %v3791 = vtanh.pop %v3787
    %v3792 = vtanh.pop %v3788
    %v3793 = vsub.f32 1.0, %v3770
    %v3794 = vsub.f32 1.0, %v3772
    %v3795 = vsub.f32 1.0, %v3774
    %v3796 = vsub.f32 1.0, %v3776
    %v3797 = vmul.f32 %v3793, %v3789
    %v3798 = vmul.f32 %v3794, %v3790
    %v3799 = vmul.f32 %v3795, %v3791
    %v3800 = vmul.f32 %v3796, %v3792
    %v3801 = vmul.f32 %v3770, %v3592
    %v3802 = vmul.f32 %v3772, %v3593
    %v3803 = vmul.f32 %v3774, %v3594
    %v3804 = vmul.f32 %v3776, %v3595
    %v3805 = vadd.f32 %v3797, %v3801
    %v3806 = vadd.f32 %v3798, %v3802
    %v3807 = vadd.f32 %v3799, %v3803
    %v3808 = vadd.f32 %v3800, %v3804
    %s3809 = sadd.s32 %s2301, 5
    %v3810 = vstv %s3809
    %vm3811 = vcmp.eq.s32.totalorder %v2300, %v3810
    %v3812 = vsel %vm3811, 1, 0
    %v3813 = vlaneseq
    %v3814 = vshrl.u32 %v3813, 7
    %v3815 = vsub.s32 0, %v3814
    %v3816 = vrot.slane %v3812, %v3815
    %vm3817 = vcmp.eq.s32.totalorder %v3816, 1
    %v3818 = vsel %vm3817, %v3805, %v3572
    %v3819 = vsel %vm3817, %v3806, %v3573
    %v3820 = vsel %vm3817, %v3807, %v3574
    %v3821 = vsel %vm3817, %v3808, %v3575
    %v3822 = vld [vmem:[%s2232] sm:$0xff]
    %v3823 = vld [vmem:[%s2232 + $0x8] sm:$0xff]
    %v3824 = vld [vmem:[%s2232 + $0x10] sm:$0xff]
    %v3825 = vld [vmem:[%s2232 + $0x18] sm:$0xff]
    %v3826 = vld [vmem:[%s2232 + $0x20] sm:$0xff]
    %v3827 = vld [vmem:[%s2232 + $0x28] sm:$0xff]
    %v3828 = vld [vmem:[%s2232 + $0x30] sm:$0xff]
    %v3829 = vld [vmem:[%s2232 + $0x38] sm:$0xff]
    %v3830 = vld [vmem:[%s2232 + $0x40] sm:$0xff]
    %v3831 = vld [vmem:[%s2232 + $0x48] sm:$0xff]
    %v3832 = vld [vmem:[%s2232 + $0x50] sm:$0xff]
    %v3833 = vld [vmem:[%s2232 + $0x58] sm:$0xff]
    %v3834 = vld [vmem:[%s2245] sm:$0xff]
    %v3835 = vld [vmem:[%s2245 + $0x8] sm:$0xff]
    %v3836 = vld [vmem:[%s2245 + $0x10] sm:$0xff]
    %v3837 = vld [vmem:[%s2245 + $0x18] sm:$0xff]
    %v3838 = vmul.f32 %v3834, %v3805
    %v3839 = vmul.f32 %v3835, %v3806
    %v3840 = vmul.f32 %v3836, %v3807
    %v3841 = vmul.f32 %v3837, %v3808
    %3842 = vmatprep.subr.mxu0 0.0
    %3843 = vmatpush1.msra.mxu0 %v3838
    %3844 = vmatprep.subr.mxu0 0.0
    %3845 = vmatpush1.msra.mxu0 %v3839
    %3846 = vmatprep.subr.mxu0 0.0
    %3847 = vmatpush1.msra.mxu0 %v3840
    %3848 = vmatprep.subr.mxu0 0.0
    %3849 = vmatpush1.msra.mxu0 %v3841
    %3850 = vmatprep.subr.mxu0 0.0
    %3851 = vmatpush1.msra.mxu0 0.0
    %3852 = vmatprep.subr.mxu0 0.0
    %3853 = vmatpush1.msra.mxu0 0.0
    %3854 = vmatprep.subr.mxu0 0.0
    %3855 = vmatpush1.msra.mxu0 0.0
    %3856 = vmatprep.subr.mxu0 0.0
    %3857 = vmatpush1.msra.mxu0 0.0
    %3858 = vmatprep.subr.mxu0 0.0
    %3859 = vmatpush1.msra.mxu0 0.0
    %3860 = vmatprep.subr.mxu0 0.0
    %3861 = vmatpush1.msra.mxu0 0.0
    %3862 = vmatprep.subr.mxu0 0.0
    %3863 = vmatpush1.msra.mxu0 0.0
    %3864 = vmatprep.subr.mxu0 0.0
    %3865 = vmatpush1.msra.mxu0 0.0
    %3866 = vmatprep.subr.mxu0 0.0
    %3867 = vmatpush1.msra.mxu0 0.0
    %3868 = vmatprep.subr.mxu0 0.0
    %3869 = vmatpush1.msra.mxu0 0.0
    %3870 = vmatprep.subr.mxu0 0.0
    %3871 = vmatpush1.msra.mxu0 0.0
    %3872 = vmatprep.subr.mxu0 0.0
    %3873 = vmatpush1.msra.mxu0 0.0
    %3874 = vmatprep.subr.mxu0 0.0
    %3875 = vmatpush1.msra.mxu0 0.0
    %3876 = vmatprep.subr.mxu0 0.0
    %3877 = vmatpush1.msra.mxu0 0.0
    %3878 = vmatprep.subr.mxu0 0.0
    %3879 = vmatpush1.msra.mxu0 0.0
    %3880 = vmatprep.subr.mxu0 0.0
    %3881 = vmatpush1.msra.mxu0 0.0
    %3882 = vmatprep.subr.mxu0 0.0
    %3883 = vmatpush1.msra.mxu0 0.0
    %3884 = vmatprep.subr.mxu0 0.0
    %3885 = vmatpush1.msra.mxu0 0.0
    %3886 = vmatprep.subr.mxu0 0.0
    %3887 = vmatpush1.msra.mxu0 0.0
    %3888 = vmatprep.subr.mxu0 0.0
    %3889 = vmatpush1.msra.mxu0 0.0
    %3890 = vmatprep.subr.mxu0 0.0
    %3891 = vmatpush1.msra.mxu0 0.0
    %3892 = vmatprep.subr.mxu0 0.0
    %3893 = vmatpush1.msra.mxu0 0.0
    %3894 = vmatprep.subr.mxu0 0.0
    %3895 = vmatpush1.msra.mxu0 0.0
    %3896 = vmatprep.subr.mxu0 0.0
    %3897 = vmatpush1.msra.mxu0 0.0
    %3898 = vmatprep.subr.mxu0 0.0
    %3899 = vmatpush1.msra.mxu0 0.0
    %3900 = vmatprep.subr.mxu0 0.0
    %3901 = vmatpush1.msra.mxu0 0.0
    %3902 = vmatprep.subr.mxu0 0.0
    %3903 = vmatpush1.msra.mxu0 0.0
    %3904 = vmatprep.subr.mxu0 0.0
    %3905 = vmatpush1.msra.mxu0 0.0
    %3906 = vmatprep.mubr.f32.mxu0 0.0
    %3907 = vmatmul.mubr.f32.gmra.mrb[0].mxu0 %v2332
    %v3908 = vpop.f32.mrb[0].mxu0
    %v3909 = vadd.f32 0.0, %v3908
    %v3910 = vpop.f32.mrb[0].mxu0
    %3911 = vmatprep.mubr.f32.mxu0 0.0
    %3912 = vmatmul.mubr.f32.gmra.mrb[0].mxu0 %v2335
    %v3913 = vpop.f32.mrb[0].mxu0
    %v3914 = vadd.f32 0.0, %v3913
    %v3915 = vpop.f32.mrb[0].mxu0
    %3916 = vmatprep.mubr.f32.mxu0 0.0
    %3917 = vmatmul.mubr.f32.gmra.mrb[0].mxu0 %v2338
    %v3918 = vpop.f32.mrb[0].mxu0
    %v3919 = vadd.f32 0.0, %v3918
    %v3920 = vpop.f32.mrb[0].mxu0
    %3921 = vmatprep.mubr.f32.mxu0 0.0
    %3922 = vmatmul.mubr.f32.gmra.mrb[0].mxu0 %v2341
    %v3923 = vpop.f32.mrb[0].mxu0
    %v3924 = vadd.f32 0.0, %v3923
    %v3925 = vpop.f32.mrb[0].mxu0
    %3926 = vmatprep.mubr.f32.mxu0 0.0
    %3927 = vmatmul.mubr.f32.gmra.mrb[0].mxu0 %v2344
    %v3928 = vpop.f32.mrb[0].mxu0
    %v3929 = vadd.f32 0.0, %v3928
    %v3930 = vpop.f32.mrb[0].mxu0
    %3931 = vmatprep.mubr.f32.mxu0 0.0
    %3932 = vmatmul.mubr.f32.gmra.mrb[0].mxu0 %v2347
    %v3933 = vpop.f32.mrb[0].mxu0
    %v3934 = vadd.f32 0.0, %v3933
    %v3935 = vpop.f32.mrb[0].mxu0
    %3936 = vmatprep.mubr.f32.mxu0 0.0
    %3937 = vmatmul.mubr.f32.gmra.mrb[0].mxu0 %v2350
    %v3938 = vpop.f32.mrb[0].mxu0
    %v3939 = vadd.f32 0.0, %v3938
    %v3940 = vpop.f32.mrb[0].mxu0
    %3941 = vmatprep.mubr.f32.mxu0 0.0
    %3942 = vmatmul.mubr.f32.gmra.mrb[0].mxu0 %v2353
    %v3943 = vpop.f32.mrb[0].mxu0
    %v3944 = vadd.f32 0.0, %v3943
    %v3945 = vpop.f32.mrb[0].mxu0
    %3946 = vmatprep.mubr.f32.mxu0 0.0
    %3947 = vmatmul.mubr.f32.gmra.mrb[0].mxu0 %v2356
    %v3948 = vpop.f32.mrb[0].mxu0
    %v3949 = vadd.f32 0.0, %v3948
    %v3950 = vpop.f32.mrb[0].mxu0
    %3951 = vmatprep.mubr.f32.mxu0 0.0
    %3952 = vmatmul.mubr.f32.gmra.mrb[0].mxu0 %v2359
    %v3953 = vpop.f32.mrb[0].mxu0
    %v3954 = vadd.f32 0.0, %v3953
    %v3955 = vpop.f32.mrb[0].mxu0
    %3956 = vmatprep.mubr.f32.mxu0 0.0
    %3957 = vmatmul.mubr.f32.gmra.mrb[0].mxu0 %v2362
    %v3958 = vpop.f32.mrb[0].mxu0
    %v3959 = vadd.f32 0.0, %v3958
    %v3960 = vpop.f32.mrb[0].mxu0
    %3961 = vmatprep.mubr.f32.mxu0 0.0
    %3962 = vmatmul.mubr.f32.gmra.mrb[0].mxu0 %v2365
    %v3963 = vpop.f32.mrb[0].mxu0
    %v3964 = vadd.f32 0.0, %v3963
    %v3965 = vpop.f32.mrb[0].mxu0
    %3966 = vdwg.mxu0
    %v3967 = vadd.f32 %v3822, %v3909
    %v3968 = vadd.f32 %v3823, %v3914
    %v3969 = vadd.f32 %v3824, %v3919
    %v3970 = vadd.f32 %v3825, %v3924
    %v3971 = vxor.u32 %v3967, 2147483648
    %v3972 = vxor.u32 %v3968, 2147483648
    %v3973 = vxor.u32 %v3969, 2147483648
    %v3974 = vxor.u32 %v3970, 2147483648
    %v3975 = vmul.f32 %v3971, 1.442695
    %v3976 = vpow.pop %v3975
    %v3977 = vmul.f32 %v3972, 1.442695
    %v3978 = vpow.pop %v3977
    %v3979 = vmul.f32 %v3973, 1.442695
    %v3980 = vpow.pop %v3979
    %v3981 = vmul.f32 %v3974, 1.442695
    %v3982 = vpow.pop %v3981
    %v3983 = vadd.f32 %v3976, 1.0
    %v3984 = vadd.f32 %v3978, 1.0
    %v3985 = vadd.f32 %v3980, 1.0
    %v3986 = vadd.f32 %v3982, 1.0
    %v3987 = vrcp.pop %v3983
    %v3988 = vmul.f32 1.0, %v3987
    %v3989 = vrcp.pop %v3984
    %v3990 = vmul.f32 1.0, %v3989
    %v3991 = vrcp.pop %v3985
    %v3992 = vmul.f32 1.0, %v3991
    %v3993 = vrcp.pop %v3986
    %v3994 = vmul.f32 1.0, %v3993
    %v3995 = vadd.f32 %v3826, %v3929
    %v3996 = vadd.f32 %v3827, %v3934
    %v3997 = vadd.f32 %v3828, %v3939
    %v3998 = vadd.f32 %v3829, %v3944
    %v3999 = vxor.u32 %v3995, 2147483648
    %v4000 = vxor.u32 %v3996, 2147483648
    %v4001 = vxor.u32 %v3997, 2147483648
    %v4002 = vxor.u32 %v3998, 2147483648
    %v4003 = vmul.f32 %v3999, 1.442695
    %v4004 = vpow.pop %v4003
    %v4005 = vmul.f32 %v4000, 1.442695
    %v4006 = vpow.pop %v4005
    %v4007 = vmul.f32 %v4001, 1.442695
    %v4008 = vpow.pop %v4007
    %v4009 = vmul.f32 %v4002, 1.442695
    %v4010 = vpow.pop %v4009
    %v4011 = vadd.f32 %v4004, 1.0
    %v4012 = vadd.f32 %v4006, 1.0
    %v4013 = vadd.f32 %v4008, 1.0
    %v4014 = vadd.f32 %v4010, 1.0
    %v4015 = vrcp.pop %v4011
    %v4016 = vmul.f32 1.0, %v4015
    %v4017 = vrcp.pop %v4012
    %v4018 = vmul.f32 1.0, %v4017
    %v4019 = vrcp.pop %v4013
    %v4020 = vmul.f32 1.0, %v4019
    %v4021 = vrcp.pop %v4014
    %v4022 = vmul.f32 1.0, %v4021
    %v4023 = vadd.f32 %v3949, %v2283
    %v4024 = vadd.f32 %v3954, %v2288
    %v4025 = vadd.f32 %v3959, %v2293
    %v4026 = vadd.f32 %v3964, %v2298
    %v4027 = vmul.f32 %v3988, %v4023
    %v4028 = vmul.f32 %v3990, %v4024
    %v4029 = vmul.f32 %v3992, %v4025
    %v4030 = vmul.f32 %v3994, %v4026
    %v4031 = vadd.f32 %v3830, %v4027
    %v4032 = vadd.f32 %v3831, %v4028
    %v4033 = vadd.f32 %v3832, %v4029
    %v4034 = vadd.f32 %v3833, %v4030
    %v4035 = vtanh.pop %v4031
    %v4036 = vtanh.pop %v4032
    %v4037 = vtanh.pop %v4033
    %v4038 = vtanh.pop %v4034
    %v4039 = vsub.f32 1.0, %v4016
    %v4040 = vsub.f32 1.0, %v4018
    %v4041 = vsub.f32 1.0, %v4020
    %v4042 = vsub.f32 1.0, %v4022
    %v4043 = vmul.f32 %v4039, %v4035
    %v4044 = vmul.f32 %v4040, %v4036
    %v4045 = vmul.f32 %v4041, %v4037
    %v4046 = vmul.f32 %v4042, %v4038
    %v4047 = vmul.f32 %v4016, %v3838
    %v4048 = vmul.f32 %v4018, %v3839
    %v4049 = vmul.f32 %v4020, %v3840
    %v4050 = vmul.f32 %v4022, %v3841
    %v4051 = vadd.f32 %v4043, %v4047
    %v4052 = vadd.f32 %v4044, %v4048
    %v4053 = vadd.f32 %v4045, %v4049
    %v4054 = vadd.f32 %v4046, %v4050
    %s4055 = sadd.s32 %s2301, 6
    %v4056 = vstv %s4055
    %vm4057 = vcmp.eq.s32.totalorder %v2300, %v4056
    %v4058 = vsel %vm4057, 1, 0
    %v4059 = vlaneseq
    %v4060 = vshrl.u32 %v4059, 7
    %v4061 = vsub.s32 0, %v4060
    %v4062 = vrot.slane %v4058, %v4061
    %vm4063 = vcmp.eq.s32.totalorder %v4062, 1
    %v4064 = vsel %vm4063, %v4051, %v3818
    %v4065 = vsel %vm4063, %v4052, %v3819
    %v4066 = vsel %vm4063, %v4053, %v3820
    %v4067 = vsel %vm4063, %v4054, %v3821
    %v4068 = vld [vmem:[%s2250] sm:$0xff]
    %v4069 = vld [vmem:[%s2250 + $0x8] sm:$0xff]
    %v4070 = vld [vmem:[%s2250 + $0x10] sm:$0xff]
    %v4071 = vld [vmem:[%s2250 + $0x18] sm:$0xff]
    %v4072 = vld [vmem:[%s2250 + $0x20] sm:$0xff]
    %v4073 = vld [vmem:[%s2250 + $0x28] sm:$0xff]
    %v4074 = vld [vmem:[%s2250 + $0x30] sm:$0xff]
    %v4075 = vld [vmem:[%s2250 + $0x38] sm:$0xff]
    %v4076 = vld [vmem:[%s2250 + $0x40] sm:$0xff]
    %v4077 = vld [vmem:[%s2250 + $0x48] sm:$0xff]
    %v4078 = vld [vmem:[%s2250 + $0x50] sm:$0xff]
    %v4079 = vld [vmem:[%s2250 + $0x58] sm:$0xff]
    %v4080 = vld [vmem:[%s2263] sm:$0xff]
    %v4081 = vld [vmem:[%s2263 + $0x8] sm:$0xff]
    %v4082 = vld [vmem:[%s2263 + $0x10] sm:$0xff]
    %v4083 = vld [vmem:[%s2263 + $0x18] sm:$0xff]
    %v4084 = vmul.f32 %v4080, %v4051
    %v4085 = vmul.f32 %v4081, %v4052
    %v4086 = vmul.f32 %v4082, %v4053
    %v4087 = vmul.f32 %v4083, %v4054
    %4088 = vmatprep.subr.mxu0 0.0
    %4089 = vmatpush1.msra.mxu0 %v4084
    %4090 = vmatprep.subr.mxu0 0.0
    %4091 = vmatpush1.msra.mxu0 %v4085
    %4092 = vmatprep.subr.mxu0 0.0
    %4093 = vmatpush1.msra.mxu0 %v4086
    %4094 = vmatprep.subr.mxu0 0.0
    %4095 = vmatpush1.msra.mxu0 %v4087
    %4096 = vmatprep.subr.mxu0 0.0
    %4097 = vmatpush1.msra.mxu0 0.0
    %4098 = vmatprep.subr.mxu0 0.0
    %4099 = vmatpush1.msra.mxu0 0.0
    %4100 = vmatprep.subr.mxu0 0.0
    %4101 = vmatpush1.msra.mxu0 0.0
    %4102 = vmatprep.subr.mxu0 0.0
    %4103 = vmatpush1.msra.mxu0 0.0
    %4104 = vmatprep.subr.mxu0 0.0
    %4105 = vmatpush1.msra.mxu0 0.0
    %4106 = vmatprep.subr.mxu0 0.0
    %4107 = vmatpush1.msra.mxu0 0.0
    %4108 = vmatprep.subr.mxu0 0.0
    %4109 = vmatpush1.msra.mxu0 0.0
    %4110 = vmatprep.subr.mxu0 0.0
    %4111 = vmatpush1.msra.mxu0 0.0
    %4112 = vmatprep.subr.mxu0 0.0
    %4113 = vmatpush1.msra.mxu0 0.0
    %4114 = vmatprep.subr.mxu0 0.0
    %4115 = vmatpush1.msra.mxu0 0.0
    %4116 = vmatprep.subr.mxu0 0.0
    %4117 = vmatpush1.msra.mxu0 0.0
    %4118 = vmatprep.subr.mxu0 0.0
    %4119 = vmatpush1.msra.mxu0 0.0
    %4120 = vmatprep.subr.mxu0 0.0
    %4121 = vmatpush1.msra.mxu0 0.0
    %4122 = vmatprep.subr.mxu0 0.0
    %4123 = vmatpush1.msra.mxu0 0.0
    %4124 = vmatprep.subr.mxu0 0.0
    %4125 = vmatpush1.msra.mxu0 0.0
    %4126 = vmatprep.subr.mxu0 0.0
    %4127 = vmatpush1.msra.mxu0 0.0
    %4128 = vmatprep.subr.mxu0 0.0
    %4129 = vmatpush1.msra.mxu0 0.0
    %4130 = vmatprep.subr.mxu0 0.0
    %4131 = vmatpush1.msra.mxu0 0.0
    %4132 = vmatprep.subr.mxu0 0.0
    %4133 = vmatpush1.msra.mxu0 0.0
    %4134 = vmatprep.subr.mxu0 0.0
    %4135 = vmatpush1.msra.mxu0 0.0
    %4136 = vmatprep.subr.mxu0 0.0
    %4137 = vmatpush1.msra.mxu0 0.0
    %4138 = vmatprep.subr.mxu0 0.0
    %4139 = vmatpush1.msra.mxu0 0.0
    %4140 = vmatprep.subr.mxu0 0.0
    %4141 = vmatpush1.msra.mxu0 0.0
    %4142 = vmatprep.subr.mxu0 0.0
    %4143 = vmatpush1.msra.mxu0 0.0
    %4144 = vmatprep.subr.mxu0 0.0
    %4145 = vmatpush1.msra.mxu0 0.0
    %4146 = vmatprep.subr.mxu0 0.0
    %4147 = vmatpush1.msra.mxu0 0.0
    %4148 = vmatprep.subr.mxu0 0.0
    %4149 = vmatpush1.msra.mxu0 0.0
    %4150 = vmatprep.subr.mxu0 0.0
    %4151 = vmatpush1.msra.mxu0 0.0
    %4152 = vmatprep.mubr.f32.mxu0 0.0
    %4153 = vmatmul.mubr.f32.gmra.mrb[0].mxu0 %v2332
    %v4154 = vpop.f32.mrb[0].mxu0
    %v4155 = vadd.f32 0.0, %v4154
    %v4156 = vpop.f32.mrb[0].mxu0
    %4157 = vmatprep.mubr.f32.mxu0 0.0
    %4158 = vmatmul.mubr.f32.gmra.mrb[0].mxu0 %v2335
    %v4159 = vpop.f32.mrb[0].mxu0
    %v4160 = vadd.f32 0.0, %v4159
    %v4161 = vpop.f32.mrb[0].mxu0
    %4162 = vmatprep.mubr.f32.mxu0 0.0
    %4163 = vmatmul.mubr.f32.gmra.mrb[0].mxu0 %v2338
    %v4164 = vpop.f32.mrb[0].mxu0
    %v4165 = vadd.f32 0.0, %v4164
    %v4166 = vpop.f32.mrb[0].mxu0
    %4167 = vmatprep.mubr.f32.mxu0 0.0
    %4168 = vmatmul.mubr.f32.gmra.mrb[0].mxu0 %v2341
    %v4169 = vpop.f32.mrb[0].mxu0
    %v4170 = vadd.f32 0.0, %v4169
    %v4171 = vpop.f32.mrb[0].mxu0
    %4172 = vmatprep.mubr.f32.mxu0 0.0
    %4173 = vmatmul.mubr.f32.gmra.mrb[0].mxu0 %v2344
    %v4174 = vpop.f32.mrb[0].mxu0
    %v4175 = vadd.f32 0.0, %v4174
    %v4176 = vpop.f32.mrb[0].mxu0
    %4177 = vmatprep.mubr.f32.mxu0 0.0
    %4178 = vmatmul.mubr.f32.gmra.mrb[0].mxu0 %v2347
    %v4179 = vpop.f32.mrb[0].mxu0
    %v4180 = vadd.f32 0.0, %v4179
    %v4181 = vpop.f32.mrb[0].mxu0
    %4182 = vmatprep.mubr.f32.mxu0 0.0
    %4183 = vmatmul.mubr.f32.gmra.mrb[0].mxu0 %v2350
    %v4184 = vpop.f32.mrb[0].mxu0
    %v4185 = vadd.f32 0.0, %v4184
    %v4186 = vpop.f32.mrb[0].mxu0
    %4187 = vmatprep.mubr.f32.mxu0 0.0
    %4188 = vmatmul.mubr.f32.gmra.mrb[0].mxu0 %v2353
    %v4189 = vpop.f32.mrb[0].mxu0
    %v4190 = vadd.f32 0.0, %v4189
    %v4191 = vpop.f32.mrb[0].mxu0
    %4192 = vmatprep.mubr.f32.mxu0 0.0
    %4193 = vmatmul.mubr.f32.gmra.mrb[0].mxu0 %v2356
    %v4194 = vpop.f32.mrb[0].mxu0
    %v4195 = vadd.f32 0.0, %v4194
    %v4196 = vpop.f32.mrb[0].mxu0
    %4197 = vmatprep.mubr.f32.mxu0 0.0
    %4198 = vmatmul.mubr.f32.gmra.mrb[0].mxu0 %v2359
    %v4199 = vpop.f32.mrb[0].mxu0
    %v4200 = vadd.f32 0.0, %v4199
    %v4201 = vpop.f32.mrb[0].mxu0
    %4202 = vmatprep.mubr.f32.mxu0 0.0
    %4203 = vmatmul.mubr.f32.gmra.mrb[0].mxu0 %v2362
    %v4204 = vpop.f32.mrb[0].mxu0
    %v4205 = vadd.f32 0.0, %v4204
    %v4206 = vpop.f32.mrb[0].mxu0
    %4207 = vmatprep.mubr.f32.mxu0 0.0
    %4208 = vmatmul.mubr.f32.gmra.mrb[0].mxu0 %v2365
    %v4209 = vpop.f32.mrb[0].mxu0
    %v4210 = vadd.f32 0.0, %v4209
    %v4211 = vpop.f32.mrb[0].mxu0
    %4212 = vdwg.mxu0
    %v4213 = vadd.f32 %v4068, %v4155
    %v4214 = vadd.f32 %v4069, %v4160
    %v4215 = vadd.f32 %v4070, %v4165
    %v4216 = vadd.f32 %v4071, %v4170
    %v4217 = vxor.u32 %v4213, 2147483648
    %v4218 = vxor.u32 %v4214, 2147483648
    %v4219 = vxor.u32 %v4215, 2147483648
    %v4220 = vxor.u32 %v4216, 2147483648
    %v4221 = vmul.f32 %v4217, 1.442695
    %v4222 = vpow.pop %v4221
    %v4223 = vmul.f32 %v4218, 1.442695
    %v4224 = vpow.pop %v4223
    %v4225 = vmul.f32 %v4219, 1.442695
    %v4226 = vpow.pop %v4225
    %v4227 = vmul.f32 %v4220, 1.442695
    %v4228 = vpow.pop %v4227
    %v4229 = vadd.f32 %v4222, 1.0
    %v4230 = vadd.f32 %v4224, 1.0
    %v4231 = vadd.f32 %v4226, 1.0
    %v4232 = vadd.f32 %v4228, 1.0
    %v4233 = vrcp.pop %v4229
    %v4234 = vmul.f32 1.0, %v4233
    %v4235 = vrcp.pop %v4230
    %v4236 = vmul.f32 1.0, %v4235
    %v4237 = vrcp.pop %v4231
    %v4238 = vmul.f32 1.0, %v4237
    %v4239 = vrcp.pop %v4232
    %v4240 = vmul.f32 1.0, %v4239
    %v4241 = vadd.f32 %v4072, %v4175
    %v4242 = vadd.f32 %v4073, %v4180
    %v4243 = vadd.f32 %v4074, %v4185
    %v4244 = vadd.f32 %v4075, %v4190
    %v4245 = vxor.u32 %v4241, 2147483648
    %v4246 = vxor.u32 %v4242, 2147483648
    %v4247 = vxor.u32 %v4243, 2147483648
    %v4248 = vxor.u32 %v4244, 2147483648
    %v4249 = vmul.f32 %v4245, 1.442695
    %v4250 = vpow.pop %v4249
    %v4251 = vmul.f32 %v4246, 1.442695
    %v4252 = vpow.pop %v4251
    %v4253 = vmul.f32 %v4247, 1.442695
    %v4254 = vpow.pop %v4253
    %v4255 = vmul.f32 %v4248, 1.442695
    %v4256 = vpow.pop %v4255
    %v4257 = vadd.f32 %v4250, 1.0
    %v4258 = vadd.f32 %v4252, 1.0
    %v4259 = vadd.f32 %v4254, 1.0
    %v4260 = vadd.f32 %v4256, 1.0
    %v4261 = vrcp.pop %v4257
    %v4262 = vmul.f32 1.0, %v4261
    %v4263 = vrcp.pop %v4258
    %v4264 = vmul.f32 1.0, %v4263
    %v4265 = vrcp.pop %v4259
    %v4266 = vmul.f32 1.0, %v4265
    %v4267 = vrcp.pop %v4260
    %v4268 = vmul.f32 1.0, %v4267
    %v4269 = vadd.f32 %v4195, %v2283
    %v4270 = vadd.f32 %v4200, %v2288
    %v4271 = vadd.f32 %v4205, %v2293
    %v4272 = vadd.f32 %v4210, %v2298
    %v4273 = vmul.f32 %v4234, %v4269
    %v4274 = vmul.f32 %v4236, %v4270
    %v4275 = vmul.f32 %v4238, %v4271
    %v4276 = vmul.f32 %v4240, %v4272
    %v4277 = vadd.f32 %v4076, %v4273
    %v4278 = vadd.f32 %v4077, %v4274
    %v4279 = vadd.f32 %v4078, %v4275
    %v4280 = vadd.f32 %v4079, %v4276
    %v4281 = vtanh.pop %v4277
    %v4282 = vtanh.pop %v4278
    %v4283 = vtanh.pop %v4279
    %v4284 = vtanh.pop %v4280
    %v4285 = vsub.f32 1.0, %v4262
    %v4286 = vsub.f32 1.0, %v4264
    %v4287 = vsub.f32 1.0, %v4266
    %v4288 = vsub.f32 1.0, %v4268
    %v4289 = vmul.f32 %v4285, %v4281
    %v4290 = vmul.f32 %v4286, %v4282
    %v4291 = vmul.f32 %v4287, %v4283
    %v4292 = vmul.f32 %v4288, %v4284
    %v4293 = vmul.f32 %v4262, %v4084
    %v4294 = vmul.f32 %v4264, %v4085
    %v4295 = vmul.f32 %v4266, %v4086
    %v4296 = vmul.f32 %v4268, %v4087
    %v4297 = vadd.f32 %v4289, %v4293
    %v4298 = vadd.f32 %v4290, %v4294
    %v4299 = vadd.f32 %v4291, %v4295
    %v4300 = vadd.f32 %v4292, %v4296
    %s4301 = sadd.s32 %s2301, 7
    %v4302 = vstv %s4301
    %vm4303 = vcmp.eq.s32.totalorder %v2300, %v4302
    %v4304 = vsel %vm4303, 1, 0
    %v4305 = vlaneseq
    %v4306 = vshrl.u32 %v4305, 7
    %v4307 = vsub.s32 0, %v4306
    %v4308 = vrot.slane %v4304, %v4307
    %vm4309 = vcmp.eq.s32.totalorder %v4308, 1
    %v4310 = vsel %vm4309, %v4297, %v4064
    %v4311 = vsel %vm4309, %v4298, %v4065
    %v4312 = vsel %vm4309, %v4299, %v4066
    %v4313 = vsel %vm4309, %v4300, %v4067
    %4314 = vst [vmem:[#allocation2] sm:$0xff] %v4297
    %4315 = vst [vmem:[#allocation2 + $0x8] sm:$0xff] %v4298
    %4316 = vst [vmem:[#allocation2 + $0x10] sm:$0xff] %v4299
    %4317 = vst [vmem:[#allocation2 + $0x18] sm:$0xff] %v4300
    %4318 = vst [vmem:[#allocation3] sm:$0xff] %v4310
    %4319 = vst [vmem:[#allocation3 + $0x8] sm:$0xff] %v4311
    %4320 = vst [vmem:[#allocation3 + $0x10] sm:$0xff] %v4312
    %4321 = vst [vmem:[#allocation3 + $0x18] sm:$0xff] %v4313
    // Predicated region
    $region58: #{tpu_custom_call.1} parent=1 // pred_check
      %p4322 = pneg %p45
    $region59: #{tpu_custom_call.1} parent=1 // pred_check_branch
      %4324 = sbr.rel (%p4322) target = $region61
    $region60: #{tpu_custom_call.1} parent=1 // pred_region
      %v4325 = vld [vmem:[#allocation3] sm:$0xff]
      %v4326 = vld [vmem:[#allocation3 + $0x8] sm:$0xff]
      %v4327 = vld [vmem:[#allocation3 + $0x10] sm:$0xff]
      %v4328 = vld [vmem:[#allocation3 + $0x18] sm:$0xff]
      %v4329 = vld [vmem:[%s9 + $0x60] sm:$0xff]
      %v4330 = vld [vmem:[%s9 + $0x68] sm:$0xff]
      %v4331 = vld [vmem:[%s9 + $0x70] sm:$0xff]
      %v4332 = vld [vmem:[%s9 + $0x78] sm:$0xff]
      %v4333 = vld [vmem:[%s9 + $0x80] sm:$0xff]
      %v4334 = vld [vmem:[%s9 + $0x88] sm:$0xff]
      %v4335 = vld [vmem:[%s9 + $0x90] sm:$0xff]
      %v4336 = vld [vmem:[%s9 + $0x98] sm:$0xff]
      %v4337 = vld [vmem:[%s9 + $0xa0] sm:$0xff]
      %v4338 = vld [vmem:[%s9 + $0xa8] sm:$0xff]
      %v4339 = vld [vmem:[%s9 + $0xb0] sm:$0xff]
      %v4340 = vld [vmem:[%s9 + $0xb8] sm:$0xff]
      %v4341 = vld [vmem:[%s9 + $0xc0] sm:$0xff]
      %v4342 = vld [vmem:[%s9 + $0xc8] sm:$0xff]
      %v4343 = vld [vmem:[%s9 + $0xd0] sm:$0xff]
      %v4344 = vld [vmem:[%s9 + $0xd8] sm:$0xff]
      %v4345 = vld [vmem:[%s5] sm:$0x1]
      %v4346 = vld [vmem:[%s5 + $0x1] sm:$0x1]
      %v4347 = vld [vmem:[%s10] sm:$0xff]
      %v4348 = vld [vmem:[%s10 + $0x8] sm:$0xff]
      %v4349 = vld [vmem:[%s10 + $0x10] sm:$0xff]
      %v4350 = vld [vmem:[%s10 + $0x18] sm:$0xff]
      %v4351 = vld [vmem:[%s10 + $0x20] sm:$0xff]
      %v4352 = vld [vmem:[%s10 + $0x28] sm:$0xff]
      %v4353 = vld [vmem:[%s10 + $0x30] sm:$0xff]
      %v4354 = vld [vmem:[%s10 + $0x38] sm:$0xff]
      %v4355 = vld [vmem:[%s10 + $0x40] sm:$0xff]
      %v4356 = vld [vmem:[%s10 + $0x48] sm:$0xff]
      %v4357 = vld [vmem:[%s10 + $0x50] sm:$0xff]
      %v4358 = vld [vmem:[%s10 + $0x58] sm:$0xff]
      %v4359 = vld [vmem:[%s10 + $0x60] sm:$0xff]
      %v4360 = vld [vmem:[%s10 + $0x68] sm:$0xff]
      %v4361 = vld [vmem:[%s10 + $0x70] sm:$0xff]
      %v4362 = vld [vmem:[%s10 + $0x78] sm:$0xff]
      %4364 = vset.pattern.permute.xlu0 0
      %4365 = vperm.xlu0 %4364, %v4347
      %v4366 = vpop.permute.xlu0 %4365
      %4369 = vset.pattern.permute.xlu0 0
      %4370 = vperm.xlu0 %4369, %v4348
      %v4371 = vpop.permute.xlu0 %4370
      %4374 = vset.pattern.permute.xlu0 0
      %4375 = vperm.xlu0 %4374, %v4349
      %v4376 = vpop.permute.xlu0 %4375
      %4379 = vset.pattern.permute.xlu0 0
      %4380 = vperm.xlu0 %4379, %v4350
      %v4381 = vpop.permute.xlu0 %4380
      %4384 = vset.pattern.permute.xlu0 0
      %4385 = vperm.xlu0 %4384, %v4351
      %v4386 = vpop.permute.xlu0 %4385
      %4389 = vset.pattern.permute.xlu0 0
      %4390 = vperm.xlu0 %4389, %v4352
      %v4391 = vpop.permute.xlu0 %4390
      %4394 = vset.pattern.permute.xlu0 0
      %4395 = vperm.xlu0 %4394, %v4353
      %v4396 = vpop.permute.xlu0 %4395
      %4399 = vset.pattern.permute.xlu0 0
      %4400 = vperm.xlu0 %4399, %v4354
      %v4401 = vpop.permute.xlu0 %4400
      %4404 = vset.pattern.permute.xlu0 0
      %4405 = vperm.xlu0 %4404, %v4355
      %v4406 = vpop.permute.xlu0 %4405
      %4409 = vset.pattern.permute.xlu0 0
      %4410 = vperm.xlu0 %4409, %v4356
      %v4411 = vpop.permute.xlu0 %4410
      %4414 = vset.pattern.permute.xlu0 0
      %4415 = vperm.xlu0 %4414, %v4357
      %v4416 = vpop.permute.xlu0 %4415
      %4419 = vset.pattern.permute.xlu0 0
      %4420 = vperm.xlu0 %4419, %v4358
      %v4421 = vpop.permute.xlu0 %4420
      %4424 = vset.pattern.permute.xlu0 0
      %4425 = vperm.xlu0 %4424, %v4359
      %v4426 = vpop.permute.xlu0 %4425
      %4429 = vset.pattern.permute.xlu0 0
      %4430 = vperm.xlu0 %4429, %v4360
      %v4431 = vpop.permute.xlu0 %4430
      %4434 = vset.pattern.permute.xlu0 0
      %4435 = vperm.xlu0 %4434, %v4361
      %v4436 = vpop.permute.xlu0 %4435
      %4439 = vset.pattern.permute.xlu0 0
      %4440 = vperm.xlu0 %4439, %v4362
      %v4441 = vpop.permute.xlu0 %4440
      %v4443 = vlaneseq
      %v4444 = vshrl.u32 %v4443, 7
      %v4445 = vsub.s32 0, %v4444
      %v4446 = vrot.slane %v4345, %v4445
      %v4447 = vmul.f32 %v4366, %v4446
      %v4448 = vmul.f32 %v4371, %v4446
      %v4449 = vmul.f32 %v4376, %v4446
      %v4450 = vmul.f32 %v4381, %v4446
      %v4451 = vmul.f32 %v4386, %v4446
      %v4452 = vmul.f32 %v4391, %v4446
      %v4453 = vmul.f32 %v4396, %v4446
      %v4454 = vmul.f32 %v4401, %v4446
      %v4455 = vmul.f32 %v4406, %v4446
      %v4456 = vmul.f32 %v4411, %v4446
      %v4457 = vmul.f32 %v4416, %v4446
      %v4458 = vmul.f32 %v4421, %v4446
      %v4459 = vmul.f32 %v4426, %v4446
      %v4460 = vmul.f32 %v4431, %v4446
      %v4461 = vmul.f32 %v4436, %v4446
      %v4462 = vmul.f32 %v4441, %v4446
      %v4464 = vsel %vm2330, %v4329, 0
      %v4467 = vsel %vm2330, %v4330, 0
      %v4470 = vsel %vm2330, %v4331, 0
      %v4473 = vsel %vm2330, %v4332, 0
      %v4476 = vsel %vm2330, %v4333, 0
      %v4479 = vsel %vm2330, %v4334, 0
      %v4482 = vsel %vm2330, %v4335, 0
      %v4485 = vsel %vm2330, %v4336, 0
      %v4488 = vsel %vm2330, %v4337, 0
      %v4491 = vsel %vm2330, %v4338, 0
      %v4494 = vsel %vm2330, %v4339, 0
      %v4497 = vsel %vm2330, %v4340, 0
      %v4500 = vsel %vm2330, %v4341, 0
      %v4503 = vsel %vm2330, %v4342, 0
      %v4506 = vsel %vm2330, %v4343, 0
      %v4509 = vsel %vm2330, %v4344, 0
      %4511 = vmatprep.subr.mxu0 0.0
      %4512 = vmatpush1.msra.mxu0 %v4325
      %4513 = vmatprep.subr.mxu0 0.0
      %4514 = vmatpush1.msra.mxu0 %v4326
      %4515 = vmatprep.subr.mxu0 0.0
      %4516 = vmatpush1.msra.mxu0 %v4327
      %4517 = vmatprep.subr.mxu0 0.0
      %4518 = vmatpush1.msra.mxu0 %v4328
      %4519 = vmatprep.subr.mxu0 0.0
      %4520 = vmatpush1.msra.mxu0 0.0
      %4521 = vmatprep.subr.mxu0 0.0
      %4522 = vmatpush1.msra.mxu0 0.0
      %4523 = vmatprep.subr.mxu0 0.0
      %4524 = vmatpush1.msra.mxu0 0.0
      %4525 = vmatprep.subr.mxu0 0.0
      %4526 = vmatpush1.msra.mxu0 0.0
      %4527 = vmatprep.subr.mxu0 0.0
      %4528 = vmatpush1.msra.mxu0 0.0
      %4529 = vmatprep.subr.mxu0 0.0
      %4530 = vmatpush1.msra.mxu0 0.0
      %4531 = vmatprep.subr.mxu0 0.0
      %4532 = vmatpush1.msra.mxu0 0.0
      %4533 = vmatprep.subr.mxu0 0.0
      %4534 = vmatpush1.msra.mxu0 0.0
      %4535 = vmatprep.subr.mxu0 0.0
      %4536 = vmatpush1.msra.mxu0 0.0
      %4537 = vmatprep.subr.mxu0 0.0
      %4538 = vmatpush1.msra.mxu0 0.0
      %4539 = vmatprep.subr.mxu0 0.0
      %4540 = vmatpush1.msra.mxu0 0.0
      %4541 = vmatprep.subr.mxu0 0.0
      %4542 = vmatpush1.msra.mxu0 0.0
      %4543 = vmatprep.subr.mxu0 0.0
      %4544 = vmatpush1.msra.mxu0 0.0
      %4545 = vmatprep.subr.mxu0 0.0
      %4546 = vmatpush1.msra.mxu0 0.0
      %4547 = vmatprep.subr.mxu0 0.0
      %4548 = vmatpush1.msra.mxu0 0.0
      %4549 = vmatprep.subr.mxu0 0.0
      %4550 = vmatpush1.msra.mxu0 0.0
      %4551 = vmatprep.subr.mxu0 0.0
      %4552 = vmatpush1.msra.mxu0 0.0
      %4553 = vmatprep.subr.mxu0 0.0
      %4554 = vmatpush1.msra.mxu0 0.0
      %4555 = vmatprep.subr.mxu0 0.0
      %4556 = vmatpush1.msra.mxu0 0.0
      %4557 = vmatprep.subr.mxu0 0.0
      %4558 = vmatpush1.msra.mxu0 0.0
      %4559 = vmatprep.subr.mxu0 0.0
      %4560 = vmatpush1.msra.mxu0 0.0
      %4561 = vmatprep.subr.mxu0 0.0
      %4562 = vmatpush1.msra.mxu0 0.0
      %4563 = vmatprep.subr.mxu0 0.0
      %4564 = vmatpush1.msra.mxu0 0.0
      %4565 = vmatprep.subr.mxu0 0.0
      %4566 = vmatpush1.msra.mxu0 0.0
      %4567 = vmatprep.subr.mxu0 0.0
      %4568 = vmatpush1.msra.mxu0 0.0
      %4569 = vmatprep.subr.mxu0 0.0
      %4570 = vmatpush1.msra.mxu0 0.0
      %4571 = vmatprep.subr.mxu0 0.0
      %4572 = vmatpush1.msra.mxu0 0.0
      %4573 = vmatprep.subr.mxu0 0.0
      %4574 = vmatpush1.msra.mxu0 0.0
      %4575 = vmatprep.mubr.f32.mxu0 0.0
      %4576 = vmatmul.mubr.f32.gmra.mrb[0].mxu0 %v4464
      %v4577 = vpop.f32.mrb[0].mxu0
      %v4578 = vadd.f32 %v4447, %v4577
      %v4579 = vpop.f32.mrb[0].mxu0
      %4580 = vmatprep.mubr.f32.mxu0 0.0
      %4581 = vmatmul.mubr.f32.gmra.mrb[0].mxu0 %v4467
      %v4582 = vpop.f32.mrb[0].mxu0
      %v4583 = vadd.f32 %v4448, %v4582
      %v4584 = vpop.f32.mrb[0].mxu0
      %4585 = vmatprep.mubr.f32.mxu0 0.0
      %4586 = vmatmul.mubr.f32.gmra.mrb[0].mxu0 %v4470
      %v4587 = vpop.f32.mrb[0].mxu0
      %v4588 = vadd.f32 %v4449, %v4587
      %v4589 = vpop.f32.mrb[0].mxu0
      %4590 = vmatprep.mubr.f32.mxu0 0.0
      %4591 = vmatmul.mubr.f32.gmra.mrb[0].mxu0 %v4473
      %v4592 = vpop.f32.mrb[0].mxu0
      %v4593 = vadd.f32 %v4450, %v4592
      %v4594 = vpop.f32.mrb[0].mxu0
      %4595 = vmatprep.mubr.f32.mxu0 0.0
      %4596 = vmatmul.mubr.f32.gmra.mrb[0].mxu0 %v4476
      %v4597 = vpop.f32.mrb[0].mxu0
      %v4598 = vadd.f32 %v4451, %v4597
      %v4599 = vpop.f32.mrb[0].mxu0
      %4600 = vmatprep.mubr.f32.mxu0 0.0
      %4601 = vmatmul.mubr.f32.gmra.mrb[0].mxu0 %v4479
      %v4602 = vpop.f32.mrb[0].mxu0
      %v4603 = vadd.f32 %v4452, %v4602
      %v4604 = vpop.f32.mrb[0].mxu0
      %4605 = vmatprep.mubr.f32.mxu0 0.0
      %4606 = vmatmul.mubr.f32.gmra.mrb[0].mxu0 %v4482
      %v4607 = vpop.f32.mrb[0].mxu0
      %v4608 = vadd.f32 %v4453, %v4607
      %v4609 = vpop.f32.mrb[0].mxu0
      %4610 = vmatprep.mubr.f32.mxu0 0.0
      %4611 = vmatmul.mubr.f32.gmra.mrb[0].mxu0 %v4485
      %v4612 = vpop.f32.mrb[0].mxu0
      %v4613 = vadd.f32 %v4454, %v4612
      %v4614 = vpop.f32.mrb[0].mxu0
      %4615 = vmatprep.mubr.f32.mxu0 0.0
      %4616 = vmatmul.mubr.f32.gmra.mrb[0].mxu0 %v4488
      %v4617 = vpop.f32.mrb[0].mxu0
      %v4618 = vadd.f32 %v4455, %v4617
      %v4619 = vpop.f32.mrb[0].mxu0
      %4620 = vmatprep.mubr.f32.mxu0 0.0
      %4621 = vmatmul.mubr.f32.gmra.mrb[0].mxu0 %v4491
      %v4622 = vpop.f32.mrb[0].mxu0
      %v4623 = vadd.f32 %v4456, %v4622
      %v4624 = vpop.f32.mrb[0].mxu0
      %4625 = vmatprep.mubr.f32.mxu0 0.0
      %4626 = vmatmul.mubr.f32.gmra.mrb[0].mxu0 %v4494
      %v4627 = vpop.f32.mrb[0].mxu0
      %v4628 = vadd.f32 %v4457, %v4627
      %v4629 = vpop.f32.mrb[0].mxu0
      %4630 = vmatprep.mubr.f32.mxu0 0.0
      %4631 = vmatmul.mubr.f32.gmra.mrb[0].mxu0 %v4497
      %v4632 = vpop.f32.mrb[0].mxu0
      %v4633 = vadd.f32 %v4458, %v4632
      %v4634 = vpop.f32.mrb[0].mxu0
      %4635 = vmatprep.mubr.f32.mxu0 0.0
      %4636 = vmatmul.mubr.f32.gmra.mrb[0].mxu0 %v4500
      %v4637 = vpop.f32.mrb[0].mxu0
      %v4638 = vadd.f32 %v4459, %v4637
      %v4639 = vpop.f32.mrb[0].mxu0
      %4640 = vmatprep.mubr.f32.mxu0 0.0
      %4641 = vmatmul.mubr.f32.gmra.mrb[0].mxu0 %v4503
      %v4642 = vpop.f32.mrb[0].mxu0
      %v4643 = vadd.f32 %v4460, %v4642
      %v4644 = vpop.f32.mrb[0].mxu0
      %4645 = vmatprep.mubr.f32.mxu0 0.0
      %4646 = vmatmul.mubr.f32.gmra.mrb[0].mxu0 %v4506
      %v4647 = vpop.f32.mrb[0].mxu0
      %v4648 = vadd.f32 %v4461, %v4647
      %v4649 = vpop.f32.mrb[0].mxu0
      %4650 = vmatprep.mubr.f32.mxu0 0.0
      %4651 = vmatmul.mubr.f32.gmra.mrb[0].mxu0 %v4509
      %v4652 = vpop.f32.mrb[0].mxu0
      %v4653 = vadd.f32 %v4462, %v4652
      %v4654 = vpop.f32.mrb[0].mxu0
      %4655 = vdwg.mxu0
      %4656 = vset.pattern.permute.xlu0 1
      %4657 = vperm.xlu0 %4656, %v4347
      %v4658 = vpop.permute.xlu0 %4657
      %4660 = vset.pattern.permute.xlu0 1
      %4661 = vperm.xlu0 %4660, %v4348
      %v4662 = vpop.permute.xlu0 %4661
      %4664 = vset.pattern.permute.xlu0 1
      %4665 = vperm.xlu0 %4664, %v4349
      %v4666 = vpop.permute.xlu0 %4665
      %4668 = vset.pattern.permute.xlu0 1
      %4669 = vperm.xlu0 %4668, %v4350
      %v4670 = vpop.permute.xlu0 %4669
      %4672 = vset.pattern.permute.xlu0 1
      %4673 = vperm.xlu0 %4672, %v4351
      %v4674 = vpop.permute.xlu0 %4673
      %4676 = vset.pattern.permute.xlu0 1
      %4677 = vperm.xlu0 %4676, %v4352
      %v4678 = vpop.permute.xlu0 %4677
      %4680 = vset.pattern.permute.xlu0 1
      %4681 = vperm.xlu0 %4680, %v4353
      %v4682 = vpop.permute.xlu0 %4681
      %4684 = vset.pattern.permute.xlu0 1
      %4685 = vperm.xlu0 %4684, %v4354
      %v4686 = vpop.permute.xlu0 %4685
      %4688 = vset.pattern.permute.xlu0 1
      %4689 = vperm.xlu0 %4688, %v4355
      %v4690 = vpop.permute.xlu0 %4689
      %4692 = vset.pattern.permute.xlu0 1
      %4693 = vperm.xlu0 %4692, %v4356
      %v4694 = vpop.permute.xlu0 %4693
      %4696 = vset.pattern.permute.xlu0 1
      %4697 = vperm.xlu0 %4696, %v4357
      %v4698 = vpop.permute.xlu0 %4697
      %4700 = vset.pattern.permute.xlu0 1
      %4701 = vperm.xlu0 %4700, %v4358
      %v4702 = vpop.permute.xlu0 %4701
      %4704 = vset.pattern.permute.xlu0 1
      %4705 = vperm.xlu0 %4704, %v4359
      %v4706 = vpop.permute.xlu0 %4705
      %4708 = vset.pattern.permute.xlu0 1
      %4709 = vperm.xlu0 %4708, %v4360
      %v4710 = vpop.permute.xlu0 %4709
      %4712 = vset.pattern.permute.xlu0 1
      %4713 = vperm.xlu0 %4712, %v4361
      %v4714 = vpop.permute.xlu0 %4713
      %4716 = vset.pattern.permute.xlu0 1
      %4717 = vperm.xlu0 %4716, %v4362
      %v4718 = vpop.permute.xlu0 %4717
      %v4720 = vlaneseq
      %v4721 = vshrl.u32 %v4720, 7
      %v4722 = vsub.s32 0, %v4721
      %v4723 = vrot.slane %v4346, %v4722
      %v4724 = vmul.f32 %v4658, %v4723
      %v4725 = vmul.f32 %v4662, %v4723
      %v4726 = vmul.f32 %v4666, %v4723
      %v4727 = vmul.f32 %v4670, %v4723
      %v4728 = vmul.f32 %v4674, %v4723
      %v4729 = vmul.f32 %v4678, %v4723
      %v4730 = vmul.f32 %v4682, %v4723
      %v4731 = vmul.f32 %v4686, %v4723
      %v4732 = vmul.f32 %v4690, %v4723
      %v4733 = vmul.f32 %v4694, %v4723
      %v4734 = vmul.f32 %v4698, %v4723
      %v4735 = vmul.f32 %v4702, %v4723
      %v4736 = vmul.f32 %v4706, %v4723
      %v4737 = vmul.f32 %v4710, %v4723
      %v4738 = vmul.f32 %v4714, %v4723
      %v4739 = vmul.f32 %v4718, %v4723
      %v4740 = vadd.f32 %v4578, %v4724
      %v4741 = vadd.f32 %v4583, %v4725
      %v4742 = vadd.f32 %v4588, %v4726
      %v4743 = vadd.f32 %v4593, %v4727
      %v4744 = vadd.f32 %v4598, %v4728
      %v4745 = vadd.f32 %v4603, %v4729
      %v4746 = vadd.f32 %v4608, %v4730
      %v4747 = vadd.f32 %v4613, %v4731
      %v4748 = vadd.f32 %v4618, %v4732
      %v4749 = vadd.f32 %v4623, %v4733
      %v4750 = vadd.f32 %v4628, %v4734
      %v4751 = vadd.f32 %v4633, %v4735
      %v4752 = vadd.f32 %v4638, %v4736
      %v4753 = vadd.f32 %v4643, %v4737
      %v4754 = vadd.f32 %v4648, %v4738
      %v4755 = vadd.f32 %v4653, %v4739
      %4756 = vset.pattern.permute.xlu0 2
      %4757 = vperm.xlu0 %4756, %v4347
      %v4758 = vpop.permute.xlu0 %4757
      %4760 = vset.pattern.permute.xlu0 2
      %4761 = vperm.xlu0 %4760, %v4348
      %v4762 = vpop.permute.xlu0 %4761
      %4764 = vset.pattern.permute.xlu0 2
      %4765 = vperm.xlu0 %4764, %v4349
      %v4766 = vpop.permute.xlu0 %4765
      %4768 = vset.pattern.permute.xlu0 2
      %4769 = vperm.xlu0 %4768, %v4350
      %v4770 = vpop.permute.xlu0 %4769
      %4772 = vset.pattern.permute.xlu0 2
      %4773 = vperm.xlu0 %4772, %v4351
      %v4774 = vpop.permute.xlu0 %4773
      %4776 = vset.pattern.permute.xlu0 2
      %4777 = vperm.xlu0 %4776, %v4352
      %v4778 = vpop.permute.xlu0 %4777
      %4780 = vset.pattern.permute.xlu0 2
      %4781 = vperm.xlu0 %4780, %v4353
      %v4782 = vpop.permute.xlu0 %4781
      %4784 = vset.pattern.permute.xlu0 2
      %4785 = vperm.xlu0 %4784, %v4354
      %v4786 = vpop.permute.xlu0 %4785
      %4788 = vset.pattern.permute.xlu0 2
      %4789 = vperm.xlu0 %4788, %v4355
      %v4790 = vpop.permute.xlu0 %4789
      %4792 = vset.pattern.permute.xlu0 2
      %4793 = vperm.xlu0 %4792, %v4356
      %v4794 = vpop.permute.xlu0 %4793
      %4796 = vset.pattern.permute.xlu0 2
      %4797 = vperm.xlu0 %4796, %v4357
      %v4798 = vpop.permute.xlu0 %4797
      %4800 = vset.pattern.permute.xlu0 2
      %4801 = vperm.xlu0 %4800, %v4358
      %v4802 = vpop.permute.xlu0 %4801
      %4804 = vset.pattern.permute.xlu0 2
      %4805 = vperm.xlu0 %4804, %v4359
      %v4806 = vpop.permute.xlu0 %4805
      %4808 = vset.pattern.permute.xlu0 2
      %4809 = vperm.xlu0 %4808, %v4360
      %v4810 = vpop.permute.xlu0 %4809
      %4812 = vset.pattern.permute.xlu0 2
      %4813 = vperm.xlu0 %4812, %v4361
      %v4814 = vpop.permute.xlu0 %4813
      %4816 = vset.pattern.permute.xlu0 2
      %4817 = vperm.xlu0 %4816, %v4362
      %v4818 = vpop.permute.xlu0 %4817
      %v4820 = vadd.f32 %v4740, %v4758
      %v4821 = vadd.f32 %v4741, %v4762
      %v4822 = vadd.f32 %v4742, %v4766
      %v4823 = vadd.f32 %v4743, %v4770
      %v4824 = vadd.f32 %v4744, %v4774
      %v4825 = vadd.f32 %v4745, %v4778
      %v4826 = vadd.f32 %v4746, %v4782
      %v4827 = vadd.f32 %v4747, %v4786
      %v4828 = vadd.f32 %v4748, %v4790
      %v4829 = vadd.f32 %v4749, %v4794
      %v4830 = vadd.f32 %v4750, %v4798
      %v4831 = vadd.f32 %v4751, %v4802
      %v4832 = vadd.f32 %v4752, %v4806
      %v4833 = vadd.f32 %v4753, %v4810
      %v4834 = vadd.f32 %v4754, %v4814
      %v4835 = vadd.f32 %v4755, %v4818
      %4836 = vset.pattern.permute.xlu0 3
      %4837 = vperm.xlu0 %4836, %v4347
      %v4838 = vpop.permute.xlu0 %4837
      %4840 = vset.pattern.permute.xlu0 3
      %4841 = vperm.xlu0 %4840, %v4348
      %v4842 = vpop.permute.xlu0 %4841
      %4844 = vset.pattern.permute.xlu0 3
      %4845 = vperm.xlu0 %4844, %v4349
      %v4846 = vpop.permute.xlu0 %4845
      %4848 = vset.pattern.permute.xlu0 3
      %4849 = vperm.xlu0 %4848, %v4350
      %v4850 = vpop.permute.xlu0 %4849
      %4852 = vset.pattern.permute.xlu0 3
      %4853 = vperm.xlu0 %4852, %v4351
      %v4854 = vpop.permute.xlu0 %4853
      %4856 = vset.pattern.permute.xlu0 3
      %4857 = vperm.xlu0 %4856, %v4352
      %v4858 = vpop.permute.xlu0 %4857
      %4860 = vset.pattern.permute.xlu0 3
      %4861 = vperm.xlu0 %4860, %v4353
      %v4862 = vpop.permute.xlu0 %4861
      %4864 = vset.pattern.permute.xlu0 3
      %4865 = vperm.xlu0 %4864, %v4354
      %v4866 = vpop.permute.xlu0 %4865
      %4868 = vset.pattern.permute.xlu0 3
      %4869 = vperm.xlu0 %4868, %v4355
      %v4870 = vpop.permute.xlu0 %4869
      %4872 = vset.pattern.permute.xlu0 3
      %4873 = vperm.xlu0 %4872, %v4356
      %v4874 = vpop.permute.xlu0 %4873
      %4876 = vset.pattern.permute.xlu0 3
      %4877 = vperm.xlu0 %4876, %v4357
      %v4878 = vpop.permute.xlu0 %4877
      %4880 = vset.pattern.permute.xlu0 3
      %4881 = vperm.xlu0 %4880, %v4358
      %v4882 = vpop.permute.xlu0 %4881
      %4884 = vset.pattern.permute.xlu0 3
      %4885 = vperm.xlu0 %4884, %v4359
      %v4886 = vpop.permute.xlu0 %4885
      %4888 = vset.pattern.permute.xlu0 3
      %4889 = vperm.xlu0 %4888, %v4360
      %v4890 = vpop.permute.xlu0 %4889
      %4892 = vset.pattern.permute.xlu0 3
      %4893 = vperm.xlu0 %4892, %v4361
      %v4894 = vpop.permute.xlu0 %4893
      %4896 = vset.pattern.permute.xlu0 3
      %4897 = vperm.xlu0 %4896, %v4362
      %v4898 = vpop.permute.xlu0 %4897
      %v4900 = vmul.f32 %v4820, %v4838
      %v4901 = vmul.f32 %v4821, %v4842
      %v4902 = vmul.f32 %v4822, %v4846
      %v4903 = vmul.f32 %v4823, %v4850
      %v4904 = vmul.f32 %v4824, %v4854
      %v4905 = vmul.f32 %v4825, %v4858
      %v4906 = vmul.f32 %v4826, %v4862
      %v4907 = vmul.f32 %v4827, %v4866
      %v4908 = vmul.f32 %v4828, %v4870
      %v4909 = vmul.f32 %v4829, %v4874
      %v4910 = vmul.f32 %v4830, %v4878
      %v4911 = vmul.f32 %v4831, %v4882
      %v4912 = vmul.f32 %v4832, %v4886
      %v4913 = vmul.f32 %v4833, %v4890
      %v4914 = vmul.f32 %v4834, %v4894
      %v4915 = vmul.f32 %v4835, %v4898
      %4916 = vset.pattern.permute.xlu0 4
      %4917 = vperm.xlu0 %4916, %v4347
      %v4918 = vpop.permute.xlu0 %4917
      %4920 = vset.pattern.permute.xlu0 4
      %4921 = vperm.xlu0 %4920, %v4348
      %v4922 = vpop.permute.xlu0 %4921
      %4924 = vset.pattern.permute.xlu0 4
      %4925 = vperm.xlu0 %4924, %v4349
      %v4926 = vpop.permute.xlu0 %4925
      %4928 = vset.pattern.permute.xlu0 4
      %4929 = vperm.xlu0 %4928, %v4350
      %v4930 = vpop.permute.xlu0 %4929
      %4932 = vset.pattern.permute.xlu0 4
      %4933 = vperm.xlu0 %4932, %v4351
      %v4934 = vpop.permute.xlu0 %4933
      %4936 = vset.pattern.permute.xlu0 4
      %4937 = vperm.xlu0 %4936, %v4352
      %v4938 = vpop.permute.xlu0 %4937
      %4940 = vset.pattern.permute.xlu0 4
      %4941 = vperm.xlu0 %4940, %v4353
      %v4942 = vpop.permute.xlu0 %4941
      %4944 = vset.pattern.permute.xlu0 4
      %4945 = vperm.xlu0 %4944, %v4354
      %v4946 = vpop.permute.xlu0 %4945
      %4948 = vset.pattern.permute.xlu0 4
      %4949 = vperm.xlu0 %4948, %v4355
      %v4950 = vpop.permute.xlu0 %4949
      %4952 = vset.pattern.permute.xlu0 4
      %4953 = vperm.xlu0 %4952, %v4356
      %v4954 = vpop.permute.xlu0 %4953
      %4956 = vset.pattern.permute.xlu0 4
      %4957 = vperm.xlu0 %4956, %v4357
      %v4958 = vpop.permute.xlu0 %4957
      %4960 = vset.pattern.permute.xlu0 4
      %4961 = vperm.xlu0 %4960, %v4358
      %v4962 = vpop.permute.xlu0 %4961
      %4964 = vset.pattern.permute.xlu0 4
      %4965 = vperm.xlu0 %4964, %v4359
      %v4966 = vpop.permute.xlu0 %4965
      %4968 = vset.pattern.permute.xlu0 4
      %4969 = vperm.xlu0 %4968, %v4360
      %v4970 = vpop.permute.xlu0 %4969
      %4972 = vset.pattern.permute.xlu0 4
      %4973 = vperm.xlu0 %4972, %v4361
      %v4974 = vpop.permute.xlu0 %4973
      %4976 = vset.pattern.permute.xlu0 4
      %4977 = vperm.xlu0 %4976, %v4362
      %v4978 = vpop.permute.xlu0 %4977
      %v4980 = vadd.f32 %v4900, %v4918
      %v4981 = vadd.f32 %v4901, %v4922
      %v4982 = vadd.f32 %v4902, %v4926
      %v4983 = vadd.f32 %v4903, %v4930
      %v4984 = vadd.f32 %v4904, %v4934
      %v4985 = vadd.f32 %v4905, %v4938
      %v4986 = vadd.f32 %v4906, %v4942
      %v4987 = vadd.f32 %v4907, %v4946
      %v4988 = vadd.f32 %v4908, %v4950
      %v4989 = vadd.f32 %v4909, %v4954
      %v4990 = vadd.f32 %v4910, %v4958
      %v4991 = vadd.f32 %v4911, %v4962
      %v4992 = vadd.f32 %v4912, %v4966
      %v4993 = vadd.f32 %v4913, %v4970
      %v4994 = vadd.f32 %v4914, %v4974
      %v4995 = vadd.f32 %v4915, %v4978
      %v4996 = vmax.f32 %v4980, 0.0
      %v4997 = vmax.f32 %v4981, 0.0
      %v4998 = vmax.f32 %v4982, 0.0
      %v4999 = vmax.f32 %v4983, 0.0
      %v5000 = vmax.f32 %v4984, 0.0
      %v5001 = vmax.f32 %v4985, 0.0
      %v5002 = vmax.f32 %v4986, 0.0
      %v5003 = vmax.f32 %v4987, 0.0
      %v5004 = vmax.f32 %v4988, 0.0
      %v5005 = vmax.f32 %v4989, 0.0
      %v5006 = vmax.f32 %v4990, 0.0
      %v5007 = vmax.f32 %v4991, 0.0
      %v5008 = vmax.f32 %v4992, 0.0
      %v5009 = vmax.f32 %v4993, 0.0
      %v5010 = vmax.f32 %v4994, 0.0
      %v5011 = vmax.f32 %v4995, 0.0
      %v5012 = vld [vmem:[%s11] sm:$0xf]
      %v5013 = vld [vmem:[%s12] sm:$0xf]
      %5015 = vset.pattern.permute.xlu0 0
      %5016 = vperm.xlu0 %5015, %v5013
      %v5017 = vpop.permute.xlu0 %5016
      %5019 = vmatprep.subr.mxu0 0.0
      %5020 = vmatpush1.msra.mxu0 %v4996
      %5021 = vmatprep.subr.mxu0 0.0
      %5022 = vmatpush1.msra.mxu0 %v4997
      %5023 = vmatprep.subr.mxu0 0.0
      %5024 = vmatpush1.msra.mxu0 %v4998
      %5025 = vmatprep.subr.mxu0 0.0
      %5026 = vmatpush1.msra.mxu0 %v4999
      %5027 = vmatprep.subr.mxu0 0.0
      %5028 = vmatpush1.msra.mxu0 %v5000
      %5029 = vmatprep.subr.mxu0 0.0
      %5030 = vmatpush1.msra.mxu0 %v5001
      %5031 = vmatprep.subr.mxu0 0.0
      %5032 = vmatpush1.msra.mxu0 %v5002
      %5033 = vmatprep.subr.mxu0 0.0
      %5034 = vmatpush1.msra.mxu0 %v5003
      %5035 = vmatprep.subr.mxu0 0.0
      %5036 = vmatpush1.msra.mxu0 %v5004
      %5037 = vmatprep.subr.mxu0 0.0
      %5038 = vmatpush1.msra.mxu0 %v5005
      %5039 = vmatprep.subr.mxu0 0.0
      %5040 = vmatpush1.msra.mxu0 %v5006
      %5041 = vmatprep.subr.mxu0 0.0
      %5042 = vmatpush1.msra.mxu0 %v5007
      %5043 = vmatprep.subr.mxu0 0.0
      %5044 = vmatpush1.msra.mxu0 %v5008
      %5045 = vmatprep.subr.mxu0 0.0
      %5046 = vmatpush1.msra.mxu0 %v5009
      %5047 = vmatprep.subr.mxu0 0.0
      %5048 = vmatpush1.msra.mxu0 %v5010
      %5049 = vmatprep.subr.mxu0 0.0
      %5050 = vmatpush1.msra.mxu0 %v5011
      %5051 = vmatprep.subr.mxu0 0.0
      %5052 = vmatpush1.msra.mxu0 0.0
      %5053 = vmatprep.subr.mxu0 0.0
      %5054 = vmatpush1.msra.mxu0 0.0
      %5055 = vmatprep.subr.mxu0 0.0
      %5056 = vmatpush1.msra.mxu0 0.0
      %5057 = vmatprep.subr.mxu0 0.0
      %5058 = vmatpush1.msra.mxu0 0.0
      %5059 = vmatprep.subr.mxu0 0.0
      %5060 = vmatpush1.msra.mxu0 0.0
      %5061 = vmatprep.subr.mxu0 0.0
      %5062 = vmatpush1.msra.mxu0 0.0
      %5063 = vmatprep.subr.mxu0 0.0
      %5064 = vmatpush1.msra.mxu0 0.0
      %5065 = vmatprep.subr.mxu0 0.0
      %5066 = vmatpush1.msra.mxu0 0.0
      %5067 = vmatprep.subr.mxu0 0.0
      %5068 = vmatpush1.msra.mxu0 0.0
      %5069 = vmatprep.subr.mxu0 0.0
      %5070 = vmatpush1.msra.mxu0 0.0
      %5071 = vmatprep.subr.mxu0 0.0
      %5072 = vmatpush1.msra.mxu0 0.0
      %5073 = vmatprep.subr.mxu0 0.0
      %5074 = vmatpush1.msra.mxu0 0.0
      %5075 = vmatprep.subr.mxu0 0.0
      %5076 = vmatpush1.msra.mxu0 0.0
      %5077 = vmatprep.subr.mxu0 0.0
      %5078 = vmatpush1.msra.mxu0 0.0
      %5079 = vmatprep.subr.mxu0 0.0
      %5080 = vmatpush1.msra.mxu0 0.0
      %5081 = vmatprep.subr.mxu0 0.0
      %5082 = vmatpush1.msra.mxu0 0.0
      %5083 = vmatprep.mubr.f32.mxu0 0.0
      %5084 = vmatmul.mubr.f32.gmra.mrb[0].mxu0 %v5012
      %v5085 = vpop.f32.mrb[0].mxu0
      %v5086 = vadd.f32 %v5017, %v5085
      %v5087 = vpop.f32.mrb[0].mxu0
      %5088 = vdwg.mxu0
      %v5089 = vxor.u32 %v5086, 2147483648
      %v5090 = vmul.f32 %v5089, 1.442695
      %v5091 = vpow.pop %v5090
      %v5092 = vadd.f32 %v5091, 1.0
      %v5093 = vrcp.pop %v5092
      %v5094 = vmul.f32 1.0, %v5093
      %5095 = vst [vmem:[#allocation6] sm:$0xf] %v5094
    $region61: #{tpu_custom_call.1} parent=1 // pred_fallthru
      _
    // Predicated region
    $region62: #{tpu_custom_call.1} parent=1 // pred_check
      _
    $region63: #{tpu_custom_call.1} parent=1 // pred_check_branch
      %5097 = sbr.rel (0) target = $region65
    $region64: #{tpu_custom_call.1} parent=1 // pred_region
      %s5099 = ssub.s32 64, 64
      %5100 = vsyncadd [#allocation7], %s5099
      %s5102 = sshll.u32 [#allocation6], 4
      %s5103 = int_to_ptr.vmem [resolvable:$true] %s5102
      %5105 = dma.vmem_to_hbm [thread:$0]  %s5103, 64, %s13, [#allocation7]
    $region65: #{tpu_custom_call.1} parent=1 // pred_fallthru
      _
    // Predicated region
    $region66: #{tpu_custom_call.1} parent=1 // pred_check
      _
    $region67: #{tpu_custom_call.1} parent=1 // pred_check_branch
      %5107 = sbr.rel (0) target = $region69
    $region68: #{tpu_custom_call.1} parent=1 // pred_region
      %5108 = dma.done [#allocation7], 64
    $region69: #{tpu_custom_call.1} parent=1 // pred_fallthru
      _
    %5109 = vsyncpa [#allocation7], 1

</llo_original>
